<compile_context>
chip_gen: v5e
topology: v5e:2x2
jax: 0.10.0
libtpu: 0.0.40
codegen_flags: <defaults>
</compile_context>

<pallas_src>
import functools

import jax
import jax.numpy as jnp
from jax.experimental import pallas as pl
from jax.experimental.pallas import tpu as pltpu

BN_EPS = 1e-5

# Resident operands (constant block index) are single-buffered when this jax
# exposes pipeline_mode; their second pipeline buffer is pure VMEM waste.
_RESIDENT_KW = {"pipeline_mode": pl.Buffered(1)} if hasattr(pl, "Buffered") else {}


def _vmem_capacity_bytes():
    try:
        return int(pltpu.get_tpu_info().vmem_capacity_bytes)
    except Exception:
        return 64 * 1024 * 1024  # conservative: v7x per-TensorCore VMEM


def _pick_vmem_limit(est_bytes, vmem_cap):
    # 2x headroom over the static estimate, floored at the 32 MiB scoped
    # default, capped below the physical per-core capacity.
    return int(min(max(2 * est_bytes, 32 * 2**20),
                   max(vmem_cap - 8 * 2**20, 32 * 2**20)))


# ----------------------------------------------------------------------------
# Single grid step: whole problem VMEM-resident (small batches).
# ----------------------------------------------------------------------------
def mlp_single_step_kernel(x_ref, w1_ref, gamma_ref, beta_ref, w2_ref, b2_ref,
                           o_ref):
    # linear1: x cast to bf16 in-kernel (VPU work hidden under the MXU),
    # f32 accumulation.  linear1's bias is intentionally omitted: train-mode
    # BatchNorm1d subtracts the per-channel batch mean immediately after, so a
    # per-channel bias cancels exactly and the forward output is unchanged.
    h = jnp.dot(x_ref[...].astype(jnp.bfloat16), w1_ref[...],
                preferred_element_type=jnp.float32)
    # Whole batch is resident: stable two-pass (centered) batch statistics.
    mean = jnp.mean(h, axis=0, keepdims=True)
    var = jnp.mean(jnp.square(h - mean), axis=0, keepdims=True)
    scale = gamma_ref[...] * jax.lax.rsqrt(var + BN_EPS)
    shift = beta_ref[...] - mean * scale
    hn = jnp.maximum(h * scale + shift, 0.0)
    # Output kept f32; emit bf16 here instead if downstream consumers allow it.
    o_ref[...] = jnp.dot(hn.astype(jnp.bfloat16), w2_ref[...],
                         preferred_element_type=jnp.float32) + b2_ref[...]


def _mlp_single_step(x, w1_bf16, gamma, beta, w2_bf16, b2, *, vmem_limit):
    n, in_dim = x.shape
    inner_dim = w1_bf16.shape[1]
    out_dim = w2_bf16.shape[1]

    flops = 2 * n * in_dim * inner_dim + 2 * n * inner_dim * out_dim
    bytes_accessed = (n * in_dim * 4 + w1_bf16.size * 2 + w2_bf16.size * 2
                      + (gamma.size + beta.size + b2.size) * 4
                      + n * out_dim * 4)

    return pl.pallas_call(
        mlp_single_step_kernel,
        out_shape=jax.ShapeDtypeStruct((n, out_dim), jnp.float32),
        grid_spec=pltpu.PrefetchScalarGridSpec(
            num_scalar_prefetch=0,
            grid=(1,),
            in_specs=[
                pl.BlockSpec((n, in_dim), lambda i: (0, 0)),
                pl.BlockSpec((in_dim, inner_dim), lambda i: (0, 0)),
                pl.BlockSpec((1, inner_dim), lambda i: (0, 0)),
                pl.BlockSpec((1, inner_dim), lambda i: (0, 0)),
                pl.BlockSpec((inner_dim, out_dim), lambda i: (0, 0)),
                pl.BlockSpec((1, out_dim), lambda i: (0, 0)),
            ],
            out_specs=pl.BlockSpec((n, out_dim), lambda i: (0, 0)),
        ),
        compiler_params=pltpu.CompilerParams(
            dimension_semantics=("arbitrary",),
            vmem_limit_bytes=vmem_limit),
        cost_estimate=pl.CostEstimate(flops=int(flops), transcendentals=0,
                                      bytes_accessed=int(bytes_accessed)),
    )(x, w1_bf16, gamma, beta, w2_bf16, b2)


# ----------------------------------------------------------------------------
# Two-phase tiled kernels (large batches).
# ----------------------------------------------------------------------------
def mlp_tiled_cached_kernel(x_ref, w1_ref, gamma_ref, beta_ref, w2_ref, b2_ref,
                            o_ref, hcache_ref, sum_ref, sumsq_ref, scale_ref,
                            shift_ref, *, n_rows):
    phase = pl.program_id(0)   # 0: linear1 + BN stats, 1: normalize + linear2
    i = pl.program_id(1)       # row-tile index
    n_tiles = pl.num_programs(1)

    @pl.when(phase == 0)
    def _linear1_and_stats():
        @pl.when(i == 0)
        def _init():
            sum_ref[...] = jnp.zeros_like(sum_ref)
            sumsq_ref[...] = jnp.zeros_like(sumsq_ref)
            # Cheap insurance: the output block mapped during phase 0 is (0,0);
            # zero it so uninitialized VMEM can never be flushed to HBM even if
            # the revisit/flush behavior changes.
            o_ref[...] = jnp.zeros_like(o_ref)

        # linear1 bias omitted (cancels under BN batch-mean subtraction).
        h = jnp.dot(x_ref[...].astype(jnp.bfloat16), w1_ref[...],
                    preferred_element_type=jnp.float32)
        hcache_ref[i] = h.astype(jnp.bfloat16)   # reused in phase 1, no recompute
        sum_ref[...] += jnp.sum(h, axis=0, keepdims=True)
        sumsq_ref[...] += jnp.sum(h * h, axis=0, keepdims=True)

        @pl.when(i == n_tiles - 1)
        def _finalize():
            inv_n = jnp.float32(1.0 / n_rows)
            mean = sum_ref[...] * inv_n
            # TODO(synk): E[h^2]-mean^2 is cancellation-prone for channels with
            # large mean/std ratio; use a Welford/Chan tile combine if needed.
            var = jnp.maximum(sumsq_ref[...] * inv_n - mean * mean, 0.0)
            scale = gamma_ref[...] * jax.lax.rsqrt(var + BN_EPS)
            scale_ref[...] = scale
            shift_ref[...] = beta_ref[...] - mean * scale

    @pl.when(phase == 1)
    def _normalize_and_project():
        hn = jnp.maximum(hcache_ref[i].astype(jnp.float32) * scale_ref[...]
                         + shift_ref[...], 0.0)
        o_ref[...] = jnp.dot(hn.astype(jnp.bfloat16), w2_ref[...],
                             preferred_element_type=jnp.float32) + b2_ref[...]


def mlp_tiled_recompute_kernel(x_ref, w1_ref, gamma_ref, beta_ref, w2_ref,
                               b2_ref, o_ref, sum_ref, sumsq_ref, scale_ref,
                               shift_ref, *, n_rows):
    phase = pl.program_id(0)
    i = pl.program_id(1)
    n_tiles = pl.num_programs(1)

    # linear1 recomputed in both phases; chosen only when the h cache would not
    # fit the per-generation VMEM budget (recompute beats an HBM round-trip of
    # h for moderate in_dim).  linear1 bias omitted (cancels under BN).
    h = jnp.dot(x_ref[...].astype(jnp.bfloat16), w1_ref[...],
                preferred_element_type=jnp.float32)

    @pl.when(phase == 0)
    def _stats():
        @pl.when(i == 0)
        def _init():
            sum_ref[...] = jnp.zeros_like(sum_ref)
            sumsq_ref[...] = jnp.zeros_like(sumsq_ref)
            o_ref[...] = jnp.zeros_like(o_ref)

        sum_ref[...] += jnp.sum(h, axis=0, keepdims=True)
        sumsq_ref[...] += jnp.sum(h * h, axis=0, keepdims=True)

        @pl.when(i == n_tiles - 1)
        def _finalize():
            inv_n = jnp.float32(1.0 / n_rows)
            mean = sum_ref[...] * inv_n
            var = jnp.maximum(sumsq_ref[...] * inv_n - mean * mean, 0.0)
            scale = gamma_ref[...] * jax.lax.rsqrt(var + BN_EPS)
            scale_ref[...] = scale
            shift_ref[...] = beta_ref[...] - mean * scale

    @pl.when(phase == 1)
    def _normalize_and_project():
        hn = jnp.maximum(h * scale_ref[...] + shift_ref[...], 0.0)
        o_ref[...] = jnp.dot(hn.astype(jnp.bfloat16), w2_ref[...],
                             preferred_element_type=jnp.float32) + b2_ref[...]


def _mlp_tiled(x, w1_bf16, gamma, beta, w2_bf16, b2, *, tile_n, cache_h,
               vmem_limit):
    n, in_dim = x.shape
    inner_dim = w1_bf16.shape[1]
    out_dim = w2_bf16.shape[1]
    n_tiles = n // tile_n

    if cache_h:
        kernel = functools.partial(mlp_tiled_cached_kernel, n_rows=n)
        # x's block index is pinned to 0 during phase 1, so x is streamed from
        # HBM exactly once (Pallas skips the DMA when the index is unchanged).
        x_spec = pl.BlockSpec((tile_n, in_dim), lambda p, i: (i * (1 - p), 0))
        scratch = [pltpu.VMEM((n_tiles, tile_n, inner_dim), jnp.bfloat16)]
        l1_flops = 2 * n * in_dim * inner_dim
        x_bytes = n * in_dim * 4
    else:
        kernel = functools.partial(mlp_tiled_recompute_kernel, n_rows=n)
        x_spec = pl.BlockSpec((tile_n, in_dim), lambda p, i: (i, 0))
        scratch = []
        l1_flops = 2 * 2 * n * in_dim * inner_dim
        x_bytes = 2 * n * in_dim * 4

    scratch += [pltpu.VMEM((1, inner_dim), jnp.float32)] * 4  # sum/sumsq/scale/shift

    flops = l1_flops + 2 * n * inner_dim * out_dim
    bytes_accessed = (x_bytes + w1_bf16.size * 2 + w2_bf16.size * 2
                      + (gamma.size + beta.size + b2.size) * 4
                      + n * out_dim * 4)

    # TODO(synk): add a K/N-tiling grid axis for w1/w2 instead of full VMEM
    # residency once in_dim/inner_dim grow beyond the per-gen VMEM budget.
    return pl.pallas_call(
        kernel,
        out_shape=jax.ShapeDtypeStruct((n, out_dim), jnp.float32),
        grid_spec=pltpu.PrefetchScalarGridSpec(
            num_scalar_prefetch=0,
            grid=(2, n_tiles),                                   # (phase, row tile)
            in_specs=[
                x_spec,                                                            # x
                pl.BlockSpec((in_dim, inner_dim), lambda p, i: (0, 0), **_RESIDENT_KW),   # w1
                pl.BlockSpec((1, inner_dim), lambda p, i: (0, 0), **_RESIDENT_KW),        # gamma
                pl.BlockSpec((1, inner_dim), lambda p, i: (0, 0), **_RESIDENT_KW),        # beta
                pl.BlockSpec((inner_dim, out_dim), lambda p, i: (0, 0), **_RESIDENT_KW),  # w2
                pl.BlockSpec((1, out_dim), lambda p, i: (0, 0), **_RESIDENT_KW),          # b2
            ],
            # Output is only written in phase 1; `i * p` pins the block index to
            # 0 during phase 0 (that block is zero-initialized as insurance).
            out_specs=pl.BlockSpec((tile_n, out_dim), lambda p, i: (i * p, 0)),
            scratch_shapes=scratch,
        ),
        compiler_params=pltpu.CompilerParams(
            # Sequential on purpose: the phase axis orders the two passes and
            # the row axis carries BN-stat accumulation in phase 0.
            # TODO(synk): on v7x, shard phase 1 across the 2 TensorCores
            # (core_map + per-core partial stats) for up to ~2x on the matmuls.
            dimension_semantics=("arbitrary", "arbitrary"),
            vmem_limit_bytes=vmem_limit),
        cost_estimate=pl.CostEstimate(flops=int(flops), transcendentals=0,
                                      bytes_accessed=int(bytes_accessed)),
    )(x, w1_bf16, gamma, beta, w2_bf16, b2)


# ----------------------------------------------------------------------------
# Wrapper: path selection gated on per-generation VMEM capacity.
# ----------------------------------------------------------------------------
def mlp_forward(x, w1_t, b1, gamma, beta, w2_t, b2, *, tile_n=256, path=None):
    # b1 cancels exactly under BN's batch-mean subtraction (see kernel note);
    # it only matters for running-stat buffers, which this kernel doesn't track.
    del b1
    n, in_dim = x.shape
    inner_dim = w1_t.shape[1]
    out_dim = w2_t.shape[1]

    # Weight casts are tiny one-time ops; x is cast in-kernel so it is read
    # from HBM exactly once with no standalone XLA cast pass.
    w1_bf16 = w1_t.astype(jnp.bfloat16)
    w2_bf16 = w2_t.astype(jnp.bfloat16)

    vmem_cap = _vmem_capacity_bytes()

    # Whole-problem-resident footprint (f32 h with ~3x headroom for temporaries).
    single_bytes = (n * in_dim * 4 + 3 * n * inner_dim * 4 + n * out_dim * 4
                    + in_dim * inner_dim * 2 + inner_dim * out_dim * 2
                    + (2 * inner_dim + out_dim) * 4)
    # h-cache footprint (bf16), gated per generation: ~24 MiB on 128 MiB parts
    # (v5e/v6e), ~14 MiB on 64 MiB parts (v7x).
    h_cache_bytes = n * inner_dim * 2
    h_cache_budget = 24 * 2**20 if vmem_cap >= 96 * 2**20 else 14 * 2**20

    if path is None:
        if single_bytes <= min(24 * 2**20, vmem_cap // 4):
            path = "single"
        elif h_cache_bytes <= h_cache_budget:
            path = "tiled_cached"
        else:
            path = "tiled_recompute"

    if path == "single":
        return _mlp_single_step(x, w1_bf16, gamma, beta, w2_bf16, b2,
                                vmem_limit=_pick_vmem_limit(single_bytes, vmem_cap))

    tile_n = max(8, min(tile_n, n))
    while n % tile_n:
        tile_n //= 2
    assert tile_n % 8 == 0 and n % tile_n == 0, "pad the batch to a multiple of 8"

    cache_h = (path == "tiled_cached")
    tiled_bytes = (2 * tile_n * in_dim * 4                  # x tile double-buffer
                   + in_dim * inner_dim * 2 + inner_dim * out_dim * 2
                   + (2 * inner_dim + out_dim) * 4
                   + 2 * tile_n * out_dim * 4                # out tile double-buffer
                   + 4 * inner_dim * 4                       # stat scratch
                   + (h_cache_bytes if cache_h else tile_n * inner_dim * 4))
    return _mlp_tiled(x, w1_bf16, gamma, beta, w2_bf16, b2, tile_n=tile_n,
                      cache_h=cache_h,
                      vmem_limit=_pick_vmem_limit(tiled_bytes, vmem_cap))


# ----------------------------------------------------------------------------
# Params + pure-JAX reference.
# ----------------------------------------------------------------------------
def init_params(key, in_dim, inner_dim, out_dim):
    k1, k2, k3, k4 = jax.random.split(key, 4)
    # PyTorch nn.Linear default init: U(-1/sqrt(fan_in), 1/sqrt(fan_in))
    lim1 = 1.0 / jnp.sqrt(jnp.float32(in_dim))
    w1 = jax.random.uniform(k1, (inner_dim, in_dim), jnp.float32, -lim1, lim1)
    b1 = jax.random.uniform(k2, (1, inner_dim), jnp.float32, -lim1, lim1)
    lim2 = 1.0 / jnp.sqrt(jnp.float32(inner_dim))
    w2 = jax.random.uniform(k3, (out_dim, inner_dim), jnp.float32, -lim2, lim2)
    b2 = jax.random.uniform(k4, (1, out_dim), jnp.float32, -lim2, lim2)
    # BatchNorm1d default affine init: gamma=1, beta=0
    gamma = jnp.ones((1, inner_dim), jnp.float32)
    beta = jnp.zeros((1, inner_dim), jnp.float32)
    # pre-transpose linear weights to (in, out) for row-major in-kernel matmul
    return w1.T, b1, gamma, beta, w2.T, b2


def mlp_reference(x, w1_t, b1, gamma, beta, w2_t, b2, *, h_cache_dtype=None):
    # Mirrors the kernel numerics (bf16 matmul operands, f32 accumulation / BN
    # math).  b1 IS applied here, demonstrating that the kernel's omission of
    # it is exact: it cancels under BN's batch-mean subtraction in train mode.
    h = jnp.dot(x.astype(jnp.bfloat16), w1_t.astype(jnp.bfloat16),
                preferred_element_type=jnp.float32) + b1
    m = jnp.mean(h, axis=0, keepdims=True)
    v = jnp.mean(jnp.square(h - m), axis=0, keepdims=True)
    if h_cache_dtype is not None:          # tiled_cached path stores h in bf16
        h = h.astype(h_cache_dtype).astype(jnp.float32)
    hn = jnp.maximum((h - m) * (gamma * jax.lax.rsqrt(v + BN_EPS)) + beta, 0.0)
    return jnp.dot(hn.astype(jnp.bfloat16), w2_t.astype(jnp.bfloat16),
                   preferred_element_type=jnp.float32) + b2


if __name__ == "__main__":
    # Scaled-down MLP(768, 3072, 768): feature dims stay multiples of 128 so
    # MXU tiles and output stores are lane-dense.
    IN_DIM, INNER_DIM, OUT_DIM = 256, 512, 256

    key = jax.random.PRNGKey(0)
    kx, kp, kx2 = jax.random.split(key, 3)
    params = init_params(kp, IN_DIM, INNER_DIM, OUT_DIM)

    # 1) Small batch -> auto-selects the single-grid-step path.
    x_small = jax.random.normal(kx, (256, IN_DIM), jnp.float32)
    out = mlp_forward(x_small, *params)
    jax.block_until_ready(out)
    ref = mlp_reference(x_small, *params)
    err = float(jnp.max(jnp.abs(out - ref)))
    assert jnp.allclose(out, ref, atol=1e-2, rtol=1e-2), f"single max_err={err}"

    # 2) Larger batch, tiled two-phase path with the persistent h cache
    #    (forced so it is exercised even at demo scale).
    x_big = jax.random.normal(kx2, (512, IN_DIM), jnp.float32)
    out_c = mlp_forward(x_big, *params, tile_n=256, path="tiled_cached")
    jax.block_until_ready(out_c)
    ref_c = mlp_reference(x_big, *params, h_cache_dtype=jnp.bfloat16)
    err = float(jnp.max(jnp.abs(out_c - ref_c)))
    assert jnp.allclose(out_c, ref_c, atol=1e-2, rtol=1e-2), f"cached max_err={err}"

    # 3) Recompute fallback (used when the h cache exceeds the VMEM budget).
    out_r = mlp_forward(x_big, *params, tile_n=256, path="tiled_recompute")
    jax.block_until_ready(out_r)
    ref_r = mlp_reference(x_big, *params)
    err = float(jnp.max(jnp.abs(out_r - ref_r)))
    assert jnp.allclose(out_r, ref_r, atol=1e-2, rtol=1e-2), f"recompute max_err={err}"

    # TODO(synk): BatchNorm1d running_mean / running_var (momentum) buffer
    # updates are a training side effect and are not computed in this kernel.
    print("KERNEL_OK")
</pallas_src>

<mosaic_0001>
module attributes {stable_mosaic.version = 11 : i64} {
  func.func @mlp_single_step_kernel(%arg0: i32, %arg1: memref<256x256xf32, #tpu.memory_space<vmem>>, %arg2: memref<256x512xbf16, #tpu.memory_space<vmem>>, %arg3: memref<1x512xf32, #tpu.memory_space<vmem>>, %arg4: memref<1x512xf32, #tpu.memory_space<vmem>>, %arg5: memref<512x256xbf16, #tpu.memory_space<vmem>>, %arg6: memref<1x256xf32, #tpu.memory_space<vmem>>, %arg7: memref<256x256xf32, #tpu.memory_space<vmem>>) attributes {dimension_semantics = [#tpu.dimension_semantics<arbitrary>], iteration_bounds = array<i64: 1>, scalar_prefetch = 0 : i64, scratch_operands = 0 : i64, tpu.core_type = #tpu.core_type<tc>, window_params = [{pipeline_mode = #tpu.pipeline_mode<synchronous>, transform_indices = @transform_0, window_bounds = array<i64: 256, 256>}, {pipeline_mode = #tpu.pipeline_mode<synchronous>, transform_indices = @transform_1, window_bounds = array<i64: 256, 512>}, {pipeline_mode = #tpu.pipeline_mode<synchronous>, transform_indices = @transform_2, window_bounds = array<i64: 1, 512>}, {pipeline_mode = #tpu.pipeline_mode<synchronous>, transform_indices = @transform_3, window_bounds = array<i64: 1, 512>}, {pipeline_mode = #tpu.pipeline_mode<synchronous>, transform_indices = @transform_4, window_bounds = array<i64: 512, 256>}, {pipeline_mode = #tpu.pipeline_mode<synchronous>, transform_indices = @transform_5, window_bounds = array<i64: 1, 256>}, {pipeline_mode = #tpu.pipeline_mode<synchronous>, transform_indices = @transform_6, window_bounds = array<i64: 256, 256>}]} {
    %c0 = arith.constant 0 : index
    %c0_0 = arith.constant 0 : index
    %0 = vector.load %arg1[%c0, %c0_0] : memref<256x256xf32, #tpu.memory_space<vmem>>, vector<256x256xf32>
    %1 = arith.truncf %0 : vector<256x256xf32> to vector<256x256xbf16>
    %c0_1 = arith.constant 0 : index
    %c0_2 = arith.constant 0 : index
    %2 = vector.load %arg2[%c0_1, %c0_2] : memref<256x512xbf16, #tpu.memory_space<vmem>>, vector<256x512xbf16>
    %cst = arith.constant dense<0.000000e+00> : vector<256x512xf32>
    %3 = tpu.matmul %1, %2, %cst {dimension_numbers = #tpu.dot_dimension_numbers<[1], [0], [0], [1], [0, 0, 1, 1], [], []>} : vector<256x256xbf16>, vector<256x512xbf16>, vector<256x512xf32> -> vector<256x512xf32>
    %cst_3 = arith.constant dense<0.000000e+00> : vector<512xf32>
    %4 = vector.multi_reduction <add>, %3, %cst_3 [0] : vector<256x512xf32> to vector<512xf32>
    %5 = vector.shape_cast %4 : vector<512xf32> to vector<1x512xf32>
    %cst_4 = arith.constant 2.560000e+02 : f32
    %6 = vector.broadcast %cst_4 : f32 to vector<1x512xf32>
    %7 = arith.divf %5, %6 : vector<1x512xf32>
    %8 = vector.broadcast %7 : vector<1x512xf32> to vector<256x512xf32>
    %9 = arith.subf %3, %8 : vector<256x512xf32>
    %10 = arith.mulf %9, %9 : vector<256x512xf32>
    %cst_5 = arith.constant dense<0.000000e+00> : vector<512xf32>
    %11 = vector.multi_reduction <add>, %10, %cst_5 [0] : vector<256x512xf32> to vector<512xf32>
    %12 = vector.shape_cast %11 : vector<512xf32> to vector<1x512xf32>
    %cst_6 = arith.constant 2.560000e+02 : f32
    %13 = vector.broadcast %cst_6 : f32 to vector<1x512xf32>
    %14 = arith.divf %12, %13 : vector<1x512xf32>
    %c0_7 = arith.constant 0 : index
    %c0_8 = arith.constant 0 : index
    %15 = vector.load %arg3[%c0_7, %c0_8] : memref<1x512xf32, #tpu.memory_space<vmem>>, vector<1x512xf32>
    %cst_9 = arith.constant 9.99999974E-6 : f32
    %16 = vector.broadcast %cst_9 : f32 to vector<1x512xf32>
    %17 = arith.addf %14, %16 : vector<1x512xf32>
    %18 = math.rsqrt %17 : vector<1x512xf32>
    %19 = arith.mulf %15, %18 : vector<1x512xf32>
    %c0_10 = arith.constant 0 : index
    %c0_11 = arith.constant 0 : index
    %20 = vector.load %arg4[%c0_10, %c0_11] : memref<1x512xf32, #tpu.memory_space<vmem>>, vector<1x512xf32>
    %21 = arith.mulf %7, %19 : vector<1x512xf32>
    %22 = arith.subf %20, %21 : vector<1x512xf32>
    %23 = vector.broadcast %19 : vector<1x512xf32> to vector<256x512xf32>
    %24 = arith.mulf %3, %23 : vector<256x512xf32>
    %25 = vector.broadcast %22 : vector<1x512xf32> to vector<256x512xf32>
    %26 = arith.addf %24, %25 : vector<256x512xf32>
    %cst_12 = arith.constant 0.000000e+00 : f32
    %27 = vector.broadcast %cst_12 : f32 to vector<256x512xf32>
    %28 = arith.maximumf %26, %27 : vector<256x512xf32>
    %29 = arith.truncf %28 : vector<256x512xf32> to vector<256x512xbf16>
    %c0_13 = arith.constant 0 : index
    %c0_14 = arith.constant 0 : index
    %30 = vector.load %arg5[%c0_13, %c0_14] : memref<512x256xbf16, #tpu.memory_space<vmem>>, vector<512x256xbf16>
    %cst_15 = arith.constant dense<0.000000e+00> : vector<256x256xf32>
    %31 = tpu.matmul %29, %30, %cst_15 {dimension_numbers = #tpu.dot_dimension_numbers<[1], [0], [0], [1], [0, 0, 1, 1], [], []>} : vector<256x512xbf16>, vector<512x256xbf16>, vector<256x256xf32> -> vector<256x256xf32>
    %c0_16 = arith.constant 0 : index
    %c0_17 = arith.constant 0 : index
    %32 = vector.load %arg6[%c0_16, %c0_17] : memref<1x256xf32, #tpu.memory_space<vmem>>, vector<1x256xf32>
    %33 = vector.broadcast %32 : vector<1x256xf32> to vector<256x256xf32>
    %34 = arith.addf %31, %33 : vector<256x256xf32>
    %c0_18 = arith.constant 0 : index
    %c0_19 = arith.constant 0 : index
    %35 = vector.load %arg7[%c0_18, %c0_19] : memref<256x256xf32, #tpu.memory_space<vmem>>, vector<256x256xf32>
    tpu.vector_store %arg7[%c0_18, %c0_19], %34 {strides = array<i32>} : memref<256x256xf32, #tpu.memory_space<vmem>>, vector<256x256xf32>,
    return
  }
  func.func @transform_0(%arg0: i32) -> (i32, i32) {
    %c0_i32 = arith.constant 0 : i32
    %c0_i32_0 = arith.constant 0 : i32
    %c0_i32_1 = arith.constant 0 : i32
    return %c0_i32, %c0_i32_0 : i32, i32
  }
  func.func @transform_1(%arg0: i32) -> (i32, i32) {
    %c0_i32 = arith.constant 0 : i32
    %c0_i32_0 = arith.constant 0 : i32
    %c0_i32_1 = arith.constant 0 : i32
    return %c0_i32, %c0_i32_0 : i32, i32
  }
  func.func @transform_2(%arg0: i32) -> (i32, i32) {
    %c0_i32 = arith.constant 0 : i32
    %c0_i32_0 = arith.constant 0 : i32
    %c0_i32_1 = arith.constant 0 : i32
    return %c0_i32, %c0_i32_0 : i32, i32
  }
  func.func @transform_3(%arg0: i32) -> (i32, i32) {
    %c0_i32 = arith.constant 0 : i32
    %c0_i32_0 = arith.constant 0 : i32
    %c0_i32_1 = arith.constant 0 : i32
    return %c0_i32, %c0_i32_0 : i32, i32
  }
  func.func @transform_4(%arg0: i32) -> (i32, i32) {
    %c0_i32 = arith.constant 0 : i32
    %c0_i32_0 = arith.constant 0 : i32
    %c0_i32_1 = arith.constant 0 : i32
    return %c0_i32, %c0_i32_0 : i32, i32
  }
  func.func @transform_5(%arg0: i32) -> (i32, i32) {
    %c0_i32 = arith.constant 0 : i32
    %c0_i32_0 = arith.constant 0 : i32
    %c0_i32_1 = arith.constant 0 : i32
    return %c0_i32, %c0_i32_0 : i32, i32
  }
  func.func @transform_6(%arg0: i32) -> (i32, i32) {
    %c0_i32 = arith.constant 0 : i32
    %c0_i32_0 = arith.constant 0 : i32
    %c0_i32_1 = arith.constant 0 : i32
    return %c0_i32, %c0_i32_0 : i32, i32
  }
}

</mosaic_0001>

<llo_original>
// kernel: tpu_custom_call.1
$region0: #{tpu_custom_call.1}
  #allocation0 [shape = 'u32[]', space=smem, size = 0x4, offset = 0x4, fixed_abs, tag = 'smem constant byte address 0x4 - core index']
  #allocation1 [shape = 'u32[72,128]{1,0:T(1,128)}', space=vmem, size = 0x9000, scoped, tag = 'internal scratch']
  %s0 = inlined_call_operand.hbm [shape: f32[256,256], index: 0, kind: input, shape index: {}]
  %s1 = inlined_call_operand.hbm [shape: bf16[256,512], index: 1, kind: input, shape index: {}]
  %s2 = inlined_call_operand.hbm [shape: f32[1,512], index: 2, kind: input, shape index: {}]
  %s3 = inlined_call_operand.hbm [shape: f32[1,512], index: 3, kind: input, shape index: {}]
  %s4 = inlined_call_operand.hbm [shape: bf16[512,256], index: 4, kind: input, shape index: {}]
  %s5 = inlined_call_operand.vmem [shape: f32[1,256], index: 5, kind: input, shape index: {}]
  %s6 = inlined_call_operand.hbm [shape: f32[256,256], index: 6, kind: output, shape index: {}]
  %s7 = sld [smem:[#allocation0]]
  $region54: #{tpu_custom_call.1} parent=0
    _
  %s9 = ssub.s32 1, %s7
  %s10 = scalar_select 0, %s9, %s7
  $region1: #{tpu_custom_call.1} parent=0
    #allocation2 [shape = 'u8[262144]{0}', space=vmem, size = 0x40000, scoped, tag = 'input window, operand 0, single buffered']
    #allocation3 [shape = 's32[1]{0}', space=sflag, size = 0x4, scoped, tag = 'scoped memory for tpu_custom_call.1']
    #allocation4 [shape = 's32[1]{0}', space=sflag, size = 0x4, scoped, tag = 'scoped memory for tpu_custom_call.1']
    #allocation5 [shape = 'u8[262144]{0}', space=vmem, size = 0x40000, scoped, tag = 'input window, operand 1, single buffered']
    #allocation6 [shape = 's32[1]{0}', space=sflag, size = 0x4, scoped, tag = 'scoped memory for tpu_custom_call.1']
    #allocation7 [shape = 'u8[2048]{0}', space=vmem, size = 0x800, scoped, tag = 'input window, operand 2, single buffered']
    #allocation8 [shape = 'u8[2048]{0}', space=vmem, size = 0x800, scoped, tag = 'input window, operand 3, single buffered']
    #allocation9 [shape = 's32[1]{0}', space=sflag, size = 0x4, scoped, tag = 'scoped memory for tpu_custom_call.1']
    #allocation10 [shape = 'u8[262144]{0}', space=vmem, size = 0x40000, scoped, tag = 'input window, operand 4, single buffered']
    #allocation11 [shape = 'u8[262144]{0}', space=vmem, size = 0x40000, scoped, tag = 'output window, operand 0, single buffered']
    %11 = vsyncpa [#allocation3], 0
    %12 = vsyncpa [#allocation6], 0
    %13 = vsyncpa [#allocation9], 0
    %14 = vsyncpa [#allocation4], 0
    // Predicated region
    $region2: #{tpu_custom_call.1} parent=1 // pred_check
      _
    $region3: #{tpu_custom_call.1} parent=1 // pred_check_branch
      %16 = sbr.rel (0) target = $region5
    $region4: #{tpu_custom_call.1} parent=1 // pred_region
      %18 = vsyncadd [#allocation3], 0
      %s19 = sshll.u32 %s0, 4
      %s20 = int_to_ptr.hbm [resolvable:$true] %s19
      %s21 = sshll.u32 [#allocation2], 4
      %s22 = int_to_ptr.vmem [resolvable:$true] %s21
      %27 = dma.hbm_to_vmem [thread:$0]  %s20, 8192, %s22, [#allocation3], 256, 256, 16
    $region5: #{tpu_custom_call.1} parent=1 // pred_fallthru
      _
    // Predicated region
    $region6: #{tpu_custom_call.1} parent=1 // pred_check
      _
    $region7: #{tpu_custom_call.1} parent=1 // pred_check_branch
      %29 = sbr.rel (0) target = $region9
    $region8: #{tpu_custom_call.1} parent=1 // pred_region
      %31 = vsyncadd [#allocation6], 0
      %s32 = sshll.u32 %s1, 4
      %s33 = int_to_ptr.hbm [resolvable:$true] %s32
      %s34 = sshll.u32 [#allocation5], 4
      %s35 = int_to_ptr.vmem [resolvable:$true] %s34
      %40 = dma.hbm_to_vmem [thread:$0]  %s33, 8192, %s35, [#allocation6], 256, 256, 16
    $region9: #{tpu_custom_call.1} parent=1 // pred_fallthru
      _
    // Predicated region
    $region10: #{tpu_custom_call.1} parent=1 // pred_check
      _
    $region11: #{tpu_custom_call.1} parent=1 // pred_check_branch
      %42 = sbr.rel (0) target = $region13
    $region12: #{tpu_custom_call.1} parent=1 // pred_region
      %44 = vsyncadd [#allocation6], 0
      %s46 = sshll.u32 %s2, 4
      %s47 = int_to_ptr.hbm [resolvable:$true] %s46
      %s48 = sshll.u32 [#allocation7], 4
      %s49 = int_to_ptr.vmem [resolvable:$true] %s48
      %51 = dma.hbm_to_vmem [thread:$0]  %s47, 64, %s49, [#allocation6]
    $region13: #{tpu_custom_call.1} parent=1 // pred_fallthru
      _
    // Predicated region
    $region14: #{tpu_custom_call.1} parent=1 // pred_check
      _
    $region15: #{tpu_custom_call.1} parent=1 // pred_check_branch
      %53 = sbr.rel (0) target = $region17
    $region16: #{tpu_custom_call.1} parent=1 // pred_region
      %55 = vsyncadd [#allocation9], 0
      %s57 = sshll.u32 %s3, 4
      %s58 = int_to_ptr.hbm [resolvable:$true] %s57
      %s59 = sshll.u32 [#allocation8], 4
      %s60 = int_to_ptr.vmem [resolvable:$true] %s59
      %62 = dma.hbm_to_vmem [thread:$0]  %s58, 64, %s60, [#allocation9]
    $region17: #{tpu_custom_call.1} parent=1 // pred_fallthru
      _
    // Predicated region
    $region18: #{tpu_custom_call.1} parent=1 // pred_check
      _
    $region19: #{tpu_custom_call.1} parent=1 // pred_check_branch
      %64 = sbr.rel (0) target = $region21
    $region20: #{tpu_custom_call.1} parent=1 // pred_region
      %66 = vsyncadd [#allocation9], 0
      %s67 = sshll.u32 %s4, 4
      %s68 = int_to_ptr.hbm [resolvable:$true] %s67
      %s69 = sshll.u32 [#allocation10], 4
      %s70 = int_to_ptr.vmem [resolvable:$true] %s69
      %75 = dma.hbm_to_vmem [thread:$0]  %s68, 8192, %s70, [#allocation9], 128, 128, 8
    $region21: #{tpu_custom_call.1} parent=1 // pred_fallthru
      _
    // Predicated region
    $region22: #{tpu_custom_call.1} parent=1 // pred_check
      _
    $region23: #{tpu_custom_call.1} parent=1 // pred_check_branch
      %77 = sbr.rel (0) target = $region25
    $region24: #{tpu_custom_call.1} parent=1 // pred_region
      _
    $region25: #{tpu_custom_call.1} parent=1 // pred_fallthru
      _
    // Predicated region
    $region26: #{tpu_custom_call.1} parent=1 // pred_check
      _
    $region27: #{tpu_custom_call.1} parent=1 // pred_check_branch
      %79 = sbr.rel (0) target = $region29
    $region28: #{tpu_custom_call.1} parent=1 // pred_region
      %81 = dma.done [#allocation3], 8192
    $region29: #{tpu_custom_call.1} parent=1 // pred_fallthru
      _
    // Predicated region
    $region30: #{tpu_custom_call.1} parent=1 // pred_check
      _
    $region31: #{tpu_custom_call.1} parent=1 // pred_check_branch
      %83 = sbr.rel (0) target = $region33
    $region32: #{tpu_custom_call.1} parent=1 // pred_region
      %85 = dma.done [#allocation6], 8192
    $region33: #{tpu_custom_call.1} parent=1 // pred_fallthru
      _
    // Predicated region
    $region34: #{tpu_custom_call.1} parent=1 // pred_check
      _
    $region35: #{tpu_custom_call.1} parent=1 // pred_check_branch
      %87 = sbr.rel (0) target = $region37
    $region36: #{tpu_custom_call.1} parent=1 // pred_region
      %89 = dma.done [#allocation6], 64
    $region37: #{tpu_custom_call.1} parent=1 // pred_fallthru
      _
    // Predicated region
    $region38: #{tpu_custom_call.1} parent=1 // pred_check
      _
    $region39: #{tpu_custom_call.1} parent=1 // pred_check_branch
      %91 = sbr.rel (0) target = $region41
    $region40: #{tpu_custom_call.1} parent=1 // pred_region
      %93 = dma.done [#allocation9], 64
    $region41: #{tpu_custom_call.1} parent=1 // pred_fallthru
      _
    // Predicated region
    $region42: #{tpu_custom_call.1} parent=1 // pred_check
      _
    $region43: #{tpu_custom_call.1} parent=1 // pred_check_branch
      %95 = sbr.rel (0) target = $region45
    $region44: #{tpu_custom_call.1} parent=1 // pred_region
      %97 = dma.done [#allocation9], 8192
    $region45: #{tpu_custom_call.1} parent=1 // pred_fallthru
      _
    %v98 = vld [vmem:[#allocation2] sm:$0xff]
    %v99 = vld [vmem:[#allocation2 + $0x8] sm:$0xff]
    %v100 = vld [vmem:[#allocation2 + $0x10] sm:$0xff]
    %v101 = vld [vmem:[#allocation2 + $0x18] sm:$0xff]
    %v102 = vld [vmem:[#allocation2 + $0x20] sm:$0xff]
    %v103 = vld [vmem:[#allocation2 + $0x28] sm:$0xff]
    %v104 = vld [vmem:[#allocation2 + $0x30] sm:$0xff]
    %v105 = vld [vmem:[#allocation2 + $0x38] sm:$0xff]
    %v106 = vld [vmem:[#allocation2 + $0x40] sm:$0xff]
    %v107 = vld [vmem:[#allocation2 + $0x48] sm:$0xff]
    %v108 = vld [vmem:[#allocation2 + $0x50] sm:$0xff]
    %v109 = vld [vmem:[#allocation2 + $0x58] sm:$0xff]
    %v110 = vld [vmem:[#allocation2 + $0x60] sm:$0xff]
    %v111 = vld [vmem:[#allocation2 + $0x68] sm:$0xff]
    %v112 = vld [vmem:[#allocation2 + $0x70] sm:$0xff]
    %v113 = vld [vmem:[#allocation2 + $0x78] sm:$0xff]
    %v114 = vld [vmem:[#allocation2 + $0x80] sm:$0xff]
    %v115 = vld [vmem:[#allocation2 + $0x88] sm:$0xff]
    %v116 = vld [vmem:[#allocation2 + $0x90] sm:$0xff]
    %v117 = vld [vmem:[#allocation2 + $0x98] sm:$0xff]
    %v118 = vld [vmem:[#allocation2 + $0xa0] sm:$0xff]
    %v119 = vld [vmem:[#allocation2 + $0xa8] sm:$0xff]
    %v120 = vld [vmem:[#allocation2 + $0xb0] sm:$0xff]
    %v121 = vld [vmem:[#allocation2 + $0xb8] sm:$0xff]
    %v122 = vld [vmem:[#allocation2 + $0xc0] sm:$0xff]
    %v123 = vld [vmem:[#allocation2 + $0xc8] sm:$0xff]
    %v124 = vld [vmem:[#allocation2 + $0xd0] sm:$0xff]
    %v125 = vld [vmem:[#allocation2 + $0xd8] sm:$0xff]
    %v126 = vld [vmem:[#allocation2 + $0xe0] sm:$0xff]
    %v127 = vld [vmem:[#allocation2 + $0xe8] sm:$0xff]
    %v128 = vld [vmem:[#allocation2 + $0xf0] sm:$0xff]
    %v129 = vld [vmem:[#allocation2 + $0xf8] sm:$0xff]
    %v130 = vld [vmem:[#allocation2 + $0x100] sm:$0xff]
    %v131 = vld [vmem:[#allocation2 + $0x108] sm:$0xff]
    %v132 = vld [vmem:[#allocation2 + $0x110] sm:$0xff]
    %v133 = vld [vmem:[#allocation2 + $0x118] sm:$0xff]
    %v134 = vld [vmem:[#allocation2 + $0x120] sm:$0xff]
    %v135 = vld [vmem:[#allocation2 + $0x128] sm:$0xff]
    %v136 = vld [vmem:[#allocation2 + $0x130] sm:$0xff]
    %v137 = vld [vmem:[#allocation2 + $0x138] sm:$0xff]
    %v138 = vld [vmem:[#allocation2 + $0x140] sm:$0xff]
    %v139 = vld [vmem:[#allocation2 + $0x148] sm:$0xff]
    %v140 = vld [vmem:[#allocation2 + $0x150] sm:$0xff]
    %v141 = vld [vmem:[#allocation2 + $0x158] sm:$0xff]
    %v142 = vld [vmem:[#allocation2 + $0x160] sm:$0xff]
    %v143 = vld [vmem:[#allocation2 + $0x168] sm:$0xff]
    %v144 = vld [vmem:[#allocation2 + $0x170] sm:$0xff]
    %v145 = vld [vmem:[#allocation2 + $0x178] sm:$0xff]
    %v146 = vld [vmem:[#allocation2 + $0x180] sm:$0xff]
    %v147 = vld [vmem:[#allocation2 + $0x188] sm:$0xff]
    %v148 = vld [vmem:[#allocation2 + $0x190] sm:$0xff]
    %v149 = vld [vmem:[#allocation2 + $0x198] sm:$0xff]
    %v150 = vld [vmem:[#allocation2 + $0x1a0] sm:$0xff]
    %v151 = vld [vmem:[#allocation2 + $0x1a8] sm:$0xff]
    %v152 = vld [vmem:[#allocation2 + $0x1b0] sm:$0xff]
    %v153 = vld [vmem:[#allocation2 + $0x1b8] sm:$0xff]
    %v154 = vld [vmem:[#allocation2 + $0x1c0] sm:$0xff]
    %v155 = vld [vmem:[#allocation2 + $0x1c8] sm:$0xff]
    %v156 = vld [vmem:[#allocation2 + $0x1d0] sm:$0xff]
    %v157 = vld [vmem:[#allocation2 + $0x1d8] sm:$0xff]
    %v158 = vld [vmem:[#allocation2 + $0x1e0] sm:$0xff]
    %v159 = vld [vmem:[#allocation2 + $0x1e8] sm:$0xff]
    %v160 = vld [vmem:[#allocation2 + $0x1f0] sm:$0xff]
    %v161 = vld [vmem:[#allocation2 + $0x1f8] sm:$0xff]
    %v162 = vpack.c.bf16 %v100, %v98
    %v163 = vpack.c.bf16 %v101, %v99
    %v164 = vpack.c.bf16 %v104, %v102
    %v165 = vpack.c.bf16 %v105, %v103
    %v166 = vpack.c.bf16 %v108, %v106
    %v167 = vpack.c.bf16 %v109, %v107
    %v168 = vpack.c.bf16 %v112, %v110
    %v169 = vpack.c.bf16 %v113, %v111
    %v170 = vpack.c.bf16 %v116, %v114
    %v171 = vpack.c.bf16 %v117, %v115
    %v172 = vpack.c.bf16 %v120, %v118
    %v173 = vpack.c.bf16 %v121, %v119
    %v174 = vpack.c.bf16 %v124, %v122
    %v175 = vpack.c.bf16 %v125, %v123
    %v176 = vpack.c.bf16 %v128, %v126
    %v177 = vpack.c.bf16 %v129, %v127
    %v178 = vpack.c.bf16 %v132, %v130
    %v179 = vpack.c.bf16 %v133, %v131
    %v180 = vpack.c.bf16 %v136, %v134
    %v181 = vpack.c.bf16 %v137, %v135
    %v182 = vpack.c.bf16 %v140, %v138
    %v183 = vpack.c.bf16 %v141, %v139
    %v184 = vpack.c.bf16 %v144, %v142
    %v185 = vpack.c.bf16 %v145, %v143
    %v186 = vpack.c.bf16 %v148, %v146
    %v187 = vpack.c.bf16 %v149, %v147
    %v188 = vpack.c.bf16 %v152, %v150
    %v189 = vpack.c.bf16 %v153, %v151
    %v190 = vpack.c.bf16 %v156, %v154
    %v191 = vpack.c.bf16 %v157, %v155
    %v192 = vpack.c.bf16 %v160, %v158
    %v193 = vpack.c.bf16 %v161, %v159
    %v194 = vld [vmem:[#allocation5] sm:$0xff]
    %v195 = vld [vmem:[#allocation5 + $0x8] sm:$0xff]
    %v196 = vld [vmem:[#allocation5 + $0x10] sm:$0xff]
    %v197 = vld [vmem:[#allocation5 + $0x18] sm:$0xff]
    %v198 = vld [vmem:[#allocation5 + $0x20] sm:$0xff]
    %v199 = vld [vmem:[#allocation5 + $0x28] sm:$0xff]
    %v200 = vld [vmem:[#allocation5 + $0x30] sm:$0xff]
    %v201 = vld [vmem:[#allocation5 + $0x38] sm:$0xff]
    %v202 = vld [vmem:[#allocation5 + $0x40] sm:$0xff]
    %v203 = vld [vmem:[#allocation5 + $0x48] sm:$0xff]
    %v204 = vld [vmem:[#allocation5 + $0x50] sm:$0xff]
    %v205 = vld [vmem:[#allocation5 + $0x58] sm:$0xff]
    %v206 = vld [vmem:[#allocation5 + $0x60] sm:$0xff]
    %v207 = vld [vmem:[#allocation5 + $0x68] sm:$0xff]
    %v208 = vld [vmem:[#allocation5 + $0x70] sm:$0xff]
    %v209 = vld [vmem:[#allocation5 + $0x78] sm:$0xff]
    %v210 = vld [vmem:[#allocation5 + $0x80] sm:$0xff]
    %v211 = vld [vmem:[#allocation5 + $0x88] sm:$0xff]
    %v212 = vld [vmem:[#allocation5 + $0x90] sm:$0xff]
    %v213 = vld [vmem:[#allocation5 + $0x98] sm:$0xff]
    %v214 = vld [vmem:[#allocation5 + $0xa0] sm:$0xff]
    %v215 = vld [vmem:[#allocation5 + $0xa8] sm:$0xff]
    %v216 = vld [vmem:[#allocation5 + $0xb0] sm:$0xff]
    %v217 = vld [vmem:[#allocation5 + $0xb8] sm:$0xff]
    %v218 = vld [vmem:[#allocation5 + $0xc0] sm:$0xff]
    %v219 = vld [vmem:[#allocation5 + $0xc8] sm:$0xff]
    %v220 = vld [vmem:[#allocation5 + $0xd0] sm:$0xff]
    %v221 = vld [vmem:[#allocation5 + $0xd8] sm:$0xff]
    %v222 = vld [vmem:[#allocation5 + $0xe0] sm:$0xff]
    %v223 = vld [vmem:[#allocation5 + $0xe8] sm:$0xff]
    %v224 = vld [vmem:[#allocation5 + $0xf0] sm:$0xff]
    %v225 = vld [vmem:[#allocation5 + $0xf8] sm:$0xff]
    %v226 = vld [vmem:[#allocation5 + $0x100] sm:$0xff]
    %v227 = vld [vmem:[#allocation5 + $0x108] sm:$0xff]
    %v228 = vld [vmem:[#allocation5 + $0x110] sm:$0xff]
    %v229 = vld [vmem:[#allocation5 + $0x118] sm:$0xff]
    %v230 = vld [vmem:[#allocation5 + $0x120] sm:$0xff]
    %v231 = vld [vmem:[#allocation5 + $0x128] sm:$0xff]
    %v232 = vld [vmem:[#allocation5 + $0x130] sm:$0xff]
    %v233 = vld [vmem:[#allocation5 + $0x138] sm:$0xff]
    %v234 = vld [vmem:[#allocation5 + $0x140] sm:$0xff]
    %v235 = vld [vmem:[#allocation5 + $0x148] sm:$0xff]
    %v236 = vld [vmem:[#allocation5 + $0x150] sm:$0xff]
    %v237 = vld [vmem:[#allocation5 + $0x158] sm:$0xff]
    %v238 = vld [vmem:[#allocation5 + $0x160] sm:$0xff]
    %v239 = vld [vmem:[#allocation5 + $0x168] sm:$0xff]
    %v240 = vld [vmem:[#allocation5 + $0x170] sm:$0xff]
    %v241 = vld [vmem:[#allocation5 + $0x178] sm:$0xff]
    %v242 = vld [vmem:[#allocation5 + $0x180] sm:$0xff]
    %v243 = vld [vmem:[#allocation5 + $0x188] sm:$0xff]
    %v244 = vld [vmem:[#allocation5 + $0x190] sm:$0xff]
    %v245 = vld [vmem:[#allocation5 + $0x198] sm:$0xff]
    %v246 = vld [vmem:[#allocation5 + $0x1a0] sm:$0xff]
    %v247 = vld [vmem:[#allocation5 + $0x1a8] sm:$0xff]
    %v248 = vld [vmem:[#allocation5 + $0x1b0] sm:$0xff]
    %v249 = vld [vmem:[#allocation5 + $0x1b8] sm:$0xff]
    %v250 = vld [vmem:[#allocation5 + $0x1c0] sm:$0xff]
    %v251 = vld [vmem:[#allocation5 + $0x1c8] sm:$0xff]
    %v252 = vld [vmem:[#allocation5 + $0x1d0] sm:$0xff]
    %v253 = vld [vmem:[#allocation5 + $0x1d8] sm:$0xff]
    %v254 = vld [vmem:[#allocation5 + $0x1e0] sm:$0xff]
    %v255 = vld [vmem:[#allocation5 + $0x1e8] sm:$0xff]
    %v256 = vld [vmem:[#allocation5 + $0x1f0] sm:$0xff]
    %v257 = vld [vmem:[#allocation5 + $0x1f8] sm:$0xff]
    %v322 = vunpack.c.l.b16 %v194
    %v323 = vunpack.c.h.b16 %v194
    %v324 = vunpack.c.l.b16 %v195
    %v325 = vunpack.c.h.b16 %v195
    %v326 = vunpack.c.l.b16 %v196
    %v327 = vunpack.c.h.b16 %v196
    %v328 = vunpack.c.l.b16 %v197
    %v329 = vunpack.c.h.b16 %v197
    %v330 = vunpack.c.l.b16 %v198
    %v331 = vunpack.c.h.b16 %v198
    %v332 = vunpack.c.l.b16 %v199
    %v333 = vunpack.c.h.b16 %v199
    %v334 = vunpack.c.l.b16 %v200
    %v335 = vunpack.c.h.b16 %v200
    %v336 = vunpack.c.l.b16 %v201
    %v337 = vunpack.c.h.b16 %v201
    %v338 = vunpack.c.l.b16 %v202
    %v339 = vunpack.c.h.b16 %v202
    %v340 = vunpack.c.l.b16 %v203
    %v341 = vunpack.c.h.b16 %v203
    %v342 = vunpack.c.l.b16 %v204
    %v343 = vunpack.c.h.b16 %v204
    %v344 = vunpack.c.l.b16 %v205
    %v345 = vunpack.c.h.b16 %v205
    %v346 = vunpack.c.l.b16 %v206
    %v347 = vunpack.c.h.b16 %v206
    %v348 = vunpack.c.l.b16 %v207
    %v349 = vunpack.c.h.b16 %v207
    %v350 = vunpack.c.l.b16 %v208
    %v351 = vunpack.c.h.b16 %v208
    %v352 = vunpack.c.l.b16 %v209
    %v353 = vunpack.c.h.b16 %v209
    %v354 = vunpack.c.l.b16 %v210
    %v355 = vunpack.c.h.b16 %v210
    %v356 = vunpack.c.l.b16 %v211
    %v357 = vunpack.c.h.b16 %v211
    %v358 = vunpack.c.l.b16 %v212
    %v359 = vunpack.c.h.b16 %v212
    %v360 = vunpack.c.l.b16 %v213
    %v361 = vunpack.c.h.b16 %v213
    %v362 = vunpack.c.l.b16 %v214
    %v363 = vunpack.c.h.b16 %v214
    %v364 = vunpack.c.l.b16 %v215
    %v365 = vunpack.c.h.b16 %v215
    %v366 = vunpack.c.l.b16 %v216
    %v367 = vunpack.c.h.b16 %v216
    %v368 = vunpack.c.l.b16 %v217
    %v369 = vunpack.c.h.b16 %v217
    %v370 = vunpack.c.l.b16 %v218
    %v371 = vunpack.c.h.b16 %v218
    %v372 = vunpack.c.l.b16 %v219
    %v373 = vunpack.c.h.b16 %v219
    %v374 = vunpack.c.l.b16 %v220
    %v375 = vunpack.c.h.b16 %v220
    %v376 = vunpack.c.l.b16 %v221
    %v377 = vunpack.c.h.b16 %v221
    %v378 = vunpack.c.l.b16 %v222
    %v379 = vunpack.c.h.b16 %v222
    %v380 = vunpack.c.l.b16 %v223
    %v381 = vunpack.c.h.b16 %v223
    %v382 = vunpack.c.l.b16 %v224
    %v383 = vunpack.c.h.b16 %v224
    %v384 = vunpack.c.l.b16 %v225
    %v385 = vunpack.c.h.b16 %v225
    %v386 = vunpack.c.l.b16 %v226
    %v387 = vunpack.c.h.b16 %v226
    %v388 = vunpack.c.l.b16 %v227
    %v389 = vunpack.c.h.b16 %v227
    %v390 = vunpack.c.l.b16 %v228
    %v391 = vunpack.c.h.b16 %v228
    %v392 = vunpack.c.l.b16 %v229
    %v393 = vunpack.c.h.b16 %v229
    %v394 = vunpack.c.l.b16 %v230
    %v395 = vunpack.c.h.b16 %v230
    %v396 = vunpack.c.l.b16 %v231
    %v397 = vunpack.c.h.b16 %v231
    %v398 = vunpack.c.l.b16 %v232
    %v399 = vunpack.c.h.b16 %v232
    %v400 = vunpack.c.l.b16 %v233
    %v401 = vunpack.c.h.b16 %v233
    %v402 = vunpack.c.l.b16 %v234
    %v403 = vunpack.c.h.b16 %v234
    %v404 = vunpack.c.l.b16 %v235
    %v405 = vunpack.c.h.b16 %v235
    %v406 = vunpack.c.l.b16 %v236
    %v407 = vunpack.c.h.b16 %v236
    %v408 = vunpack.c.l.b16 %v237
    %v409 = vunpack.c.h.b16 %v237
    %v410 = vunpack.c.l.b16 %v238
    %v411 = vunpack.c.h.b16 %v238
    %v412 = vunpack.c.l.b16 %v239
    %v413 = vunpack.c.h.b16 %v239
    %v414 = vunpack.c.l.b16 %v240
    %v415 = vunpack.c.h.b16 %v240
    %v416 = vunpack.c.l.b16 %v241
    %v417 = vunpack.c.h.b16 %v241
    %v418 = vunpack.c.l.b16 %v242
    %v419 = vunpack.c.h.b16 %v242
    %v420 = vunpack.c.l.b16 %v243
    %v421 = vunpack.c.h.b16 %v243
    %v422 = vunpack.c.l.b16 %v244
    %v423 = vunpack.c.h.b16 %v244
    %v424 = vunpack.c.l.b16 %v245
    %v425 = vunpack.c.h.b16 %v245
    %v426 = vunpack.c.l.b16 %v246
    %v427 = vunpack.c.h.b16 %v246
    %v428 = vunpack.c.l.b16 %v247
    %v429 = vunpack.c.h.b16 %v247
    %v430 = vunpack.c.l.b16 %v248
    %v431 = vunpack.c.h.b16 %v248
    %v432 = vunpack.c.l.b16 %v249
    %v433 = vunpack.c.h.b16 %v249
    %v434 = vunpack.c.l.b16 %v250
    %v435 = vunpack.c.h.b16 %v250
    %v436 = vunpack.c.l.b16 %v251
    %v437 = vunpack.c.h.b16 %v251
    %v438 = vunpack.c.l.b16 %v252
    %v439 = vunpack.c.h.b16 %v252
    %v440 = vunpack.c.l.b16 %v253
    %v441 = vunpack.c.h.b16 %v253
    %v442 = vunpack.c.l.b16 %v254
    %v443 = vunpack.c.h.b16 %v254
    %v444 = vunpack.c.l.b16 %v255
    %v445 = vunpack.c.h.b16 %v255
    %v446 = vunpack.c.l.b16 %v256
    %v447 = vunpack.c.h.b16 %v256
    %v448 = vunpack.c.l.b16 %v257
    %v449 = vunpack.c.h.b16 %v257
    %v450 = vpack.c.b16 %v326, %v322
    %v451 = vpack.c.b16 %v327, %v323
    %v452 = vpack.c.b16 %v328, %v324
    %v453 = vpack.c.b16 %v329, %v325
    %v454 = vpack.c.b16 %v334, %v330
    %v455 = vpack.c.b16 %v335, %v331
    %v456 = vpack.c.b16 %v336, %v332
    %v457 = vpack.c.b16 %v337, %v333
    %v458 = vpack.c.b16 %v342, %v338
    %v459 = vpack.c.b16 %v343, %v339
    %v460 = vpack.c.b16 %v344, %v340
    %v461 = vpack.c.b16 %v345, %v341
    %v462 = vpack.c.b16 %v350, %v346
    %v463 = vpack.c.b16 %v351, %v347
    %v464 = vpack.c.b16 %v352, %v348
    %v465 = vpack.c.b16 %v353, %v349
    %v466 = vpack.c.b16 %v358, %v354
    %v467 = vpack.c.b16 %v359, %v355
    %v468 = vpack.c.b16 %v360, %v356
    %v469 = vpack.c.b16 %v361, %v357
    %v470 = vpack.c.b16 %v366, %v362
    %v471 = vpack.c.b16 %v367, %v363
    %v472 = vpack.c.b16 %v368, %v364
    %v473 = vpack.c.b16 %v369, %v365
    %v474 = vpack.c.b16 %v374, %v370
    %v475 = vpack.c.b16 %v375, %v371
    %v476 = vpack.c.b16 %v376, %v372
    %v477 = vpack.c.b16 %v377, %v373
    %v478 = vpack.c.b16 %v382, %v378
    %v479 = vpack.c.b16 %v383, %v379
    %v480 = vpack.c.b16 %v384, %v380
    %v481 = vpack.c.b16 %v385, %v381
    %v482 = vpack.c.b16 %v390, %v386
    %v483 = vpack.c.b16 %v391, %v387
    %v484 = vpack.c.b16 %v392, %v388
    %v485 = vpack.c.b16 %v393, %v389
    %v486 = vpack.c.b16 %v398, %v394
    %v487 = vpack.c.b16 %v399, %v395
    %v488 = vpack.c.b16 %v400, %v396
    %v489 = vpack.c.b16 %v401, %v397
    %v490 = vpack.c.b16 %v406, %v402
    %v491 = vpack.c.b16 %v407, %v403
    %v492 = vpack.c.b16 %v408, %v404
    %v493 = vpack.c.b16 %v409, %v405
    %v494 = vpack.c.b16 %v414, %v410
    %v495 = vpack.c.b16 %v415, %v411
    %v496 = vpack.c.b16 %v416, %v412
    %v497 = vpack.c.b16 %v417, %v413
    %v498 = vpack.c.b16 %v422, %v418
    %v499 = vpack.c.b16 %v423, %v419
    %v500 = vpack.c.b16 %v424, %v420
    %v501 = vpack.c.b16 %v425, %v421
    %v502 = vpack.c.b16 %v430, %v426
    %v503 = vpack.c.b16 %v431, %v427
    %v504 = vpack.c.b16 %v432, %v428
    %v505 = vpack.c.b16 %v433, %v429
    %v506 = vpack.c.b16 %v438, %v434
    %v507 = vpack.c.b16 %v439, %v435
    %v508 = vpack.c.b16 %v440, %v436
    %v509 = vpack.c.b16 %v441, %v437
    %v510 = vpack.c.b16 %v446, %v442
    %v511 = vpack.c.b16 %v447, %v443
    %v512 = vpack.c.b16 %v448, %v444
    %v513 = vpack.c.b16 %v449, %v445
    %578 = vmatpush.bf16.msra.mxu0 %v478
    %579 = vmatpush.bf16.msra.mxu0 %v474
    %580 = vmatpush.bf16.msra.mxu0 %v470
    %581 = vmatpush.bf16.msra.mxu0 %v466
    %582 = vmatpush.bf16.msra.mxu0 %v462
    %583 = vmatpush.bf16.msra.mxu0 %v458
    %584 = vmatpush.bf16.msra.mxu0 %v454
    %585 = vmatpush.bf16.msra.mxu0 %v450
    %586 = vmatmul.bf16.gmra.mxu0 %v162
    %v587 = vpop.f32.mrf.mxu0
    %v588 = vadd.f32 0.0, %v587
    %v589 = vpop.f32.mrf.mxu0
    %v590 = vadd.f32 0.0, %v589
    %591 = vmatmul.bf16.gmra.mxu0 %v164
    %v592 = vpop.f32.mrf.mxu0
    %v593 = vadd.f32 0.0, %v592
    %v594 = vpop.f32.mrf.mxu0
    %v595 = vadd.f32 0.0, %v594
    %596 = vmatmul.bf16.gmra.mxu0 %v166
    %v597 = vpop.f32.mrf.mxu0
    %v598 = vadd.f32 0.0, %v597
    %v599 = vpop.f32.mrf.mxu0
    %v600 = vadd.f32 0.0, %v599
    %601 = vmatmul.bf16.gmra.mxu0 %v168
    %v602 = vpop.f32.mrf.mxu0
    %v603 = vadd.f32 0.0, %v602
    %v604 = vpop.f32.mrf.mxu0
    %v605 = vadd.f32 0.0, %v604
    %606 = vmatmul.bf16.gmra.mxu0 %v170
    %v607 = vpop.f32.mrf.mxu0
    %v608 = vadd.f32 0.0, %v607
    %v609 = vpop.f32.mrf.mxu0
    %v610 = vadd.f32 0.0, %v609
    %611 = vmatmul.bf16.gmra.mxu0 %v172
    %v612 = vpop.f32.mrf.mxu0
    %v613 = vadd.f32 0.0, %v612
    %v614 = vpop.f32.mrf.mxu0
    %v615 = vadd.f32 0.0, %v614
    %616 = vmatmul.bf16.gmra.mxu0 %v174
    %v617 = vpop.f32.mrf.mxu0
    %v618 = vadd.f32 0.0, %v617
    %v619 = vpop.f32.mrf.mxu0
    %v620 = vadd.f32 0.0, %v619
    %621 = vmatmul.bf16.gmra.mxu0 %v176
    %v622 = vpop.f32.mrf.mxu0
    %v623 = vadd.f32 0.0, %v622
    %v624 = vpop.f32.mrf.mxu0
    %v625 = vadd.f32 0.0, %v624
    %626 = vmatmul.bf16.gmra.mxu0 %v178
    %v627 = vpop.f32.mrf.mxu0
    %v628 = vadd.f32 0.0, %v627
    %v629 = vpop.f32.mrf.mxu0
    %v630 = vadd.f32 0.0, %v629
    %631 = vmatmul.bf16.gmra.mxu0 %v180
    %v632 = vpop.f32.mrf.mxu0
    %v633 = vadd.f32 0.0, %v632
    %v634 = vpop.f32.mrf.mxu0
    %v635 = vadd.f32 0.0, %v634
    %636 = vmatmul.bf16.gmra.mxu0 %v182
    %v637 = vpop.f32.mrf.mxu0
    %v638 = vadd.f32 0.0, %v637
    %v639 = vpop.f32.mrf.mxu0
    %v640 = vadd.f32 0.0, %v639
    %641 = vmatmul.bf16.gmra.mxu0 %v184
    %v642 = vpop.f32.mrf.mxu0
    %v643 = vadd.f32 0.0, %v642
    %v644 = vpop.f32.mrf.mxu0
    %v645 = vadd.f32 0.0, %v644
    %646 = vmatmul.bf16.gmra.mxu0 %v186
    %v647 = vpop.f32.mrf.mxu0
    %v648 = vadd.f32 0.0, %v647
    %v649 = vpop.f32.mrf.mxu0
    %v650 = vadd.f32 0.0, %v649
    %651 = vmatmul.bf16.gmra.mxu0 %v188
    %v652 = vpop.f32.mrf.mxu0
    %v653 = vadd.f32 0.0, %v652
    %v654 = vpop.f32.mrf.mxu0
    %v655 = vadd.f32 0.0, %v654
    %656 = vmatmul.bf16.gmra.mxu0 %v190
    %v657 = vpop.f32.mrf.mxu0
    %v658 = vadd.f32 0.0, %v657
    %v659 = vpop.f32.mrf.mxu0
    %v660 = vadd.f32 0.0, %v659
    %661 = vmatmul.bf16.gmra.mxu0 %v192
    %v662 = vpop.f32.mrf.mxu0
    %v663 = vadd.f32 0.0, %v662
    %v664 = vpop.f32.mrf.mxu0
    %v665 = vadd.f32 0.0, %v664
    %666 = vdwg.mxu0
    %667 = vmatpush.bf16.msra.mxu0 %v510
    %668 = vmatpush.bf16.msra.mxu0 %v506
    %669 = vmatpush.bf16.msra.mxu0 %v502
    %670 = vmatpush.bf16.msra.mxu0 %v498
    %671 = vmatpush.bf16.msra.mxu0 %v494
    %672 = vmatpush.bf16.msra.mxu0 %v490
    %673 = vmatpush.bf16.msra.mxu0 %v486
    %674 = vmatpush.bf16.msra.mxu0 %v482
    %675 = vmatmul.bf16.gmra.mxu0 %v163
    %v676 = vpop.f32.mrf.mxu0
    %v677 = vadd.f32 %v588, %v676
    %v678 = vpop.f32.mrf.mxu0
    %v679 = vadd.f32 %v590, %v678
    %680 = vmatmul.bf16.gmra.mxu0 %v165
    %v681 = vpop.f32.mrf.mxu0
    %v682 = vadd.f32 %v593, %v681
    %v683 = vpop.f32.mrf.mxu0
    %v684 = vadd.f32 %v595, %v683
    %685 = vmatmul.bf16.gmra.mxu0 %v167
    %v686 = vpop.f32.mrf.mxu0
    %v687 = vadd.f32 %v598, %v686
    %v688 = vpop.f32.mrf.mxu0
    %v689 = vadd.f32 %v600, %v688
    %690 = vmatmul.bf16.gmra.mxu0 %v169
    %v691 = vpop.f32.mrf.mxu0
    %v692 = vadd.f32 %v603, %v691
    %v693 = vpop.f32.mrf.mxu0
    %v694 = vadd.f32 %v605, %v693
    %695 = vmatmul.bf16.gmra.mxu0 %v171
    %v696 = vpop.f32.mrf.mxu0
    %v697 = vadd.f32 %v608, %v696
    %v698 = vpop.f32.mrf.mxu0
    %v699 = vadd.f32 %v610, %v698
    %700 = vmatmul.bf16.gmra.mxu0 %v173
    %v701 = vpop.f32.mrf.mxu0
    %v702 = vadd.f32 %v613, %v701
    %v703 = vpop.f32.mrf.mxu0
    %v704 = vadd.f32 %v615, %v703
    %705 = vmatmul.bf16.gmra.mxu0 %v175
    %v706 = vpop.f32.mrf.mxu0
    %v707 = vadd.f32 %v618, %v706
    %v708 = vpop.f32.mrf.mxu0
    %v709 = vadd.f32 %v620, %v708
    %710 = vmatmul.bf16.gmra.mxu0 %v177
    %v711 = vpop.f32.mrf.mxu0
    %v712 = vadd.f32 %v623, %v711
    %v713 = vpop.f32.mrf.mxu0
    %v714 = vadd.f32 %v625, %v713
    %715 = vmatmul.bf16.gmra.mxu0 %v179
    %v716 = vpop.f32.mrf.mxu0
    %v717 = vadd.f32 %v628, %v716
    %v718 = vpop.f32.mrf.mxu0
    %v719 = vadd.f32 %v630, %v718
    %720 = vmatmul.bf16.gmra.mxu0 %v181
    %v721 = vpop.f32.mrf.mxu0
    %v722 = vadd.f32 %v633, %v721
    %v723 = vpop.f32.mrf.mxu0
    %v724 = vadd.f32 %v635, %v723
    %725 = vmatmul.bf16.gmra.mxu0 %v183
    %v726 = vpop.f32.mrf.mxu0
    %v727 = vadd.f32 %v638, %v726
    %v728 = vpop.f32.mrf.mxu0
    %v729 = vadd.f32 %v640, %v728
    %730 = vmatmul.bf16.gmra.mxu0 %v185
    %v731 = vpop.f32.mrf.mxu0
    %v732 = vadd.f32 %v643, %v731
    %v733 = vpop.f32.mrf.mxu0
    %v734 = vadd.f32 %v645, %v733
    %735 = vmatmul.bf16.gmra.mxu0 %v187
    %v736 = vpop.f32.mrf.mxu0
    %v737 = vadd.f32 %v648, %v736
    %v738 = vpop.f32.mrf.mxu0
    %v739 = vadd.f32 %v650, %v738
    %740 = vmatmul.bf16.gmra.mxu0 %v189
    %v741 = vpop.f32.mrf.mxu0
    %v742 = vadd.f32 %v653, %v741
    %v743 = vpop.f32.mrf.mxu0
    %v744 = vadd.f32 %v655, %v743
    %745 = vmatmul.bf16.gmra.mxu0 %v191
    %v746 = vpop.f32.mrf.mxu0
    %v747 = vadd.f32 %v658, %v746
    %v748 = vpop.f32.mrf.mxu0
    %v749 = vadd.f32 %v660, %v748
    %750 = vmatmul.bf16.gmra.mxu0 %v193
    %v751 = vpop.f32.mrf.mxu0
    %v752 = vadd.f32 %v663, %v751
    %v753 = vpop.f32.mrf.mxu0
    %v754 = vadd.f32 %v665, %v753
    %755 = vdwg.mxu0
    %756 = vmatpush.bf16.msra.mxu0 %v479
    %757 = vmatpush.bf16.msra.mxu0 %v475
    %758 = vmatpush.bf16.msra.mxu0 %v471
    %759 = vmatpush.bf16.msra.mxu0 %v467
    %760 = vmatpush.bf16.msra.mxu0 %v463
    %761 = vmatpush.bf16.msra.mxu0 %v459
    %762 = vmatpush.bf16.msra.mxu0 %v455
    %763 = vmatpush.bf16.msra.mxu0 %v451
    %764 = vmatmul.bf16.gmra.mxu0 %v162
    %v765 = vpop.f32.mrf.mxu0
    %v766 = vadd.f32 0.0, %v765
    %v767 = vpop.f32.mrf.mxu0
    %v768 = vadd.f32 0.0, %v767
    %769 = vmatmul.bf16.gmra.mxu0 %v164
    %v770 = vpop.f32.mrf.mxu0
    %v771 = vadd.f32 0.0, %v770
    %v772 = vpop.f32.mrf.mxu0
    %v773 = vadd.f32 0.0, %v772
    %774 = vmatmul.bf16.gmra.mxu0 %v166
    %v775 = vpop.f32.mrf.mxu0
    %v776 = vadd.f32 0.0, %v775
    %v777 = vpop.f32.mrf.mxu0
    %v778 = vadd.f32 0.0, %v777
    %779 = vmatmul.bf16.gmra.mxu0 %v168
    %v780 = vpop.f32.mrf.mxu0
    %v781 = vadd.f32 0.0, %v780
    %v782 = vpop.f32.mrf.mxu0
    %v783 = vadd.f32 0.0, %v782
    %784 = vmatmul.bf16.gmra.mxu0 %v170
    %v785 = vpop.f32.mrf.mxu0
    %v786 = vadd.f32 0.0, %v785
    %v787 = vpop.f32.mrf.mxu0
    %v788 = vadd.f32 0.0, %v787
    %789 = vmatmul.bf16.gmra.mxu0 %v172
    %v790 = vpop.f32.mrf.mxu0
    %v791 = vadd.f32 0.0, %v790
    %v792 = vpop.f32.mrf.mxu0
    %v793 = vadd.f32 0.0, %v792
    %794 = vmatmul.bf16.gmra.mxu0 %v174
    %v795 = vpop.f32.mrf.mxu0
    %v796 = vadd.f32 0.0, %v795
    %v797 = vpop.f32.mrf.mxu0
    %v798 = vadd.f32 0.0, %v797
    %799 = vmatmul.bf16.gmra.mxu0 %v176
    %v800 = vpop.f32.mrf.mxu0
    %v801 = vadd.f32 0.0, %v800
    %v802 = vpop.f32.mrf.mxu0
    %v803 = vadd.f32 0.0, %v802
    %804 = vmatmul.bf16.gmra.mxu0 %v178
    %v805 = vpop.f32.mrf.mxu0
    %v806 = vadd.f32 0.0, %v805
    %v807 = vpop.f32.mrf.mxu0
    %v808 = vadd.f32 0.0, %v807
    %809 = vmatmul.bf16.gmra.mxu0 %v180
    %v810 = vpop.f32.mrf.mxu0
    %v811 = vadd.f32 0.0, %v810
    %v812 = vpop.f32.mrf.mxu0
    %v813 = vadd.f32 0.0, %v812
    %814 = vmatmul.bf16.gmra.mxu0 %v182
    %v815 = vpop.f32.mrf.mxu0
    %v816 = vadd.f32 0.0, %v815
    %v817 = vpop.f32.mrf.mxu0
    %v818 = vadd.f32 0.0, %v817
    %819 = vmatmul.bf16.gmra.mxu0 %v184
    %v820 = vpop.f32.mrf.mxu0
    %v821 = vadd.f32 0.0, %v820
    %v822 = vpop.f32.mrf.mxu0
    %v823 = vadd.f32 0.0, %v822
    %824 = vmatmul.bf16.gmra.mxu0 %v186
    %v825 = vpop.f32.mrf.mxu0
    %v826 = vadd.f32 0.0, %v825
    %v827 = vpop.f32.mrf.mxu0
    %v828 = vadd.f32 0.0, %v827
    %829 = vmatmul.bf16.gmra.mxu0 %v188
    %v830 = vpop.f32.mrf.mxu0
    %v831 = vadd.f32 0.0, %v830
    %v832 = vpop.f32.mrf.mxu0
    %v833 = vadd.f32 0.0, %v832
    %834 = vmatmul.bf16.gmra.mxu0 %v190
    %v835 = vpop.f32.mrf.mxu0
    %v836 = vadd.f32 0.0, %v835
    %v837 = vpop.f32.mrf.mxu0
    %v838 = vadd.f32 0.0, %v837
    %839 = vmatmul.bf16.gmra.mxu0 %v192
    %v840 = vpop.f32.mrf.mxu0
    %v841 = vadd.f32 0.0, %v840
    %v842 = vpop.f32.mrf.mxu0
    %v843 = vadd.f32 0.0, %v842
    %844 = vdwg.mxu0
    %845 = vmatpush.bf16.msra.mxu0 %v511
    %846 = vmatpush.bf16.msra.mxu0 %v507
    %847 = vmatpush.bf16.msra.mxu0 %v503
    %848 = vmatpush.bf16.msra.mxu0 %v499
    %849 = vmatpush.bf16.msra.mxu0 %v495
    %850 = vmatpush.bf16.msra.mxu0 %v491
    %851 = vmatpush.bf16.msra.mxu0 %v487
    %852 = vmatpush.bf16.msra.mxu0 %v483
    %853 = vmatmul.bf16.gmra.mxu0 %v163
    %v854 = vpop.f32.mrf.mxu0
    %v855 = vadd.f32 %v766, %v854
    %v856 = vpop.f32.mrf.mxu0
    %v857 = vadd.f32 %v768, %v856
    %858 = vmatmul.bf16.gmra.mxu0 %v165
    %v859 = vpop.f32.mrf.mxu0
    %v860 = vadd.f32 %v771, %v859
    %v861 = vpop.f32.mrf.mxu0
    %v862 = vadd.f32 %v773, %v861
    %863 = vmatmul.bf16.gmra.mxu0 %v167
    %v864 = vpop.f32.mrf.mxu0
    %v865 = vadd.f32 %v776, %v864
    %v866 = vpop.f32.mrf.mxu0
    %v867 = vadd.f32 %v778, %v866
    %868 = vmatmul.bf16.gmra.mxu0 %v169
    %v869 = vpop.f32.mrf.mxu0
    %v870 = vadd.f32 %v781, %v869
    %v871 = vpop.f32.mrf.mxu0
    %v872 = vadd.f32 %v783, %v871
    %873 = vmatmul.bf16.gmra.mxu0 %v171
    %v874 = vpop.f32.mrf.mxu0
    %v875 = vadd.f32 %v786, %v874
    %v876 = vpop.f32.mrf.mxu0
    %v877 = vadd.f32 %v788, %v876
    %878 = vmatmul.bf16.gmra.mxu0 %v173
    %v879 = vpop.f32.mrf.mxu0
    %v880 = vadd.f32 %v791, %v879
    %v881 = vpop.f32.mrf.mxu0
    %v882 = vadd.f32 %v793, %v881
    %883 = vmatmul.bf16.gmra.mxu0 %v175
    %v884 = vpop.f32.mrf.mxu0
    %v885 = vadd.f32 %v796, %v884
    %v886 = vpop.f32.mrf.mxu0
    %v887 = vadd.f32 %v798, %v886
    %888 = vmatmul.bf16.gmra.mxu0 %v177
    %v889 = vpop.f32.mrf.mxu0
    %v890 = vadd.f32 %v801, %v889
    %v891 = vpop.f32.mrf.mxu0
    %v892 = vadd.f32 %v803, %v891
    %893 = vmatmul.bf16.gmra.mxu0 %v179
    %v894 = vpop.f32.mrf.mxu0
    %v895 = vadd.f32 %v806, %v894
    %v896 = vpop.f32.mrf.mxu0
    %v897 = vadd.f32 %v808, %v896
    %898 = vmatmul.bf16.gmra.mxu0 %v181
    %v899 = vpop.f32.mrf.mxu0
    %v900 = vadd.f32 %v811, %v899
    %v901 = vpop.f32.mrf.mxu0
    %v902 = vadd.f32 %v813, %v901
    %903 = vmatmul.bf16.gmra.mxu0 %v183
    %v904 = vpop.f32.mrf.mxu0
    %v905 = vadd.f32 %v816, %v904
    %v906 = vpop.f32.mrf.mxu0
    %v907 = vadd.f32 %v818, %v906
    %908 = vmatmul.bf16.gmra.mxu0 %v185
    %v909 = vpop.f32.mrf.mxu0
    %v910 = vadd.f32 %v821, %v909
    %v911 = vpop.f32.mrf.mxu0
    %v912 = vadd.f32 %v823, %v911
    %913 = vmatmul.bf16.gmra.mxu0 %v187
    %v914 = vpop.f32.mrf.mxu0
    %v915 = vadd.f32 %v826, %v914
    %v916 = vpop.f32.mrf.mxu0
    %v917 = vadd.f32 %v828, %v916
    %918 = vmatmul.bf16.gmra.mxu0 %v189
    %v919 = vpop.f32.mrf.mxu0
    %v920 = vadd.f32 %v831, %v919
    %v921 = vpop.f32.mrf.mxu0
    %v922 = vadd.f32 %v833, %v921
    %923 = vmatmul.bf16.gmra.mxu0 %v191
    %v924 = vpop.f32.mrf.mxu0
    %v925 = vadd.f32 %v836, %v924
    %v926 = vpop.f32.mrf.mxu0
    %v927 = vadd.f32 %v838, %v926
    %928 = vmatmul.bf16.gmra.mxu0 %v193
    %v929 = vpop.f32.mrf.mxu0
    %v930 = vadd.f32 %v841, %v929
    %v931 = vpop.f32.mrf.mxu0
    %v932 = vadd.f32 %v843, %v931
    %933 = vdwg.mxu0
    %934 = vmatpush.bf16.msra.mxu0 %v480
    %935 = vmatpush.bf16.msra.mxu0 %v476
    %936 = vmatpush.bf16.msra.mxu0 %v472
    %937 = vmatpush.bf16.msra.mxu0 %v468
    %938 = vmatpush.bf16.msra.mxu0 %v464
    %939 = vmatpush.bf16.msra.mxu0 %v460
    %940 = vmatpush.bf16.msra.mxu0 %v456
    %941 = vmatpush.bf16.msra.mxu0 %v452
    %942 = vmatmul.bf16.gmra.mxu0 %v162
    %v943 = vpop.f32.mrf.mxu0
    %v944 = vadd.f32 0.0, %v943
    %v945 = vpop.f32.mrf.mxu0
    %v946 = vadd.f32 0.0, %v945
    %947 = vmatmul.bf16.gmra.mxu0 %v164
    %v948 = vpop.f32.mrf.mxu0
    %v949 = vadd.f32 0.0, %v948
    %v950 = vpop.f32.mrf.mxu0
    %v951 = vadd.f32 0.0, %v950
    %952 = vmatmul.bf16.gmra.mxu0 %v166
    %v953 = vpop.f32.mrf.mxu0
    %v954 = vadd.f32 0.0, %v953
    %v955 = vpop.f32.mrf.mxu0
    %v956 = vadd.f32 0.0, %v955
    %957 = vmatmul.bf16.gmra.mxu0 %v168
    %v958 = vpop.f32.mrf.mxu0
    %v959 = vadd.f32 0.0, %v958
    %v960 = vpop.f32.mrf.mxu0
    %v961 = vadd.f32 0.0, %v960
    %962 = vmatmul.bf16.gmra.mxu0 %v170
    %v963 = vpop.f32.mrf.mxu0
    %v964 = vadd.f32 0.0, %v963
    %v965 = vpop.f32.mrf.mxu0
    %v966 = vadd.f32 0.0, %v965
    %967 = vmatmul.bf16.gmra.mxu0 %v172
    %v968 = vpop.f32.mrf.mxu0
    %v969 = vadd.f32 0.0, %v968
    %v970 = vpop.f32.mrf.mxu0
    %v971 = vadd.f32 0.0, %v970
    %972 = vmatmul.bf16.gmra.mxu0 %v174
    %v973 = vpop.f32.mrf.mxu0
    %v974 = vadd.f32 0.0, %v973
    %v975 = vpop.f32.mrf.mxu0
    %v976 = vadd.f32 0.0, %v975
    %977 = vmatmul.bf16.gmra.mxu0 %v176
    %v978 = vpop.f32.mrf.mxu0
    %v979 = vadd.f32 0.0, %v978
    %v980 = vpop.f32.mrf.mxu0
    %v981 = vadd.f32 0.0, %v980
    %982 = vmatmul.bf16.gmra.mxu0 %v178
    %v983 = vpop.f32.mrf.mxu0
    %v984 = vadd.f32 0.0, %v983
    %v985 = vpop.f32.mrf.mxu0
    %v986 = vadd.f32 0.0, %v985
    %987 = vmatmul.bf16.gmra.mxu0 %v180
    %v988 = vpop.f32.mrf.mxu0
    %v989 = vadd.f32 0.0, %v988
    %v990 = vpop.f32.mrf.mxu0
    %v991 = vadd.f32 0.0, %v990
    %992 = vmatmul.bf16.gmra.mxu0 %v182
    %v993 = vpop.f32.mrf.mxu0
    %v994 = vadd.f32 0.0, %v993
    %v995 = vpop.f32.mrf.mxu0
    %v996 = vadd.f32 0.0, %v995
    %997 = vmatmul.bf16.gmra.mxu0 %v184
    %v998 = vpop.f32.mrf.mxu0
    %v999 = vadd.f32 0.0, %v998
    %v1000 = vpop.f32.mrf.mxu0
    %v1001 = vadd.f32 0.0, %v1000
    %1002 = vmatmul.bf16.gmra.mxu0 %v186
    %v1003 = vpop.f32.mrf.mxu0
    %v1004 = vadd.f32 0.0, %v1003
    %v1005 = vpop.f32.mrf.mxu0
    %v1006 = vadd.f32 0.0, %v1005
    %1007 = vmatmul.bf16.gmra.mxu0 %v188
    %v1008 = vpop.f32.mrf.mxu0
    %v1009 = vadd.f32 0.0, %v1008
    %v1010 = vpop.f32.mrf.mxu0
    %v1011 = vadd.f32 0.0, %v1010
    %1012 = vmatmul.bf16.gmra.mxu0 %v190
    %v1013 = vpop.f32.mrf.mxu0
    %v1014 = vadd.f32 0.0, %v1013
    %v1015 = vpop.f32.mrf.mxu0
    %v1016 = vadd.f32 0.0, %v1015
    %1017 = vmatmul.bf16.gmra.mxu0 %v192
    %v1018 = vpop.f32.mrf.mxu0
    %v1019 = vadd.f32 0.0, %v1018
    %v1020 = vpop.f32.mrf.mxu0
    %v1021 = vadd.f32 0.0, %v1020
    %1022 = vdwg.mxu0
    %1023 = vmatpush.bf16.msra.mxu0 %v512
    %1024 = vmatpush.bf16.msra.mxu0 %v508
    %1025 = vmatpush.bf16.msra.mxu0 %v504
    %1026 = vmatpush.bf16.msra.mxu0 %v500
    %1027 = vmatpush.bf16.msra.mxu0 %v496
    %1028 = vmatpush.bf16.msra.mxu0 %v492
    %1029 = vmatpush.bf16.msra.mxu0 %v488
    %1030 = vmatpush.bf16.msra.mxu0 %v484
    %1031 = vmatmul.bf16.gmra.mxu0 %v163
    %v1032 = vpop.f32.mrf.mxu0
    %v1033 = vadd.f32 %v944, %v1032
    %v1034 = vpop.f32.mrf.mxu0
    %v1035 = vadd.f32 %v946, %v1034
    %1036 = vmatmul.bf16.gmra.mxu0 %v165
    %v1037 = vpop.f32.mrf.mxu0
    %v1038 = vadd.f32 %v949, %v1037
    %v1039 = vpop.f32.mrf.mxu0
    %v1040 = vadd.f32 %v951, %v1039
    %1041 = vmatmul.bf16.gmra.mxu0 %v167
    %v1042 = vpop.f32.mrf.mxu0
    %v1043 = vadd.f32 %v954, %v1042
    %v1044 = vpop.f32.mrf.mxu0
    %v1045 = vadd.f32 %v956, %v1044
    %1046 = vmatmul.bf16.gmra.mxu0 %v169
    %v1047 = vpop.f32.mrf.mxu0
    %v1048 = vadd.f32 %v959, %v1047
    %v1049 = vpop.f32.mrf.mxu0
    %v1050 = vadd.f32 %v961, %v1049
    %1051 = vmatmul.bf16.gmra.mxu0 %v171
    %v1052 = vpop.f32.mrf.mxu0
    %v1053 = vadd.f32 %v964, %v1052
    %v1054 = vpop.f32.mrf.mxu0
    %v1055 = vadd.f32 %v966, %v1054
    %1056 = vmatmul.bf16.gmra.mxu0 %v173
    %v1057 = vpop.f32.mrf.mxu0
    %v1058 = vadd.f32 %v969, %v1057
    %v1059 = vpop.f32.mrf.mxu0
    %v1060 = vadd.f32 %v971, %v1059
    %1061 = vmatmul.bf16.gmra.mxu0 %v175
    %v1062 = vpop.f32.mrf.mxu0
    %v1063 = vadd.f32 %v974, %v1062
    %v1064 = vpop.f32.mrf.mxu0
    %v1065 = vadd.f32 %v976, %v1064
    %1066 = vmatmul.bf16.gmra.mxu0 %v177
    %v1067 = vpop.f32.mrf.mxu0
    %v1068 = vadd.f32 %v979, %v1067
    %v1069 = vpop.f32.mrf.mxu0
    %v1070 = vadd.f32 %v981, %v1069
    %1071 = vmatmul.bf16.gmra.mxu0 %v179
    %v1072 = vpop.f32.mrf.mxu0
    %v1073 = vadd.f32 %v984, %v1072
    %v1074 = vpop.f32.mrf.mxu0
    %v1075 = vadd.f32 %v986, %v1074
    %1076 = vmatmul.bf16.gmra.mxu0 %v181
    %v1077 = vpop.f32.mrf.mxu0
    %v1078 = vadd.f32 %v989, %v1077
    %v1079 = vpop.f32.mrf.mxu0
    %v1080 = vadd.f32 %v991, %v1079
    %1081 = vmatmul.bf16.gmra.mxu0 %v183
    %v1082 = vpop.f32.mrf.mxu0
    %v1083 = vadd.f32 %v994, %v1082
    %v1084 = vpop.f32.mrf.mxu0
    %v1085 = vadd.f32 %v996, %v1084
    %1086 = vmatmul.bf16.gmra.mxu0 %v185
    %v1087 = vpop.f32.mrf.mxu0
    %v1088 = vadd.f32 %v999, %v1087
    %v1089 = vpop.f32.mrf.mxu0
    %v1090 = vadd.f32 %v1001, %v1089
    %1091 = vmatmul.bf16.gmra.mxu0 %v187
    %v1092 = vpop.f32.mrf.mxu0
    %v1093 = vadd.f32 %v1004, %v1092
    %v1094 = vpop.f32.mrf.mxu0
    %v1095 = vadd.f32 %v1006, %v1094
    %1096 = vmatmul.bf16.gmra.mxu0 %v189
    %v1097 = vpop.f32.mrf.mxu0
    %v1098 = vadd.f32 %v1009, %v1097
    %v1099 = vpop.f32.mrf.mxu0
    %v1100 = vadd.f32 %v1011, %v1099
    %1101 = vmatmul.bf16.gmra.mxu0 %v191
    %v1102 = vpop.f32.mrf.mxu0
    %v1103 = vadd.f32 %v1014, %v1102
    %v1104 = vpop.f32.mrf.mxu0
    %v1105 = vadd.f32 %v1016, %v1104
    %1106 = vmatmul.bf16.gmra.mxu0 %v193
    %v1107 = vpop.f32.mrf.mxu0
    %v1108 = vadd.f32 %v1019, %v1107
    %v1109 = vpop.f32.mrf.mxu0
    %v1110 = vadd.f32 %v1021, %v1109
    %1111 = vdwg.mxu0
    %1112 = vmatpush.bf16.msra.mxu0 %v481
    %1113 = vmatpush.bf16.msra.mxu0 %v477
    %1114 = vmatpush.bf16.msra.mxu0 %v473
    %1115 = vmatpush.bf16.msra.mxu0 %v469
    %1116 = vmatpush.bf16.msra.mxu0 %v465
    %1117 = vmatpush.bf16.msra.mxu0 %v461
    %1118 = vmatpush.bf16.msra.mxu0 %v457
    %1119 = vmatpush.bf16.msra.mxu0 %v453
    %1120 = vmatmul.bf16.gmra.mxu0 %v162
    %v1121 = vpop.f32.mrf.mxu0
    %v1122 = vadd.f32 0.0, %v1121
    %v1123 = vpop.f32.mrf.mxu0
    %v1124 = vadd.f32 0.0, %v1123
    %1125 = vmatmul.bf16.gmra.mxu0 %v164
    %v1126 = vpop.f32.mrf.mxu0
    %v1127 = vadd.f32 0.0, %v1126
    %v1128 = vpop.f32.mrf.mxu0
    %v1129 = vadd.f32 0.0, %v1128
    %1130 = vmatmul.bf16.gmra.mxu0 %v166
    %v1131 = vpop.f32.mrf.mxu0
    %v1132 = vadd.f32 0.0, %v1131
    %v1133 = vpop.f32.mrf.mxu0
    %v1134 = vadd.f32 0.0, %v1133
    %1135 = vmatmul.bf16.gmra.mxu0 %v168
    %v1136 = vpop.f32.mrf.mxu0
    %v1137 = vadd.f32 0.0, %v1136
    %v1138 = vpop.f32.mrf.mxu0
    %v1139 = vadd.f32 0.0, %v1138
    %1140 = vmatmul.bf16.gmra.mxu0 %v170
    %v1141 = vpop.f32.mrf.mxu0
    %v1142 = vadd.f32 0.0, %v1141
    %v1143 = vpop.f32.mrf.mxu0
    %v1144 = vadd.f32 0.0, %v1143
    %1145 = vmatmul.bf16.gmra.mxu0 %v172
    %v1146 = vpop.f32.mrf.mxu0
    %v1147 = vadd.f32 0.0, %v1146
    %v1148 = vpop.f32.mrf.mxu0
    %v1149 = vadd.f32 0.0, %v1148
    %1150 = vmatmul.bf16.gmra.mxu0 %v174
    %v1151 = vpop.f32.mrf.mxu0
    %v1152 = vadd.f32 0.0, %v1151
    %v1153 = vpop.f32.mrf.mxu0
    %v1154 = vadd.f32 0.0, %v1153
    %1155 = vmatmul.bf16.gmra.mxu0 %v176
    %v1156 = vpop.f32.mrf.mxu0
    %v1157 = vadd.f32 0.0, %v1156
    %v1158 = vpop.f32.mrf.mxu0
    %v1159 = vadd.f32 0.0, %v1158
    %1160 = vmatmul.bf16.gmra.mxu0 %v178
    %v1161 = vpop.f32.mrf.mxu0
    %v1162 = vadd.f32 0.0, %v1161
    %v1163 = vpop.f32.mrf.mxu0
    %v1164 = vadd.f32 0.0, %v1163
    %1165 = vmatmul.bf16.gmra.mxu0 %v180
    %v1166 = vpop.f32.mrf.mxu0
    %v1167 = vadd.f32 0.0, %v1166
    %v1168 = vpop.f32.mrf.mxu0
    %v1169 = vadd.f32 0.0, %v1168
    %1170 = vmatmul.bf16.gmra.mxu0 %v182
    %v1171 = vpop.f32.mrf.mxu0
    %v1172 = vadd.f32 0.0, %v1171
    %v1173 = vpop.f32.mrf.mxu0
    %v1174 = vadd.f32 0.0, %v1173
    %1175 = vmatmul.bf16.gmra.mxu0 %v184
    %v1176 = vpop.f32.mrf.mxu0
    %v1177 = vadd.f32 0.0, %v1176
    %v1178 = vpop.f32.mrf.mxu0
    %v1179 = vadd.f32 0.0, %v1178
    %1180 = vmatmul.bf16.gmra.mxu0 %v186
    %v1181 = vpop.f32.mrf.mxu0
    %v1182 = vadd.f32 0.0, %v1181
    %v1183 = vpop.f32.mrf.mxu0
    %v1184 = vadd.f32 0.0, %v1183
    %1185 = vmatmul.bf16.gmra.mxu0 %v188
    %v1186 = vpop.f32.mrf.mxu0
    %v1187 = vadd.f32 0.0, %v1186
    %v1188 = vpop.f32.mrf.mxu0
    %v1189 = vadd.f32 0.0, %v1188
    %1190 = vmatmul.bf16.gmra.mxu0 %v190
    %v1191 = vpop.f32.mrf.mxu0
    %v1192 = vadd.f32 0.0, %v1191
    %v1193 = vpop.f32.mrf.mxu0
    %v1194 = vadd.f32 0.0, %v1193
    %1195 = vmatmul.bf16.gmra.mxu0 %v192
    %v1196 = vpop.f32.mrf.mxu0
    %v1197 = vadd.f32 0.0, %v1196
    %v1198 = vpop.f32.mrf.mxu0
    %v1199 = vadd.f32 0.0, %v1198
    %1200 = vdwg.mxu0
    %1201 = vmatpush.bf16.msra.mxu0 %v513
    %1202 = vmatpush.bf16.msra.mxu0 %v509
    %1203 = vmatpush.bf16.msra.mxu0 %v505
    %1204 = vmatpush.bf16.msra.mxu0 %v501
    %1205 = vmatpush.bf16.msra.mxu0 %v497
    %1206 = vmatpush.bf16.msra.mxu0 %v493
    %1207 = vmatpush.bf16.msra.mxu0 %v489
    %1208 = vmatpush.bf16.msra.mxu0 %v485
    %1209 = vmatmul.bf16.gmra.mxu0 %v163
    %v1210 = vpop.f32.mrf.mxu0
    %v1211 = vadd.f32 %v1122, %v1210
    %v1212 = vpop.f32.mrf.mxu0
    %v1213 = vadd.f32 %v1124, %v1212
    %1214 = vmatmul.bf16.gmra.mxu0 %v165
    %v1215 = vpop.f32.mrf.mxu0
    %v1216 = vadd.f32 %v1127, %v1215
    %v1217 = vpop.f32.mrf.mxu0
    %v1218 = vadd.f32 %v1129, %v1217
    %1219 = vmatmul.bf16.gmra.mxu0 %v167
    %v1220 = vpop.f32.mrf.mxu0
    %v1221 = vadd.f32 %v1132, %v1220
    %v1222 = vpop.f32.mrf.mxu0
    %v1223 = vadd.f32 %v1134, %v1222
    %1224 = vmatmul.bf16.gmra.mxu0 %v169
    %v1225 = vpop.f32.mrf.mxu0
    %v1226 = vadd.f32 %v1137, %v1225
    %v1227 = vpop.f32.mrf.mxu0
    %v1228 = vadd.f32 %v1139, %v1227
    %1229 = vmatmul.bf16.gmra.mxu0 %v171
    %v1230 = vpop.f32.mrf.mxu0
    %v1231 = vadd.f32 %v1142, %v1230
    %v1232 = vpop.f32.mrf.mxu0
    %v1233 = vadd.f32 %v1144, %v1232
    %1234 = vmatmul.bf16.gmra.mxu0 %v173
    %v1235 = vpop.f32.mrf.mxu0
    %v1236 = vadd.f32 %v1147, %v1235
    %v1237 = vpop.f32.mrf.mxu0
    %v1238 = vadd.f32 %v1149, %v1237
    %1239 = vmatmul.bf16.gmra.mxu0 %v175
    %v1240 = vpop.f32.mrf.mxu0
    %v1241 = vadd.f32 %v1152, %v1240
    %v1242 = vpop.f32.mrf.mxu0
    %v1243 = vadd.f32 %v1154, %v1242
    %1244 = vmatmul.bf16.gmra.mxu0 %v177
    %v1245 = vpop.f32.mrf.mxu0
    %v1246 = vadd.f32 %v1157, %v1245
    %v1247 = vpop.f32.mrf.mxu0
    %v1248 = vadd.f32 %v1159, %v1247
    %1249 = vmatmul.bf16.gmra.mxu0 %v179
    %v1250 = vpop.f32.mrf.mxu0
    %v1251 = vadd.f32 %v1162, %v1250
    %v1252 = vpop.f32.mrf.mxu0
    %v1253 = vadd.f32 %v1164, %v1252
    %1254 = vmatmul.bf16.gmra.mxu0 %v181
    %v1255 = vpop.f32.mrf.mxu0
    %v1256 = vadd.f32 %v1167, %v1255
    %v1257 = vpop.f32.mrf.mxu0
    %v1258 = vadd.f32 %v1169, %v1257
    %1259 = vmatmul.bf16.gmra.mxu0 %v183
    %v1260 = vpop.f32.mrf.mxu0
    %v1261 = vadd.f32 %v1172, %v1260
    %v1262 = vpop.f32.mrf.mxu0
    %v1263 = vadd.f32 %v1174, %v1262
    %1264 = vmatmul.bf16.gmra.mxu0 %v185
    %v1265 = vpop.f32.mrf.mxu0
    %v1266 = vadd.f32 %v1177, %v1265
    %v1267 = vpop.f32.mrf.mxu0
    %v1268 = vadd.f32 %v1179, %v1267
    %1269 = vmatmul.bf16.gmra.mxu0 %v187
    %v1270 = vpop.f32.mrf.mxu0
    %v1271 = vadd.f32 %v1182, %v1270
    %v1272 = vpop.f32.mrf.mxu0
    %v1273 = vadd.f32 %v1184, %v1272
    %1274 = vmatmul.bf16.gmra.mxu0 %v189
    %v1275 = vpop.f32.mrf.mxu0
    %v1276 = vadd.f32 %v1187, %v1275
    %v1277 = vpop.f32.mrf.mxu0
    %v1278 = vadd.f32 %v1189, %v1277
    %1279 = vmatmul.bf16.gmra.mxu0 %v191
    %v1280 = vpop.f32.mrf.mxu0
    %v1281 = vadd.f32 %v1192, %v1280
    %v1282 = vpop.f32.mrf.mxu0
    %v1283 = vadd.f32 %v1194, %v1282
    %1284 = vmatmul.bf16.gmra.mxu0 %v193
    %v1285 = vpop.f32.mrf.mxu0
    %v1286 = vadd.f32 %v1197, %v1285
    %v1287 = vpop.f32.mrf.mxu0
    %v1288 = vadd.f32 %v1199, %v1287
    %1289 = vdwg.mxu0
    %v1290 = vadd.f32 %v677, %v679
    %v1291 = vadd.f32 %v1290, %v682
    %v1292 = vadd.f32 %v1291, %v684
    %v1293 = vadd.f32 %v1292, %v687
    %v1294 = vadd.f32 %v1293, %v689
    %v1295 = vadd.f32 %v1294, %v692
    %v1296 = vadd.f32 %v1295, %v694
    %v1297 = vadd.f32 %v1296, %v697
    %v1298 = vadd.f32 %v1297, %v699
    %v1299 = vadd.f32 %v1298, %v702
    %v1300 = vadd.f32 %v1299, %v704
    %v1301 = vadd.f32 %v1300, %v707
    %v1302 = vadd.f32 %v1301, %v709
    %v1303 = vadd.f32 %v1302, %v712
    %v1304 = vadd.f32 %v1303, %v714
    %v1305 = vadd.f32 %v1304, %v717
    %v1306 = vadd.f32 %v1305, %v719
    %v1307 = vadd.f32 %v1306, %v722
    %v1308 = vadd.f32 %v1307, %v724
    %v1309 = vadd.f32 %v1308, %v727
    %v1310 = vadd.f32 %v1309, %v729
    %v1311 = vadd.f32 %v1310, %v732
    %v1312 = vadd.f32 %v1311, %v734
    %v1313 = vadd.f32 %v1312, %v737
    %v1314 = vadd.f32 %v1313, %v739
    %v1315 = vadd.f32 %v1314, %v742
    %v1316 = vadd.f32 %v1315, %v744
    %v1317 = vadd.f32 %v1316, %v747
    %v1318 = vadd.f32 %v1317, %v749
    %v1319 = vadd.f32 %v1318, %v752
    %v1320 = vadd.f32 %v1319, %v754
    %v1321 = vrot.slane %v1320, 4
    %v1322 = vadd.f32 %v1320, %v1321
    %v1323 = vrot.slane %v1322, 2
    %v1324 = vadd.f32 %v1322, %v1323
    %v1325 = vrot.slane %v1324, 1
    %v1326 = vadd.f32 %v1324, %v1325
    %v1327 = vadd.f32 %v855, %v857
    %v1328 = vadd.f32 %v1327, %v860
    %v1329 = vadd.f32 %v1328, %v862
    %v1330 = vadd.f32 %v1329, %v865
    %v1331 = vadd.f32 %v1330, %v867
    %v1332 = vadd.f32 %v1331, %v870
    %v1333 = vadd.f32 %v1332, %v872
    %v1334 = vadd.f32 %v1333, %v875
    %v1335 = vadd.f32 %v1334, %v877
    %v1336 = vadd.f32 %v1335, %v880
    %v1337 = vadd.f32 %v1336, %v882
    %v1338 = vadd.f32 %v1337, %v885
    %v1339 = vadd.f32 %v1338, %v887
    %v1340 = vadd.f32 %v1339, %v890
    %v1341 = vadd.f32 %v1340, %v892
    %v1342 = vadd.f32 %v1341, %v895
    %v1343 = vadd.f32 %v1342, %v897
    %v1344 = vadd.f32 %v1343, %v900
    %v1345 = vadd.f32 %v1344, %v902
    %v1346 = vadd.f32 %v1345, %v905
    %v1347 = vadd.f32 %v1346, %v907
    %v1348 = vadd.f32 %v1347, %v910
    %v1349 = vadd.f32 %v1348, %v912
    %v1350 = vadd.f32 %v1349, %v915
    %v1351 = vadd.f32 %v1350, %v917
    %v1352 = vadd.f32 %v1351, %v920
    %v1353 = vadd.f32 %v1352, %v922
    %v1354 = vadd.f32 %v1353, %v925
    %v1355 = vadd.f32 %v1354, %v927
    %v1356 = vadd.f32 %v1355, %v930
    %v1357 = vadd.f32 %v1356, %v932
    %v1358 = vrot.slane %v1357, 4
    %v1359 = vadd.f32 %v1357, %v1358
    %v1360 = vrot.slane %v1359, 2
    %v1361 = vadd.f32 %v1359, %v1360
    %v1362 = vrot.slane %v1361, 1
    %v1363 = vadd.f32 %v1361, %v1362
    %v1364 = vadd.f32 %v1033, %v1035
    %v1365 = vadd.f32 %v1364, %v1038
    %v1366 = vadd.f32 %v1365, %v1040
    %v1367 = vadd.f32 %v1366, %v1043
    %v1368 = vadd.f32 %v1367, %v1045
    %v1369 = vadd.f32 %v1368, %v1048
    %v1370 = vadd.f32 %v1369, %v1050
    %v1371 = vadd.f32 %v1370, %v1053
    %v1372 = vadd.f32 %v1371, %v1055
    %v1373 = vadd.f32 %v1372, %v1058
    %v1374 = vadd.f32 %v1373, %v1060
    %v1375 = vadd.f32 %v1374, %v1063
    %v1376 = vadd.f32 %v1375, %v1065
    %v1377 = vadd.f32 %v1376, %v1068
    %v1378 = vadd.f32 %v1377, %v1070
    %v1379 = vadd.f32 %v1378, %v1073
    %v1380 = vadd.f32 %v1379, %v1075
    %v1381 = vadd.f32 %v1380, %v1078
    %v1382 = vadd.f32 %v1381, %v1080
    %v1383 = vadd.f32 %v1382, %v1083
    %v1384 = vadd.f32 %v1383, %v1085
    %v1385 = vadd.f32 %v1384, %v1088
    %v1386 = vadd.f32 %v1385, %v1090
    %v1387 = vadd.f32 %v1386, %v1093
    %v1388 = vadd.f32 %v1387, %v1095
    %v1389 = vadd.f32 %v1388, %v1098
    %v1390 = vadd.f32 %v1389, %v1100
    %v1391 = vadd.f32 %v1390, %v1103
    %v1392 = vadd.f32 %v1391, %v1105
    %v1393 = vadd.f32 %v1392, %v1108
    %v1394 = vadd.f32 %v1393, %v1110
    %v1395 = vrot.slane %v1394, 4
    %v1396 = vadd.f32 %v1394, %v1395
    %v1397 = vrot.slane %v1396, 2
    %v1398 = vadd.f32 %v1396, %v1397
    %v1399 = vrot.slane %v1398, 1
    %v1400 = vadd.f32 %v1398, %v1399
    %v1401 = vadd.f32 %v1211, %v1213
    %v1402 = vadd.f32 %v1401, %v1216
    %v1403 = vadd.f32 %v1402, %v1218
    %v1404 = vadd.f32 %v1403, %v1221
    %v1405 = vadd.f32 %v1404, %v1223
    %v1406 = vadd.f32 %v1405, %v1226
    %v1407 = vadd.f32 %v1406, %v1228
    %v1408 = vadd.f32 %v1407, %v1231
    %v1409 = vadd.f32 %v1408, %v1233
    %v1410 = vadd.f32 %v1409, %v1236
    %v1411 = vadd.f32 %v1410, %v1238
    %v1412 = vadd.f32 %v1411, %v1241
    %v1413 = vadd.f32 %v1412, %v1243
    %v1414 = vadd.f32 %v1413, %v1246
    %v1415 = vadd.f32 %v1414, %v1248
    %v1416 = vadd.f32 %v1415, %v1251
    %v1417 = vadd.f32 %v1416, %v1253
    %v1418 = vadd.f32 %v1417, %v1256
    %v1419 = vadd.f32 %v1418, %v1258
    %v1420 = vadd.f32 %v1419, %v1261
    %v1421 = vadd.f32 %v1420, %v1263
    %v1422 = vadd.f32 %v1421, %v1266
    %v1423 = vadd.f32 %v1422, %v1268
    %v1424 = vadd.f32 %v1423, %v1271
    %v1425 = vadd.f32 %v1424, %v1273
    %v1426 = vadd.f32 %v1425, %v1276
    %v1427 = vadd.f32 %v1426, %v1278
    %v1428 = vadd.f32 %v1427, %v1281
    %v1429 = vadd.f32 %v1428, %v1283
    %v1430 = vadd.f32 %v1429, %v1286
    %v1431 = vadd.f32 %v1430, %v1288
    %v1432 = vrot.slane %v1431, 4
    %v1433 = vadd.f32 %v1431, %v1432
    %v1434 = vrot.slane %v1433, 2
    %v1435 = vadd.f32 %v1433, %v1434
    %v1436 = vrot.slane %v1435, 1
    %v1437 = vadd.f32 %v1435, %v1436
    %v1438 = vrcp.pop 256.0
    %v1439 = vmul.f32 256.0, %v1438
    %v1440 = vsub.f32 1.0, %v1439
    %v1441 = vmul.f32 %v1438, %v1440
    %v1442 = vadd.f32 %v1438, %v1441
    %vm1443 = vweird.f32 %v1438
    %v1444 = vsel %vm1443, %v1438, %v1442
    %v1445 = vmul.f32 %v1326, %v1444
    %v1446 = vmul.f32 %v1363, %v1444
    %v1447 = vmul.f32 %v1400, %v1444
    %v1448 = vmul.f32 %v1437, %v1444
    %v1449 = vsub.f32 %v677, %v1445
    %v1450 = vsub.f32 %v855, %v1446
    %v1451 = vsub.f32 %v1033, %v1447
    %v1452 = vsub.f32 %v1211, %v1448
    %v1453 = vsub.f32 %v679, %v1445
    %v1454 = vsub.f32 %v857, %v1446
    %v1455 = vsub.f32 %v1035, %v1447
    %v1456 = vsub.f32 %v1213, %v1448
    %v1457 = vsub.f32 %v682, %v1445
    %v1458 = vsub.f32 %v860, %v1446
    %v1459 = vsub.f32 %v1038, %v1447
    %v1460 = vsub.f32 %v1216, %v1448
    %v1461 = vsub.f32 %v684, %v1445
    %v1462 = vsub.f32 %v862, %v1446
    %v1463 = vsub.f32 %v1040, %v1447
    %v1464 = vsub.f32 %v1218, %v1448
    %v1465 = vsub.f32 %v687, %v1445
    %v1466 = vsub.f32 %v865, %v1446
    %v1467 = vsub.f32 %v1043, %v1447
    %v1468 = vsub.f32 %v1221, %v1448
    %v1469 = vsub.f32 %v689, %v1445
    %v1470 = vsub.f32 %v867, %v1446
    %v1471 = vsub.f32 %v1045, %v1447
    %v1472 = vsub.f32 %v1223, %v1448
    %v1473 = vsub.f32 %v692, %v1445
    %v1474 = vsub.f32 %v870, %v1446
    %v1475 = vsub.f32 %v1048, %v1447
    %v1476 = vsub.f32 %v1226, %v1448
    %v1477 = vsub.f32 %v694, %v1445
    %v1478 = vsub.f32 %v872, %v1446
    %v1479 = vsub.f32 %v1050, %v1447
    %v1480 = vsub.f32 %v1228, %v1448
    %v1481 = vsub.f32 %v697, %v1445
    %v1482 = vsub.f32 %v875, %v1446
    %v1483 = vsub.f32 %v1053, %v1447
    %v1484 = vsub.f32 %v1231, %v1448
    %v1485 = vsub.f32 %v699, %v1445
    %v1486 = vsub.f32 %v877, %v1446
    %v1487 = vsub.f32 %v1055, %v1447
    %v1488 = vsub.f32 %v1233, %v1448
    %v1489 = vsub.f32 %v702, %v1445
    %v1490 = vsub.f32 %v880, %v1446
    %v1491 = vsub.f32 %v1058, %v1447
    %v1492 = vsub.f32 %v1236, %v1448
    %v1493 = vsub.f32 %v704, %v1445
    %v1494 = vsub.f32 %v882, %v1446
    %v1495 = vsub.f32 %v1060, %v1447
    %v1496 = vsub.f32 %v1238, %v1448
    %v1497 = vsub.f32 %v707, %v1445
    %v1498 = vsub.f32 %v885, %v1446
    %v1499 = vsub.f32 %v1063, %v1447
    %v1500 = vsub.f32 %v1241, %v1448
    %v1501 = vsub.f32 %v709, %v1445
    %v1502 = vsub.f32 %v887, %v1446
    %v1503 = vsub.f32 %v1065, %v1447
    %v1504 = vsub.f32 %v1243, %v1448
    %v1505 = vsub.f32 %v712, %v1445
    %v1506 = vsub.f32 %v890, %v1446
    %v1507 = vsub.f32 %v1068, %v1447
    %v1508 = vsub.f32 %v1246, %v1448
    %v1509 = vsub.f32 %v714, %v1445
    %v1510 = vsub.f32 %v892, %v1446
    %v1511 = vsub.f32 %v1070, %v1447
    %v1512 = vsub.f32 %v1248, %v1448
    %v1513 = vsub.f32 %v717, %v1445
    %v1514 = vsub.f32 %v895, %v1446
    %v1515 = vsub.f32 %v1073, %v1447
    %v1516 = vsub.f32 %v1251, %v1448
    %v1517 = vsub.f32 %v719, %v1445
    %v1518 = vsub.f32 %v897, %v1446
    %v1519 = vsub.f32 %v1075, %v1447
    %v1520 = vsub.f32 %v1253, %v1448
    %v1521 = vsub.f32 %v722, %v1445
    %v1522 = vsub.f32 %v900, %v1446
    %v1523 = vsub.f32 %v1078, %v1447
    %v1524 = vsub.f32 %v1256, %v1448
    %v1525 = vsub.f32 %v724, %v1445
    %v1526 = vsub.f32 %v902, %v1446
    %v1527 = vsub.f32 %v1080, %v1447
    %v1528 = vsub.f32 %v1258, %v1448
    %v1529 = vsub.f32 %v727, %v1445
    %v1530 = vsub.f32 %v905, %v1446
    %v1531 = vsub.f32 %v1083, %v1447
    %v1532 = vsub.f32 %v1261, %v1448
    %v1533 = vsub.f32 %v729, %v1445
    %v1534 = vsub.f32 %v907, %v1446
    %v1535 = vsub.f32 %v1085, %v1447
    %v1536 = vsub.f32 %v1263, %v1448
    %v1537 = vsub.f32 %v732, %v1445
    %v1538 = vsub.f32 %v910, %v1446
    %v1539 = vsub.f32 %v1088, %v1447
    %v1540 = vsub.f32 %v1266, %v1448
    %v1541 = vsub.f32 %v734, %v1445
    %v1542 = vsub.f32 %v912, %v1446
    %v1543 = vsub.f32 %v1090, %v1447
    %v1544 = vsub.f32 %v1268, %v1448
    %v1545 = vsub.f32 %v737, %v1445
    %v1546 = vsub.f32 %v915, %v1446
    %v1547 = vsub.f32 %v1093, %v1447
    %v1548 = vsub.f32 %v1271, %v1448
    %v1549 = vsub.f32 %v739, %v1445
    %v1550 = vsub.f32 %v917, %v1446
    %v1551 = vsub.f32 %v1095, %v1447
    %v1552 = vsub.f32 %v1273, %v1448
    %v1553 = vsub.f32 %v742, %v1445
    %v1554 = vsub.f32 %v920, %v1446
    %v1555 = vsub.f32 %v1098, %v1447
    %v1556 = vsub.f32 %v1276, %v1448
    %v1557 = vsub.f32 %v744, %v1445
    %v1558 = vsub.f32 %v922, %v1446
    %v1559 = vsub.f32 %v1100, %v1447
    %v1560 = vsub.f32 %v1278, %v1448
    %v1561 = vsub.f32 %v747, %v1445
    %v1562 = vsub.f32 %v925, %v1446
    %v1563 = vsub.f32 %v1103, %v1447
    %v1564 = vsub.f32 %v1281, %v1448
    %v1565 = vsub.f32 %v749, %v1445
    %v1566 = vsub.f32 %v927, %v1446
    %v1567 = vsub.f32 %v1105, %v1447
    %v1568 = vsub.f32 %v1283, %v1448
    %v1569 = vsub.f32 %v752, %v1445
    %v1570 = vsub.f32 %v930, %v1446
    %v1571 = vsub.f32 %v1108, %v1447
    %v1572 = vsub.f32 %v1286, %v1448
    %v1573 = vsub.f32 %v754, %v1445
    %v1574 = vsub.f32 %v932, %v1446
    %v1575 = vsub.f32 %v1110, %v1447
    %v1576 = vsub.f32 %v1288, %v1448
    %v1577 = vmul.f32 %v1449, %v1449
    %v1578 = vmul.f32 %v1450, %v1450
    %v1579 = vmul.f32 %v1451, %v1451
    %v1580 = vmul.f32 %v1452, %v1452
    %v1581 = vmul.f32 %v1453, %v1453
    %v1582 = vmul.f32 %v1454, %v1454
    %v1583 = vmul.f32 %v1455, %v1455
    %v1584 = vmul.f32 %v1456, %v1456
    %v1585 = vmul.f32 %v1457, %v1457
    %v1586 = vmul.f32 %v1458, %v1458
    %v1587 = vmul.f32 %v1459, %v1459
    %v1588 = vmul.f32 %v1460, %v1460
    %v1589 = vmul.f32 %v1461, %v1461
    %v1590 = vmul.f32 %v1462, %v1462
    %v1591 = vmul.f32 %v1463, %v1463
    %v1592 = vmul.f32 %v1464, %v1464
    %v1593 = vmul.f32 %v1465, %v1465
    %v1594 = vmul.f32 %v1466, %v1466
    %v1595 = vmul.f32 %v1467, %v1467
    %v1596 = vmul.f32 %v1468, %v1468
    %v1597 = vmul.f32 %v1469, %v1469
    %v1598 = vmul.f32 %v1470, %v1470
    %v1599 = vmul.f32 %v1471, %v1471
    %v1600 = vmul.f32 %v1472, %v1472
    %v1601 = vmul.f32 %v1473, %v1473
    %v1602 = vmul.f32 %v1474, %v1474
    %v1603 = vmul.f32 %v1475, %v1475
    %v1604 = vmul.f32 %v1476, %v1476
    %v1605 = vmul.f32 %v1477, %v1477
    %v1606 = vmul.f32 %v1478, %v1478
    %v1607 = vmul.f32 %v1479, %v1479
    %v1608 = vmul.f32 %v1480, %v1480
    %v1609 = vmul.f32 %v1481, %v1481
    %v1610 = vmul.f32 %v1482, %v1482
    %v1611 = vmul.f32 %v1483, %v1483
    %v1612 = vmul.f32 %v1484, %v1484
    %v1613 = vmul.f32 %v1485, %v1485
    %v1614 = vmul.f32 %v1486, %v1486
    %v1615 = vmul.f32 %v1487, %v1487
    %v1616 = vmul.f32 %v1488, %v1488
    %v1617 = vmul.f32 %v1489, %v1489
    %v1618 = vmul.f32 %v1490, %v1490
    %v1619 = vmul.f32 %v1491, %v1491
    %v1620 = vmul.f32 %v1492, %v1492
    %v1621 = vmul.f32 %v1493, %v1493
    %v1622 = vmul.f32 %v1494, %v1494
    %v1623 = vmul.f32 %v1495, %v1495
    %v1624 = vmul.f32 %v1496, %v1496
    %v1625 = vmul.f32 %v1497, %v1497
    %v1626 = vmul.f32 %v1498, %v1498
    %v1627 = vmul.f32 %v1499, %v1499
    %v1628 = vmul.f32 %v1500, %v1500
    %v1629 = vmul.f32 %v1501, %v1501
    %v1630 = vmul.f32 %v1502, %v1502
    %v1631 = vmul.f32 %v1503, %v1503
    %v1632 = vmul.f32 %v1504, %v1504
    %v1633 = vmul.f32 %v1505, %v1505
    %v1634 = vmul.f32 %v1506, %v1506
    %v1635 = vmul.f32 %v1507, %v1507
    %v1636 = vmul.f32 %v1508, %v1508
    %v1637 = vmul.f32 %v1509, %v1509
    %v1638 = vmul.f32 %v1510, %v1510
    %v1639 = vmul.f32 %v1511, %v1511
    %v1640 = vmul.f32 %v1512, %v1512
    %v1641 = vmul.f32 %v1513, %v1513
    %v1642 = vmul.f32 %v1514, %v1514
    %v1643 = vmul.f32 %v1515, %v1515
    %v1644 = vmul.f32 %v1516, %v1516
    %v1645 = vmul.f32 %v1517, %v1517
    %v1646 = vmul.f32 %v1518, %v1518
    %v1647 = vmul.f32 %v1519, %v1519
    %v1648 = vmul.f32 %v1520, %v1520
    %v1649 = vmul.f32 %v1521, %v1521
    %v1650 = vmul.f32 %v1522, %v1522
    %v1651 = vmul.f32 %v1523, %v1523
    %v1652 = vmul.f32 %v1524, %v1524
    %v1653 = vmul.f32 %v1525, %v1525
    %v1654 = vmul.f32 %v1526, %v1526
    %v1655 = vmul.f32 %v1527, %v1527
    %v1656 = vmul.f32 %v1528, %v1528
    %v1657 = vmul.f32 %v1529, %v1529
    %v1658 = vmul.f32 %v1530, %v1530
    %v1659 = vmul.f32 %v1531, %v1531
    %v1660 = vmul.f32 %v1532, %v1532
    %v1661 = vmul.f32 %v1533, %v1533
    %v1662 = vmul.f32 %v1534, %v1534
    %v1663 = vmul.f32 %v1535, %v1535
    %v1664 = vmul.f32 %v1536, %v1536
    %v1665 = vmul.f32 %v1537, %v1537
    %v1666 = vmul.f32 %v1538, %v1538
    %v1667 = vmul.f32 %v1539, %v1539
    %v1668 = vmul.f32 %v1540, %v1540
    %v1669 = vmul.f32 %v1541, %v1541
    %v1670 = vmul.f32 %v1542, %v1542
    %v1671 = vmul.f32 %v1543, %v1543
    %v1672 = vmul.f32 %v1544, %v1544
    %v1673 = vmul.f32 %v1545, %v1545
    %v1674 = vmul.f32 %v1546, %v1546
    %v1675 = vmul.f32 %v1547, %v1547
    %v1676 = vmul.f32 %v1548, %v1548
    %v1677 = vmul.f32 %v1549, %v1549
    %v1678 = vmul.f32 %v1550, %v1550
    %v1679 = vmul.f32 %v1551, %v1551
    %v1680 = vmul.f32 %v1552, %v1552
    %v1681 = vmul.f32 %v1553, %v1553
    %v1682 = vmul.f32 %v1554, %v1554
    %v1683 = vmul.f32 %v1555, %v1555
    %v1684 = vmul.f32 %v1556, %v1556
    %v1685 = vmul.f32 %v1557, %v1557
    %v1686 = vmul.f32 %v1558, %v1558
    %v1687 = vmul.f32 %v1559, %v1559
    %v1688 = vmul.f32 %v1560, %v1560
    %v1689 = vmul.f32 %v1561, %v1561
    %v1690 = vmul.f32 %v1562, %v1562
    %v1691 = vmul.f32 %v1563, %v1563
    %v1692 = vmul.f32 %v1564, %v1564
    %v1693 = vmul.f32 %v1565, %v1565
    %v1694 = vmul.f32 %v1566, %v1566
    %v1695 = vmul.f32 %v1567, %v1567
    %v1696 = vmul.f32 %v1568, %v1568
    %v1697 = vmul.f32 %v1569, %v1569
    %v1698 = vmul.f32 %v1570, %v1570
    %v1699 = vmul.f32 %v1571, %v1571
    %v1700 = vmul.f32 %v1572, %v1572
    %v1701 = vmul.f32 %v1573, %v1573
    %v1702 = vmul.f32 %v1574, %v1574
    %v1703 = vmul.f32 %v1575, %v1575
    %v1704 = vmul.f32 %v1576, %v1576
    %v1705 = vadd.f32 %v1577, %v1581
    %v1706 = vadd.f32 %v1705, %v1585
    %v1707 = vadd.f32 %v1706, %v1589
    %v1708 = vadd.f32 %v1707, %v1593
    %v1709 = vadd.f32 %v1708, %v1597
    %v1710 = vadd.f32 %v1709, %v1601
    %v1711 = vadd.f32 %v1710, %v1605
    %v1712 = vadd.f32 %v1711, %v1609
    %v1713 = vadd.f32 %v1712, %v1613
    %v1714 = vadd.f32 %v1713, %v1617
    %v1715 = vadd.f32 %v1714, %v1621
    %v1716 = vadd.f32 %v1715, %v1625
    %v1717 = vadd.f32 %v1716, %v1629
    %v1718 = vadd.f32 %v1717, %v1633
    %v1719 = vadd.f32 %v1718, %v1637
    %v1720 = vadd.f32 %v1719, %v1641
    %v1721 = vadd.f32 %v1720, %v1645
    %v1722 = vadd.f32 %v1721, %v1649
    %v1723 = vadd.f32 %v1722, %v1653
    %v1724 = vadd.f32 %v1723, %v1657
    %v1725 = vadd.f32 %v1724, %v1661
    %v1726 = vadd.f32 %v1725, %v1665
    %v1727 = vadd.f32 %v1726, %v1669
    %v1728 = vadd.f32 %v1727, %v1673
    %v1729 = vadd.f32 %v1728, %v1677
    %v1730 = vadd.f32 %v1729, %v1681
    %v1731 = vadd.f32 %v1730, %v1685
    %v1732 = vadd.f32 %v1731, %v1689
    %v1733 = vadd.f32 %v1732, %v1693
    %v1734 = vadd.f32 %v1733, %v1697
    %v1735 = vadd.f32 %v1734, %v1701
    %v1736 = vrot.slane %v1735, 4
    %v1737 = vadd.f32 %v1735, %v1736
    %v1738 = vrot.slane %v1737, 2
    %v1739 = vadd.f32 %v1737, %v1738
    %v1740 = vrot.slane %v1739, 1
    %v1741 = vadd.f32 %v1739, %v1740
    %v1742 = vadd.f32 %v1578, %v1582
    %v1743 = vadd.f32 %v1742, %v1586
    %v1744 = vadd.f32 %v1743, %v1590
    %v1745 = vadd.f32 %v1744, %v1594
    %v1746 = vadd.f32 %v1745, %v1598
    %v1747 = vadd.f32 %v1746, %v1602
    %v1748 = vadd.f32 %v1747, %v1606
    %v1749 = vadd.f32 %v1748, %v1610
    %v1750 = vadd.f32 %v1749, %v1614
    %v1751 = vadd.f32 %v1750, %v1618
    %v1752 = vadd.f32 %v1751, %v1622
    %v1753 = vadd.f32 %v1752, %v1626
    %v1754 = vadd.f32 %v1753, %v1630
    %v1755 = vadd.f32 %v1754, %v1634
    %v1756 = vadd.f32 %v1755, %v1638
    %v1757 = vadd.f32 %v1756, %v1642
    %v1758 = vadd.f32 %v1757, %v1646
    %v1759 = vadd.f32 %v1758, %v1650
    %v1760 = vadd.f32 %v1759, %v1654
    %v1761 = vadd.f32 %v1760, %v1658
    %v1762 = vadd.f32 %v1761, %v1662
    %v1763 = vadd.f32 %v1762, %v1666
    %v1764 = vadd.f32 %v1763, %v1670
    %v1765 = vadd.f32 %v1764, %v1674
    %v1766 = vadd.f32 %v1765, %v1678
    %v1767 = vadd.f32 %v1766, %v1682
    %v1768 = vadd.f32 %v1767, %v1686
    %v1769 = vadd.f32 %v1768, %v1690
    %v1770 = vadd.f32 %v1769, %v1694
    %v1771 = vadd.f32 %v1770, %v1698
    %v1772 = vadd.f32 %v1771, %v1702
    %v1773 = vrot.slane %v1772, 4
    %v1774 = vadd.f32 %v1772, %v1773
    %v1775 = vrot.slane %v1774, 2
    %v1776 = vadd.f32 %v1774, %v1775
    %v1777 = vrot.slane %v1776, 1
    %v1778 = vadd.f32 %v1776, %v1777
    %v1779 = vadd.f32 %v1579, %v1583
    %v1780 = vadd.f32 %v1779, %v1587
    %v1781 = vadd.f32 %v1780, %v1591
    %v1782 = vadd.f32 %v1781, %v1595
    %v1783 = vadd.f32 %v1782, %v1599
    %v1784 = vadd.f32 %v1783, %v1603
    %v1785 = vadd.f32 %v1784, %v1607
    %v1786 = vadd.f32 %v1785, %v1611
    %v1787 = vadd.f32 %v1786, %v1615
    %v1788 = vadd.f32 %v1787, %v1619
    %v1789 = vadd.f32 %v1788, %v1623
    %v1790 = vadd.f32 %v1789, %v1627
    %v1791 = vadd.f32 %v1790, %v1631
    %v1792 = vadd.f32 %v1791, %v1635
    %v1793 = vadd.f32 %v1792, %v1639
    %v1794 = vadd.f32 %v1793, %v1643
    %v1795 = vadd.f32 %v1794, %v1647
    %v1796 = vadd.f32 %v1795, %v1651
    %v1797 = vadd.f32 %v1796, %v1655
    %v1798 = vadd.f32 %v1797, %v1659
    %v1799 = vadd.f32 %v1798, %v1663
    %v1800 = vadd.f32 %v1799, %v1667
    %v1801 = vadd.f32 %v1800, %v1671
    %v1802 = vadd.f32 %v1801, %v1675
    %v1803 = vadd.f32 %v1802, %v1679
    %v1804 = vadd.f32 %v1803, %v1683
    %v1805 = vadd.f32 %v1804, %v1687
    %v1806 = vadd.f32 %v1805, %v1691
    %v1807 = vadd.f32 %v1806, %v1695
    %v1808 = vadd.f32 %v1807, %v1699
    %v1809 = vadd.f32 %v1808, %v1703
    %v1810 = vrot.slane %v1809, 4
    %v1811 = vadd.f32 %v1809, %v1810
    %v1812 = vrot.slane %v1811, 2
    %v1813 = vadd.f32 %v1811, %v1812
    %v1814 = vrot.slane %v1813, 1
    %v1815 = vadd.f32 %v1813, %v1814
    %v1816 = vadd.f32 %v1580, %v1584
    %v1817 = vadd.f32 %v1816, %v1588
    %v1818 = vadd.f32 %v1817, %v1592
    %v1819 = vadd.f32 %v1818, %v1596
    %v1820 = vadd.f32 %v1819, %v1600
    %v1821 = vadd.f32 %v1820, %v1604
    %v1822 = vadd.f32 %v1821, %v1608
    %v1823 = vadd.f32 %v1822, %v1612
    %v1824 = vadd.f32 %v1823, %v1616
    %v1825 = vadd.f32 %v1824, %v1620
    %v1826 = vadd.f32 %v1825, %v1624
    %v1827 = vadd.f32 %v1826, %v1628
    %v1828 = vadd.f32 %v1827, %v1632
    %v1829 = vadd.f32 %v1828, %v1636
    %v1830 = vadd.f32 %v1829, %v1640
    %v1831 = vadd.f32 %v1830, %v1644
    %v1832 = vadd.f32 %v1831, %v1648
    %v1833 = vadd.f32 %v1832, %v1652
    %v1834 = vadd.f32 %v1833, %v1656
    %v1835 = vadd.f32 %v1834, %v1660
    %v1836 = vadd.f32 %v1835, %v1664
    %v1837 = vadd.f32 %v1836, %v1668
    %v1838 = vadd.f32 %v1837, %v1672
    %v1839 = vadd.f32 %v1838, %v1676
    %v1840 = vadd.f32 %v1839, %v1680
    %v1841 = vadd.f32 %v1840, %v1684
    %v1842 = vadd.f32 %v1841, %v1688
    %v1843 = vadd.f32 %v1842, %v1692
    %v1844 = vadd.f32 %v1843, %v1696
    %v1845 = vadd.f32 %v1844, %v1700
    %v1846 = vadd.f32 %v1845, %v1704
    %v1847 = vrot.slane %v1846, 4
    %v1848 = vadd.f32 %v1846, %v1847
    %v1849 = vrot.slane %v1848, 2
    %v1850 = vadd.f32 %v1848, %v1849
    %v1851 = vrot.slane %v1850, 1
    %v1852 = vadd.f32 %v1850, %v1851
    %v1853 = vmul.f32 %v1741, %v1444
    %v1854 = vmul.f32 %v1778, %v1444
    %v1855 = vmul.f32 %v1815, %v1444
    %v1856 = vmul.f32 %v1852, %v1444
    %v1857 = vld [vmem:[#allocation7] sm:$0xf]
    %v1858 = vadd.f32 %v1853, 1e-05
    %v1859 = vadd.f32 %v1854, 1e-05
    %v1860 = vadd.f32 %v1855, 1e-05
    %v1861 = vadd.f32 %v1856, 1e-05
    %v1862 = vrsqrt.pop %v1858
    %v1863 = vmul.f32 %v1862, %v1858
    %v1864 = vmul.f32 %v1863, %v1862
    %v1865 = vmul.f32 0.5, %v1864
    %v1866 = vsub.f32 1.5, %v1865
    %v1867 = vmul.f32 %v1862, %v1866
    %vm1868 = vweird.f32 %v1858
    %vm1869 = vweird.f32 %v1862
    %vm1870 = vmor %vm1868, %vm1869
    %v1871 = vsel %vm1870, %v1862, %v1867
    %v1872 = vrsqrt.pop %v1859
    %v1873 = vmul.f32 %v1872, %v1859
    %v1874 = vmul.f32 %v1873, %v1872
    %v1875 = vmul.f32 0.5, %v1874
    %v1876 = vsub.f32 1.5, %v1875
    %v1877 = vmul.f32 %v1872, %v1876
    %vm1878 = vweird.f32 %v1859
    %vm1879 = vweird.f32 %v1872
    %vm1880 = vmor %vm1878, %vm1879
    %v1881 = vsel %vm1880, %v1872, %v1877
    %v1882 = vrsqrt.pop %v1860
    %v1883 = vmul.f32 %v1882, %v1860
    %v1884 = vmul.f32 %v1883, %v1882
    %v1885 = vmul.f32 0.5, %v1884
    %v1886 = vsub.f32 1.5, %v1885
    %v1887 = vmul.f32 %v1882, %v1886
    %vm1888 = vweird.f32 %v1860
    %vm1889 = vweird.f32 %v1882
    %vm1890 = vmor %vm1888, %vm1889
    %v1891 = vsel %vm1890, %v1882, %v1887
    %v1892 = vrsqrt.pop %v1861
    %v1893 = vmul.f32 %v1892, %v1861
    %v1894 = vmul.f32 %v1893, %v1892
    %v1895 = vmul.f32 0.5, %v1894
    %v1896 = vsub.f32 1.5, %v1895
    %v1897 = vmul.f32 %v1892, %v1896
    %vm1898 = vweird.f32 %v1861
    %vm1899 = vweird.f32 %v1892
    %vm1900 = vmor %vm1898, %vm1899
    %v1901 = vsel %vm1900, %v1892, %v1897
    %v1906 = vrot.slane %v1881, 7
    %v1907 = vrot.slane %v1891, 6
    %v1908 = vrot.slane %v1901, 5
    %vm1909 = vcmask 1040384
    %v1910 = vsel %vm1909, %v1871, %v1906
    %vm1911 = vcmask 1042434
    %v1912 = vsel %vm1911, %v1907, %v1908
    %vm1913 = vcmask 1041408
    %v1914 = vsel %vm1913, %v1910, %v1912
    %v1916 = vmul.f32 %v1857, %v1914
    %v1917 = vld [vmem:[#allocation8] sm:$0xf]
    %v1919 = vperm.slane %v1916, 0
    %v1920 = vperm.slane %v1916, 1
    %v1921 = vperm.slane %v1916, 2
    %v1922 = vperm.slane %v1916, 3
    %v1927 = vmul.f32 %v1445, %v1919
    %v1928 = vmul.f32 %v1446, %v1920
    %v1929 = vmul.f32 %v1447, %v1921
    %v1930 = vmul.f32 %v1448, %v1922
    %v1935 = vrot.slane %v1928, 7
    %v1936 = vrot.slane %v1929, 6
    %v1937 = vrot.slane %v1930, 5
    %v1938 = vsel %vm1909, %v1927, %v1935
    %v1939 = vsel %vm1911, %v1936, %v1937
    %v1940 = vsel %vm1913, %v1938, %v1939
    %v1942 = vsub.f32 %v1917, %v1940
    %v1943 = vmul.f32 %v677, %v1919
    %v1944 = vmul.f32 %v855, %v1920
    %v1945 = vmul.f32 %v1033, %v1921
    %v1946 = vmul.f32 %v1211, %v1922
    %v1947 = vmul.f32 %v679, %v1919
    %v1948 = vmul.f32 %v857, %v1920
    %v1949 = vmul.f32 %v1035, %v1921
    %v1950 = vmul.f32 %v1213, %v1922
    %v1951 = vmul.f32 %v682, %v1919
    %v1952 = vmul.f32 %v860, %v1920
    %v1953 = vmul.f32 %v1038, %v1921
    %v1954 = vmul.f32 %v1216, %v1922
    %v1955 = vmul.f32 %v684, %v1919
    %v1956 = vmul.f32 %v862, %v1920
    %v1957 = vmul.f32 %v1040, %v1921
    %v1958 = vmul.f32 %v1218, %v1922
    %v1959 = vmul.f32 %v687, %v1919
    %v1960 = vmul.f32 %v865, %v1920
    %v1961 = vmul.f32 %v1043, %v1921
    %v1962 = vmul.f32 %v1221, %v1922
    %v1963 = vmul.f32 %v689, %v1919
    %v1964 = vmul.f32 %v867, %v1920
    %v1965 = vmul.f32 %v1045, %v1921
    %v1966 = vmul.f32 %v1223, %v1922
    %v1967 = vmul.f32 %v692, %v1919
    %v1968 = vmul.f32 %v870, %v1920
    %v1969 = vmul.f32 %v1048, %v1921
    %v1970 = vmul.f32 %v1226, %v1922
    %v1971 = vmul.f32 %v694, %v1919
    %v1972 = vmul.f32 %v872, %v1920
    %v1973 = vmul.f32 %v1050, %v1921
    %v1974 = vmul.f32 %v1228, %v1922
    %v1975 = vmul.f32 %v697, %v1919
    %v1976 = vmul.f32 %v875, %v1920
    %v1977 = vmul.f32 %v1053, %v1921
    %v1978 = vmul.f32 %v1231, %v1922
    %v1979 = vmul.f32 %v699, %v1919
    %v1980 = vmul.f32 %v877, %v1920
    %v1981 = vmul.f32 %v1055, %v1921
    %v1982 = vmul.f32 %v1233, %v1922
    %v1983 = vmul.f32 %v702, %v1919
    %v1984 = vmul.f32 %v880, %v1920
    %v1985 = vmul.f32 %v1058, %v1921
    %v1986 = vmul.f32 %v1236, %v1922
    %v1987 = vmul.f32 %v704, %v1919
    %v1988 = vmul.f32 %v882, %v1920
    %v1989 = vmul.f32 %v1060, %v1921
    %v1990 = vmul.f32 %v1238, %v1922
    %v1991 = vmul.f32 %v707, %v1919
    %v1992 = vmul.f32 %v885, %v1920
    %v1993 = vmul.f32 %v1063, %v1921
    %v1994 = vmul.f32 %v1241, %v1922
    %v1995 = vmul.f32 %v709, %v1919
    %v1996 = vmul.f32 %v887, %v1920
    %v1997 = vmul.f32 %v1065, %v1921
    %v1998 = vmul.f32 %v1243, %v1922
    %v1999 = vmul.f32 %v712, %v1919
    %v2000 = vmul.f32 %v890, %v1920
    %v2001 = vmul.f32 %v1068, %v1921
    %v2002 = vmul.f32 %v1246, %v1922
    %v2003 = vmul.f32 %v714, %v1919
    %v2004 = vmul.f32 %v892, %v1920
    %v2005 = vmul.f32 %v1070, %v1921
    %v2006 = vmul.f32 %v1248, %v1922
    %v2007 = vmul.f32 %v717, %v1919
    %v2008 = vmul.f32 %v895, %v1920
    %v2009 = vmul.f32 %v1073, %v1921
    %v2010 = vmul.f32 %v1251, %v1922
    %v2011 = vmul.f32 %v719, %v1919
    %v2012 = vmul.f32 %v897, %v1920
    %v2013 = vmul.f32 %v1075, %v1921
    %v2014 = vmul.f32 %v1253, %v1922
    %v2015 = vmul.f32 %v722, %v1919
    %v2016 = vmul.f32 %v900, %v1920
    %v2017 = vmul.f32 %v1078, %v1921
    %v2018 = vmul.f32 %v1256, %v1922
    %v2019 = vmul.f32 %v724, %v1919
    %v2020 = vmul.f32 %v902, %v1920
    %v2021 = vmul.f32 %v1080, %v1921
    %v2022 = vmul.f32 %v1258, %v1922
    %v2023 = vmul.f32 %v727, %v1919
    %v2024 = vmul.f32 %v905, %v1920
    %v2025 = vmul.f32 %v1083, %v1921
    %v2026 = vmul.f32 %v1261, %v1922
    %v2027 = vmul.f32 %v729, %v1919
    %v2028 = vmul.f32 %v907, %v1920
    %v2029 = vmul.f32 %v1085, %v1921
    %v2030 = vmul.f32 %v1263, %v1922
    %v2031 = vmul.f32 %v732, %v1919
    %v2032 = vmul.f32 %v910, %v1920
    %v2033 = vmul.f32 %v1088, %v1921
    %v2034 = vmul.f32 %v1266, %v1922
    %v2035 = vmul.f32 %v734, %v1919
    %v2036 = vmul.f32 %v912, %v1920
    %v2037 = vmul.f32 %v1090, %v1921
    %v2038 = vmul.f32 %v1268, %v1922
    %v2039 = vmul.f32 %v737, %v1919
    %v2040 = vmul.f32 %v915, %v1920
    %v2041 = vmul.f32 %v1093, %v1921
    %v2042 = vmul.f32 %v1271, %v1922
    %v2043 = vmul.f32 %v739, %v1919
    %v2044 = vmul.f32 %v917, %v1920
    %v2045 = vmul.f32 %v1095, %v1921
    %v2046 = vmul.f32 %v1273, %v1922
    %v2047 = vmul.f32 %v742, %v1919
    %v2048 = vmul.f32 %v920, %v1920
    %v2049 = vmul.f32 %v1098, %v1921
    %v2050 = vmul.f32 %v1276, %v1922
    %v2051 = vmul.f32 %v744, %v1919
    %v2052 = vmul.f32 %v922, %v1920
    %v2053 = vmul.f32 %v1100, %v1921
    %v2054 = vmul.f32 %v1278, %v1922
    %v2055 = vmul.f32 %v747, %v1919
    %v2056 = vmul.f32 %v925, %v1920
    %v2057 = vmul.f32 %v1103, %v1921
    %v2058 = vmul.f32 %v1281, %v1922
    %v2059 = vmul.f32 %v749, %v1919
    %v2060 = vmul.f32 %v927, %v1920
    %v2061 = vmul.f32 %v1105, %v1921
    %v2062 = vmul.f32 %v1283, %v1922
    %v2063 = vmul.f32 %v752, %v1919
    %v2064 = vmul.f32 %v930, %v1920
    %v2065 = vmul.f32 %v1108, %v1921
    %v2066 = vmul.f32 %v1286, %v1922
    %v2067 = vmul.f32 %v754, %v1919
    %v2068 = vmul.f32 %v932, %v1920
    %v2069 = vmul.f32 %v1110, %v1921
    %v2070 = vmul.f32 %v1288, %v1922
    %v2072 = vperm.slane %v1942, 0
    %v2073 = vperm.slane %v1942, 1
    %v2074 = vperm.slane %v1942, 2
    %v2075 = vperm.slane %v1942, 3
    %v2080 = vadd.f32 %v1943, %v2072
    %v2081 = vadd.f32 %v1944, %v2073
    %v2082 = vadd.f32 %v1945, %v2074
    %v2083 = vadd.f32 %v1946, %v2075
    %v2084 = vadd.f32 %v1947, %v2072
    %v2085 = vadd.f32 %v1948, %v2073
    %v2086 = vadd.f32 %v1949, %v2074
    %v2087 = vadd.f32 %v1950, %v2075
    %v2088 = vadd.f32 %v1951, %v2072
    %v2089 = vadd.f32 %v1952, %v2073
    %v2090 = vadd.f32 %v1953, %v2074
    %v2091 = vadd.f32 %v1954, %v2075
    %v2092 = vadd.f32 %v1955, %v2072
    %v2093 = vadd.f32 %v1956, %v2073
    %v2094 = vadd.f32 %v1957, %v2074
    %v2095 = vadd.f32 %v1958, %v2075
    %v2096 = vadd.f32 %v1959, %v2072
    %v2097 = vadd.f32 %v1960, %v2073
    %v2098 = vadd.f32 %v1961, %v2074
    %v2099 = vadd.f32 %v1962, %v2075
    %v2100 = vadd.f32 %v1963, %v2072
    %v2101 = vadd.f32 %v1964, %v2073
    %v2102 = vadd.f32 %v1965, %v2074
    %v2103 = vadd.f32 %v1966, %v2075
    %v2104 = vadd.f32 %v1967, %v2072
    %v2105 = vadd.f32 %v1968, %v2073
    %v2106 = vadd.f32 %v1969, %v2074
    %v2107 = vadd.f32 %v1970, %v2075
    %v2108 = vadd.f32 %v1971, %v2072
    %v2109 = vadd.f32 %v1972, %v2073
    %v2110 = vadd.f32 %v1973, %v2074
    %v2111 = vadd.f32 %v1974, %v2075
    %v2112 = vadd.f32 %v1975, %v2072
    %v2113 = vadd.f32 %v1976, %v2073
    %v2114 = vadd.f32 %v1977, %v2074
    %v2115 = vadd.f32 %v1978, %v2075
    %v2116 = vadd.f32 %v1979, %v2072
    %v2117 = vadd.f32 %v1980, %v2073
    %v2118 = vadd.f32 %v1981, %v2074
    %v2119 = vadd.f32 %v1982, %v2075
    %v2120 = vadd.f32 %v1983, %v2072
    %v2121 = vadd.f32 %v1984, %v2073
    %v2122 = vadd.f32 %v1985, %v2074
    %v2123 = vadd.f32 %v1986, %v2075
    %v2124 = vadd.f32 %v1987, %v2072
    %v2125 = vadd.f32 %v1988, %v2073
    %v2126 = vadd.f32 %v1989, %v2074
    %v2127 = vadd.f32 %v1990, %v2075
    %v2128 = vadd.f32 %v1991, %v2072
    %v2129 = vadd.f32 %v1992, %v2073
    %v2130 = vadd.f32 %v1993, %v2074
    %v2131 = vadd.f32 %v1994, %v2075
    %v2132 = vadd.f32 %v1995, %v2072
    %v2133 = vadd.f32 %v1996, %v2073
    %v2134 = vadd.f32 %v1997, %v2074
    %v2135 = vadd.f32 %v1998, %v2075
    %v2136 = vadd.f32 %v1999, %v2072
    %v2137 = vadd.f32 %v2000, %v2073
    %v2138 = vadd.f32 %v2001, %v2074
    %v2139 = vadd.f32 %v2002, %v2075
    %v2140 = vadd.f32 %v2003, %v2072
    %v2141 = vadd.f32 %v2004, %v2073
    %v2142 = vadd.f32 %v2005, %v2074
    %v2143 = vadd.f32 %v2006, %v2075
    %v2144 = vadd.f32 %v2007, %v2072
    %v2145 = vadd.f32 %v2008, %v2073
    %v2146 = vadd.f32 %v2009, %v2074
    %v2147 = vadd.f32 %v2010, %v2075
    %v2148 = vadd.f32 %v2011, %v2072
    %v2149 = vadd.f32 %v2012, %v2073
    %v2150 = vadd.f32 %v2013, %v2074
    %v2151 = vadd.f32 %v2014, %v2075
    %v2152 = vadd.f32 %v2015, %v2072
    %v2153 = vadd.f32 %v2016, %v2073
    %v2154 = vadd.f32 %v2017, %v2074
    %v2155 = vadd.f32 %v2018, %v2075
    %v2156 = vadd.f32 %v2019, %v2072
    %v2157 = vadd.f32 %v2020, %v2073
    %v2158 = vadd.f32 %v2021, %v2074
    %v2159 = vadd.f32 %v2022, %v2075
    %v2160 = vadd.f32 %v2023, %v2072
    %v2161 = vadd.f32 %v2024, %v2073
    %v2162 = vadd.f32 %v2025, %v2074
    %v2163 = vadd.f32 %v2026, %v2075
    %v2164 = vadd.f32 %v2027, %v2072
    %v2165 = vadd.f32 %v2028, %v2073
    %v2166 = vadd.f32 %v2029, %v2074
    %v2167 = vadd.f32 %v2030, %v2075
    %v2168 = vadd.f32 %v2031, %v2072
    %v2169 = vadd.f32 %v2032, %v2073
    %v2170 = vadd.f32 %v2033, %v2074
    %v2171 = vadd.f32 %v2034, %v2075
    %v2172 = vadd.f32 %v2035, %v2072
    %v2173 = vadd.f32 %v2036, %v2073
    %v2174 = vadd.f32 %v2037, %v2074
    %v2175 = vadd.f32 %v2038, %v2075
    %v2176 = vadd.f32 %v2039, %v2072
    %v2177 = vadd.f32 %v2040, %v2073
    %v2178 = vadd.f32 %v2041, %v2074
    %v2179 = vadd.f32 %v2042, %v2075
    %v2180 = vadd.f32 %v2043, %v2072
    %v2181 = vadd.f32 %v2044, %v2073
    %v2182 = vadd.f32 %v2045, %v2074
    %v2183 = vadd.f32 %v2046, %v2075
    %v2184 = vadd.f32 %v2047, %v2072
    %v2185 = vadd.f32 %v2048, %v2073
    %v2186 = vadd.f32 %v2049, %v2074
    %v2187 = vadd.f32 %v2050, %v2075
    %v2188 = vadd.f32 %v2051, %v2072
    %v2189 = vadd.f32 %v2052, %v2073
    %v2190 = vadd.f32 %v2053, %v2074
    %v2191 = vadd.f32 %v2054, %v2075
    %v2192 = vadd.f32 %v2055, %v2072
    %v2193 = vadd.f32 %v2056, %v2073
    %v2194 = vadd.f32 %v2057, %v2074
    %v2195 = vadd.f32 %v2058, %v2075
    %v2196 = vadd.f32 %v2059, %v2072
    %v2197 = vadd.f32 %v2060, %v2073
    %v2198 = vadd.f32 %v2061, %v2074
    %v2199 = vadd.f32 %v2062, %v2075
    %v2200 = vadd.f32 %v2063, %v2072
    %v2201 = vadd.f32 %v2064, %v2073
    %v2202 = vadd.f32 %v2065, %v2074
    %v2203 = vadd.f32 %v2066, %v2075
    %v2204 = vadd.f32 %v2067, %v2072
    %v2205 = vadd.f32 %v2068, %v2073
    %v2206 = vadd.f32 %v2069, %v2074
    %v2207 = vadd.f32 %v2070, %v2075
    %v2208 = vmax.f32 %v2080, 0.0
    %v2209 = vmax.f32 %v2081, 0.0
    %v2210 = vmax.f32 %v2082, 0.0
    %v2211 = vmax.f32 %v2083, 0.0
    %v2212 = vmax.f32 %v2084, 0.0
    %v2213 = vmax.f32 %v2085, 0.0
    %v2214 = vmax.f32 %v2086, 0.0
    %v2215 = vmax.f32 %v2087, 0.0
    %v2216 = vmax.f32 %v2088, 0.0
    %v2217 = vmax.f32 %v2089, 0.0
    %v2218 = vmax.f32 %v2090, 0.0
    %v2219 = vmax.f32 %v2091, 0.0
    %v2220 = vmax.f32 %v2092, 0.0
    %v2221 = vmax.f32 %v2093, 0.0
    %v2222 = vmax.f32 %v2094, 0.0
    %v2223 = vmax.f32 %v2095, 0.0
    %v2224 = vmax.f32 %v2096, 0.0
    %v2225 = vmax.f32 %v2097, 0.0
    %v2226 = vmax.f32 %v2098, 0.0
    %v2227 = vmax.f32 %v2099, 0.0
    %v2228 = vmax.f32 %v2100, 0.0
    %v2229 = vmax.f32 %v2101, 0.0
    %v2230 = vmax.f32 %v2102, 0.0
    %v2231 = vmax.f32 %v2103, 0.0
    %v2232 = vmax.f32 %v2104, 0.0
    %v2233 = vmax.f32 %v2105, 0.0
    %v2234 = vmax.f32 %v2106, 0.0
    %v2235 = vmax.f32 %v2107, 0.0
    %v2236 = vmax.f32 %v2108, 0.0
    %v2237 = vmax.f32 %v2109, 0.0
    %v2238 = vmax.f32 %v2110, 0.0
    %v2239 = vmax.f32 %v2111, 0.0
    %v2240 = vmax.f32 %v2112, 0.0
    %v2241 = vmax.f32 %v2113, 0.0
    %v2242 = vmax.f32 %v2114, 0.0
    %v2243 = vmax.f32 %v2115, 0.0
    %v2244 = vmax.f32 %v2116, 0.0
    %v2245 = vmax.f32 %v2117, 0.0
    %v2246 = vmax.f32 %v2118, 0.0
    %v2247 = vmax.f32 %v2119, 0.0
    %v2248 = vmax.f32 %v2120, 0.0
    %v2249 = vmax.f32 %v2121, 0.0
    %v2250 = vmax.f32 %v2122, 0.0
    %v2251 = vmax.f32 %v2123, 0.0
    %v2252 = vmax.f32 %v2124, 0.0
    %v2253 = vmax.f32 %v2125, 0.0
    %v2254 = vmax.f32 %v2126, 0.0
    %v2255 = vmax.f32 %v2127, 0.0
    %v2256 = vmax.f32 %v2128, 0.0
    %v2257 = vmax.f32 %v2129, 0.0
    %v2258 = vmax.f32 %v2130, 0.0
    %v2259 = vmax.f32 %v2131, 0.0
    %v2260 = vmax.f32 %v2132, 0.0
    %v2261 = vmax.f32 %v2133, 0.0
    %v2262 = vmax.f32 %v2134, 0.0
    %v2263 = vmax.f32 %v2135, 0.0
    %v2264 = vmax.f32 %v2136, 0.0
    %v2265 = vmax.f32 %v2137, 0.0
    %v2266 = vmax.f32 %v2138, 0.0
    %v2267 = vmax.f32 %v2139, 0.0
    %v2268 = vmax.f32 %v2140, 0.0
    %v2269 = vmax.f32 %v2141, 0.0
    %v2270 = vmax.f32 %v2142, 0.0
    %v2271 = vmax.f32 %v2143, 0.0
    %v2272 = vmax.f32 %v2144, 0.0
    %v2273 = vmax.f32 %v2145, 0.0
    %v2274 = vmax.f32 %v2146, 0.0
    %v2275 = vmax.f32 %v2147, 0.0
    %v2276 = vmax.f32 %v2148, 0.0
    %v2277 = vmax.f32 %v2149, 0.0
    %v2278 = vmax.f32 %v2150, 0.0
    %v2279 = vmax.f32 %v2151, 0.0
    %v2280 = vmax.f32 %v2152, 0.0
    %v2281 = vmax.f32 %v2153, 0.0
    %v2282 = vmax.f32 %v2154, 0.0
    %v2283 = vmax.f32 %v2155, 0.0
    %v2284 = vmax.f32 %v2156, 0.0
    %v2285 = vmax.f32 %v2157, 0.0
    %v2286 = vmax.f32 %v2158, 0.0
    %v2287 = vmax.f32 %v2159, 0.0
    %v2288 = vmax.f32 %v2160, 0.0
    %v2289 = vmax.f32 %v2161, 0.0
    %v2290 = vmax.f32 %v2162, 0.0
    %v2291 = vmax.f32 %v2163, 0.0
    %v2292 = vmax.f32 %v2164, 0.0
    %v2293 = vmax.f32 %v2165, 0.0
    %v2294 = vmax.f32 %v2166, 0.0
    %v2295 = vmax.f32 %v2167, 0.0
    %v2296 = vmax.f32 %v2168, 0.0
    %v2297 = vmax.f32 %v2169, 0.0
    %v2298 = vmax.f32 %v2170, 0.0
    %v2299 = vmax.f32 %v2171, 0.0
    %v2300 = vmax.f32 %v2172, 0.0
    %v2301 = vmax.f32 %v2173, 0.0
    %v2302 = vmax.f32 %v2174, 0.0
    %v2303 = vmax.f32 %v2175, 0.0
    %v2304 = vmax.f32 %v2176, 0.0
    %v2305 = vmax.f32 %v2177, 0.0
    %v2306 = vmax.f32 %v2178, 0.0
    %v2307 = vmax.f32 %v2179, 0.0
    %v2308 = vmax.f32 %v2180, 0.0
    %v2309 = vmax.f32 %v2181, 0.0
    %v2310 = vmax.f32 %v2182, 0.0
    %v2311 = vmax.f32 %v2183, 0.0
    %v2312 = vmax.f32 %v2184, 0.0
    %v2313 = vmax.f32 %v2185, 0.0
    %v2314 = vmax.f32 %v2186, 0.0
    %v2315 = vmax.f32 %v2187, 0.0
    %v2316 = vmax.f32 %v2188, 0.0
    %v2317 = vmax.f32 %v2189, 0.0
    %v2318 = vmax.f32 %v2190, 0.0
    %v2319 = vmax.f32 %v2191, 0.0
    %v2320 = vmax.f32 %v2192, 0.0
    %v2321 = vmax.f32 %v2193, 0.0
    %v2322 = vmax.f32 %v2194, 0.0
    %v2323 = vmax.f32 %v2195, 0.0
    %v2324 = vmax.f32 %v2196, 0.0
    %v2325 = vmax.f32 %v2197, 0.0
    %v2326 = vmax.f32 %v2198, 0.0
    %v2327 = vmax.f32 %v2199, 0.0
    %v2328 = vmax.f32 %v2200, 0.0
    %v2329 = vmax.f32 %v2201, 0.0
    %v2330 = vmax.f32 %v2202, 0.0
    %v2331 = vmax.f32 %v2203, 0.0
    %v2332 = vmax.f32 %v2204, 0.0
    %v2333 = vmax.f32 %v2205, 0.0
    %v2334 = vmax.f32 %v2206, 0.0
    %v2335 = vmax.f32 %v2207, 0.0
    %v2336 = vpack.c.bf16 %v2212, %v2208
    %v2337 = vpack.c.bf16 %v2213, %v2209
    %v2338 = vpack.c.bf16 %v2214, %v2210
    %v2339 = vpack.c.bf16 %v2215, %v2211
    %v2340 = vpack.c.bf16 %v2220, %v2216
    %v2341 = vpack.c.bf16 %v2221, %v2217
    %v2342 = vpack.c.bf16 %v2222, %v2218
    %v2343 = vpack.c.bf16 %v2223, %v2219
    %v2344 = vpack.c.bf16 %v2228, %v2224
    %v2345 = vpack.c.bf16 %v2229, %v2225
    %v2346 = vpack.c.bf16 %v2230, %v2226
    %v2347 = vpack.c.bf16 %v2231, %v2227
    %v2348 = vpack.c.bf16 %v2236, %v2232
    %v2349 = vpack.c.bf16 %v2237, %v2233
    %v2350 = vpack.c.bf16 %v2238, %v2234
    %v2351 = vpack.c.bf16 %v2239, %v2235
    %v2352 = vpack.c.bf16 %v2244, %v2240
    %v2353 = vpack.c.bf16 %v2245, %v2241
    %v2354 = vpack.c.bf16 %v2246, %v2242
    %v2355 = vpack.c.bf16 %v2247, %v2243
    %v2356 = vpack.c.bf16 %v2252, %v2248
    %v2357 = vpack.c.bf16 %v2253, %v2249
    %v2358 = vpack.c.bf16 %v2254, %v2250
    %v2359 = vpack.c.bf16 %v2255, %v2251
    %v2360 = vpack.c.bf16 %v2260, %v2256
    %v2361 = vpack.c.bf16 %v2261, %v2257
    %v2362 = vpack.c.bf16 %v2262, %v2258
    %v2363 = vpack.c.bf16 %v2263, %v2259
    %v2364 = vpack.c.bf16 %v2268, %v2264
    %v2365 = vpack.c.bf16 %v2269, %v2265
    %v2366 = vpack.c.bf16 %v2270, %v2266
    %v2367 = vpack.c.bf16 %v2271, %v2267
    %v2368 = vpack.c.bf16 %v2276, %v2272
    %v2369 = vpack.c.bf16 %v2277, %v2273
    %v2370 = vpack.c.bf16 %v2278, %v2274
    %v2371 = vpack.c.bf16 %v2279, %v2275
    %v2372 = vpack.c.bf16 %v2284, %v2280
    %v2373 = vpack.c.bf16 %v2285, %v2281
    %v2374 = vpack.c.bf16 %v2286, %v2282
    %v2375 = vpack.c.bf16 %v2287, %v2283
    %v2376 = vpack.c.bf16 %v2292, %v2288
    %v2377 = vpack.c.bf16 %v2293, %v2289
    %v2378 = vpack.c.bf16 %v2294, %v2290
    %v2379 = vpack.c.bf16 %v2295, %v2291
    %v2380 = vpack.c.bf16 %v2300, %v2296
    %v2381 = vpack.c.bf16 %v2301, %v2297
    %v2382 = vpack.c.bf16 %v2302, %v2298
    %v2383 = vpack.c.bf16 %v2303, %v2299
    %v2384 = vpack.c.bf16 %v2308, %v2304
    %v2385 = vpack.c.bf16 %v2309, %v2305
    %v2386 = vpack.c.bf16 %v2310, %v2306
    %v2387 = vpack.c.bf16 %v2311, %v2307
    %v2388 = vpack.c.bf16 %v2316, %v2312
    %v2389 = vpack.c.bf16 %v2317, %v2313
    %v2390 = vpack.c.bf16 %v2318, %v2314
    %v2391 = vpack.c.bf16 %v2319, %v2315
    %v2392 = vpack.c.bf16 %v2324, %v2320
    %v2393 = vpack.c.bf16 %v2325, %v2321
    %v2394 = vpack.c.bf16 %v2326, %v2322
    %v2395 = vpack.c.bf16 %v2327, %v2323
    %v2396 = vpack.c.bf16 %v2332, %v2328
    %v2397 = vpack.c.bf16 %v2333, %v2329
    %v2398 = vpack.c.bf16 %v2334, %v2330
    %v2399 = vpack.c.bf16 %v2335, %v2331
    %v2400 = vld [vmem:[#allocation10] sm:$0xff]
    %v2401 = vld [vmem:[#allocation10 + $0x8] sm:$0xff]
    %v2402 = vld [vmem:[#allocation10 + $0x10] sm:$0xff]
    %v2403 = vld [vmem:[#allocation10 + $0x18] sm:$0xff]
    %v2404 = vld [vmem:[#allocation10 + $0x20] sm:$0xff]
    %v2405 = vld [vmem:[#allocation10 + $0x28] sm:$0xff]
    %v2406 = vld [vmem:[#allocation10 + $0x30] sm:$0xff]
    %v2407 = vld [vmem:[#allocation10 + $0x38] sm:$0xff]
    %v2408 = vld [vmem:[#allocation10 + $0x40] sm:$0xff]
    %v2409 = vld [vmem:[#allocation10 + $0x48] sm:$0xff]
    %v2410 = vld [vmem:[#allocation10 + $0x50] sm:$0xff]
    %v2411 = vld [vmem:[#allocation10 + $0x58] sm:$0xff]
    %v2412 = vld [vmem:[#allocation10 + $0x60] sm:$0xff]
    %v2413 = vld [vmem:[#allocation10 + $0x68] sm:$0xff]
    %v2414 = vld [vmem:[#allocation10 + $0x70] sm:$0xff]
    %v2415 = vld [vmem:[#allocation10 + $0x78] sm:$0xff]
    %v2416 = vld [vmem:[#allocation10 + $0x80] sm:$0xff]
    %v2417 = vld [vmem:[#allocation10 + $0x88] sm:$0xff]
    %v2418 = vld [vmem:[#allocation10 + $0x90] sm:$0xff]
    %v2419 = vld [vmem:[#allocation10 + $0x98] sm:$0xff]
    %v2420 = vld [vmem:[#allocation10 + $0xa0] sm:$0xff]
    %v2421 = vld [vmem:[#allocation10 + $0xa8] sm:$0xff]
    %v2422 = vld [vmem:[#allocation10 + $0xb0] sm:$0xff]
    %v2423 = vld [vmem:[#allocation10 + $0xb8] sm:$0xff]
    %v2424 = vld [vmem:[#allocation10 + $0xc0] sm:$0xff]
    %v2425 = vld [vmem:[#allocation10 + $0xc8] sm:$0xff]
    %v2426 = vld [vmem:[#allocation10 + $0xd0] sm:$0xff]
    %v2427 = vld [vmem:[#allocation10 + $0xd8] sm:$0xff]
    %v2428 = vld [vmem:[#allocation10 + $0xe0] sm:$0xff]
    %v2429 = vld [vmem:[#allocation10 + $0xe8] sm:$0xff]
    %v2430 = vld [vmem:[#allocation10 + $0xf0] sm:$0xff]
    %v2431 = vld [vmem:[#allocation10 + $0xf8] sm:$0xff]
    %v2432 = vld [vmem:[#allocation10 + $0x100] sm:$0xff]
    %v2433 = vld [vmem:[#allocation10 + $0x108] sm:$0xff]
    %v2434 = vld [vmem:[#allocation10 + $0x110] sm:$0xff]
    %v2435 = vld [vmem:[#allocation10 + $0x118] sm:$0xff]
    %v2436 = vld [vmem:[#allocation10 + $0x120] sm:$0xff]
    %v2437 = vld [vmem:[#allocation10 + $0x128] sm:$0xff]
    %v2438 = vld [vmem:[#allocation10 + $0x130] sm:$0xff]
    %v2439 = vld [vmem:[#allocation10 + $0x138] sm:$0xff]
    %v2440 = vld [vmem:[#allocation10 + $0x140] sm:$0xff]
    %v2441 = vld [vmem:[#allocation10 + $0x148] sm:$0xff]
    %v2442 = vld [vmem:[#allocation10 + $0x150] sm:$0xff]
    %v2443 = vld [vmem:[#allocation10 + $0x158] sm:$0xff]
    %v2444 = vld [vmem:[#allocation10 + $0x160] sm:$0xff]
    %v2445 = vld [vmem:[#allocation10 + $0x168] sm:$0xff]
    %v2446 = vld [vmem:[#allocation10 + $0x170] sm:$0xff]
    %v2447 = vld [vmem:[#allocation10 + $0x178] sm:$0xff]
    %v2448 = vld [vmem:[#allocation10 + $0x180] sm:$0xff]
    %v2449 = vld [vmem:[#allocation10 + $0x188] sm:$0xff]
    %v2450 = vld [vmem:[#allocation10 + $0x190] sm:$0xff]
    %v2451 = vld [vmem:[#allocation10 + $0x198] sm:$0xff]
    %v2452 = vld [vmem:[#allocation10 + $0x1a0] sm:$0xff]
    %v2453 = vld [vmem:[#allocation10 + $0x1a8] sm:$0xff]
    %v2454 = vld [vmem:[#allocation10 + $0x1b0] sm:$0xff]
    %v2455 = vld [vmem:[#allocation10 + $0x1b8] sm:$0xff]
    %v2456 = vld [vmem:[#allocation10 + $0x1c0] sm:$0xff]
    %v2457 = vld [vmem:[#allocation10 + $0x1c8] sm:$0xff]
    %v2458 = vld [vmem:[#allocation10 + $0x1d0] sm:$0xff]
    %v2459 = vld [vmem:[#allocation10 + $0x1d8] sm:$0xff]
    %v2460 = vld [vmem:[#allocation10 + $0x1e0] sm:$0xff]
    %v2461 = vld [vmem:[#allocation10 + $0x1e8] sm:$0xff]
    %v2462 = vld [vmem:[#allocation10 + $0x1f0] sm:$0xff]
    %v2463 = vld [vmem:[#allocation10 + $0x1f8] sm:$0xff]
    %v2464 = vld [vmem:[%s5] sm:$0x3]
    %v2466 = vperm.slane %v2464, 0
    %v2467 = vperm.slane %v2464, 1
    %v2534 = vunpack.c.l.b16 %v2400
    %v2535 = vunpack.c.h.b16 %v2400
    %v2536 = vunpack.c.l.b16 %v2401
    %v2537 = vunpack.c.h.b16 %v2401
    %v2538 = vunpack.c.l.b16 %v2402
    %v2539 = vunpack.c.h.b16 %v2402
    %v2540 = vunpack.c.l.b16 %v2403
    %v2541 = vunpack.c.h.b16 %v2403
    %v2542 = vunpack.c.l.b16 %v2404
    %v2543 = vunpack.c.h.b16 %v2404
    %v2544 = vunpack.c.l.b16 %v2405
    %v2545 = vunpack.c.h.b16 %v2405
    %v2546 = vunpack.c.l.b16 %v2406
    %v2547 = vunpack.c.h.b16 %v2406
    %v2548 = vunpack.c.l.b16 %v2407
    %v2549 = vunpack.c.h.b16 %v2407
    %v2550 = vunpack.c.l.b16 %v2408
    %v2551 = vunpack.c.h.b16 %v2408
    %v2552 = vunpack.c.l.b16 %v2409
    %v2553 = vunpack.c.h.b16 %v2409
    %v2554 = vunpack.c.l.b16 %v2410
    %v2555 = vunpack.c.h.b16 %v2410
    %v2556 = vunpack.c.l.b16 %v2411
    %v2557 = vunpack.c.h.b16 %v2411
    %v2558 = vunpack.c.l.b16 %v2412
    %v2559 = vunpack.c.h.b16 %v2412
    %v2560 = vunpack.c.l.b16 %v2413
    %v2561 = vunpack.c.h.b16 %v2413
    %v2562 = vunpack.c.l.b16 %v2414
    %v2563 = vunpack.c.h.b16 %v2414
    %v2564 = vunpack.c.l.b16 %v2415
    %v2565 = vunpack.c.h.b16 %v2415
    %v2566 = vunpack.c.l.b16 %v2416
    %v2567 = vunpack.c.h.b16 %v2416
    %v2568 = vunpack.c.l.b16 %v2417
    %v2569 = vunpack.c.h.b16 %v2417
    %v2570 = vunpack.c.l.b16 %v2418
    %v2571 = vunpack.c.h.b16 %v2418
    %v2572 = vunpack.c.l.b16 %v2419
    %v2573 = vunpack.c.h.b16 %v2419
    %v2574 = vunpack.c.l.b16 %v2420
    %v2575 = vunpack.c.h.b16 %v2420
    %v2576 = vunpack.c.l.b16 %v2421
    %v2577 = vunpack.c.h.b16 %v2421
    %v2578 = vunpack.c.l.b16 %v2422
    %v2579 = vunpack.c.h.b16 %v2422
    %v2580 = vunpack.c.l.b16 %v2423
    %v2581 = vunpack.c.h.b16 %v2423
    %v2582 = vunpack.c.l.b16 %v2424
    %v2583 = vunpack.c.h.b16 %v2424
    %v2584 = vunpack.c.l.b16 %v2425
    %v2585 = vunpack.c.h.b16 %v2425
    %v2586 = vunpack.c.l.b16 %v2426
    %v2587 = vunpack.c.h.b16 %v2426
    %v2588 = vunpack.c.l.b16 %v2427
    %v2589 = vunpack.c.h.b16 %v2427
    %v2590 = vunpack.c.l.b16 %v2428
    %v2591 = vunpack.c.h.b16 %v2428
    %v2592 = vunpack.c.l.b16 %v2429
    %v2593 = vunpack.c.h.b16 %v2429
    %v2594 = vunpack.c.l.b16 %v2430
    %v2595 = vunpack.c.h.b16 %v2430
    %v2596 = vunpack.c.l.b16 %v2431
    %v2597 = vunpack.c.h.b16 %v2431
    %v2598 = vunpack.c.l.b16 %v2432
    %v2599 = vunpack.c.h.b16 %v2432
    %v2600 = vunpack.c.l.b16 %v2433
    %v2601 = vunpack.c.h.b16 %v2433
    %v2602 = vunpack.c.l.b16 %v2434
    %v2603 = vunpack.c.h.b16 %v2434
    %v2604 = vunpack.c.l.b16 %v2435
    %v2605 = vunpack.c.h.b16 %v2435
    %v2606 = vunpack.c.l.b16 %v2436
    %v2607 = vunpack.c.h.b16 %v2436
    %v2608 = vunpack.c.l.b16 %v2437
    %v2609 = vunpack.c.h.b16 %v2437
    %v2610 = vunpack.c.l.b16 %v2438
    %v2611 = vunpack.c.h.b16 %v2438
    %v2612 = vunpack.c.l.b16 %v2439
    %v2613 = vunpack.c.h.b16 %v2439
    %v2614 = vunpack.c.l.b16 %v2440
    %v2615 = vunpack.c.h.b16 %v2440
    %v2616 = vunpack.c.l.b16 %v2441
    %v2617 = vunpack.c.h.b16 %v2441
    %v2618 = vunpack.c.l.b16 %v2442
    %v2619 = vunpack.c.h.b16 %v2442
    %v2620 = vunpack.c.l.b16 %v2443
    %v2621 = vunpack.c.h.b16 %v2443
    %v2622 = vunpack.c.l.b16 %v2444
    %v2623 = vunpack.c.h.b16 %v2444
    %v2624 = vunpack.c.l.b16 %v2445
    %v2625 = vunpack.c.h.b16 %v2445
    %v2626 = vunpack.c.l.b16 %v2446
    %v2627 = vunpack.c.h.b16 %v2446
    %v2628 = vunpack.c.l.b16 %v2447
    %v2629 = vunpack.c.h.b16 %v2447
    %v2630 = vunpack.c.l.b16 %v2448
    %v2631 = vunpack.c.h.b16 %v2448
    %v2632 = vunpack.c.l.b16 %v2449
    %v2633 = vunpack.c.h.b16 %v2449
    %v2634 = vunpack.c.l.b16 %v2450
    %v2635 = vunpack.c.h.b16 %v2450
    %v2636 = vunpack.c.l.b16 %v2451
    %v2637 = vunpack.c.h.b16 %v2451
    %v2638 = vunpack.c.l.b16 %v2452
    %v2639 = vunpack.c.h.b16 %v2452
    %v2640 = vunpack.c.l.b16 %v2453
    %v2641 = vunpack.c.h.b16 %v2453
    %v2642 = vunpack.c.l.b16 %v2454
    %v2643 = vunpack.c.h.b16 %v2454
    %v2644 = vunpack.c.l.b16 %v2455
    %v2645 = vunpack.c.h.b16 %v2455
    %v2646 = vunpack.c.l.b16 %v2456
    %v2647 = vunpack.c.h.b16 %v2456
    %v2648 = vunpack.c.l.b16 %v2457
    %v2649 = vunpack.c.h.b16 %v2457
    %v2650 = vunpack.c.l.b16 %v2458
    %v2651 = vunpack.c.h.b16 %v2458
    %v2652 = vunpack.c.l.b16 %v2459
    %v2653 = vunpack.c.h.b16 %v2459
    %v2654 = vunpack.c.l.b16 %v2460
    %v2655 = vunpack.c.h.b16 %v2460
    %v2656 = vunpack.c.l.b16 %v2461
    %v2657 = vunpack.c.h.b16 %v2461
    %v2658 = vunpack.c.l.b16 %v2462
    %v2659 = vunpack.c.h.b16 %v2462
    %v2660 = vunpack.c.l.b16 %v2463
    %v2661 = vunpack.c.h.b16 %v2463
    %v2662 = vpack.c.b16 %v2536, %v2534
    %v2663 = vpack.c.b16 %v2537, %v2535
    %v2664 = vpack.c.b16 %v2540, %v2538
    %v2665 = vpack.c.b16 %v2541, %v2539
    %v2666 = vpack.c.b16 %v2544, %v2542
    %v2667 = vpack.c.b16 %v2545, %v2543
    %v2668 = vpack.c.b16 %v2548, %v2546
    %v2669 = vpack.c.b16 %v2549, %v2547
    %v2670 = vpack.c.b16 %v2552, %v2550
    %v2671 = vpack.c.b16 %v2553, %v2551
    %v2672 = vpack.c.b16 %v2556, %v2554
    %v2673 = vpack.c.b16 %v2557, %v2555
    %v2674 = vpack.c.b16 %v2560, %v2558
    %v2675 = vpack.c.b16 %v2561, %v2559
    %v2676 = vpack.c.b16 %v2564, %v2562
    %v2677 = vpack.c.b16 %v2565, %v2563
    %v2678 = vpack.c.b16 %v2568, %v2566
    %v2679 = vpack.c.b16 %v2569, %v2567
    %v2680 = vpack.c.b16 %v2572, %v2570
    %v2681 = vpack.c.b16 %v2573, %v2571
    %v2682 = vpack.c.b16 %v2576, %v2574
    %v2683 = vpack.c.b16 %v2577, %v2575
    %v2684 = vpack.c.b16 %v2580, %v2578
    %v2685 = vpack.c.b16 %v2581, %v2579
    %v2686 = vpack.c.b16 %v2584, %v2582
    %v2687 = vpack.c.b16 %v2585, %v2583
    %v2688 = vpack.c.b16 %v2588, %v2586
    %v2689 = vpack.c.b16 %v2589, %v2587
    %v2690 = vpack.c.b16 %v2592, %v2590
    %v2691 = vpack.c.b16 %v2593, %v2591
    %v2692 = vpack.c.b16 %v2596, %v2594
    %v2693 = vpack.c.b16 %v2597, %v2595
    %v2694 = vpack.c.b16 %v2600, %v2598
    %v2695 = vpack.c.b16 %v2601, %v2599
    %v2696 = vpack.c.b16 %v2604, %v2602
    %v2697 = vpack.c.b16 %v2605, %v2603
    %v2698 = vpack.c.b16 %v2608, %v2606
    %v2699 = vpack.c.b16 %v2609, %v2607
    %v2700 = vpack.c.b16 %v2612, %v2610
    %v2701 = vpack.c.b16 %v2613, %v2611
    %v2702 = vpack.c.b16 %v2616, %v2614
    %v2703 = vpack.c.b16 %v2617, %v2615
    %v2704 = vpack.c.b16 %v2620, %v2618
    %v2705 = vpack.c.b16 %v2621, %v2619
    %v2706 = vpack.c.b16 %v2624, %v2622
    %v2707 = vpack.c.b16 %v2625, %v2623
    %v2708 = vpack.c.b16 %v2628, %v2626
    %v2709 = vpack.c.b16 %v2629, %v2627
    %v2710 = vpack.c.b16 %v2632, %v2630
    %v2711 = vpack.c.b16 %v2633, %v2631
    %v2712 = vpack.c.b16 %v2636, %v2634
    %v2713 = vpack.c.b16 %v2637, %v2635
    %v2714 = vpack.c.b16 %v2640, %v2638
    %v2715 = vpack.c.b16 %v2641, %v2639
    %v2716 = vpack.c.b16 %v2644, %v2642
    %v2717 = vpack.c.b16 %v2645, %v2643
    %v2718 = vpack.c.b16 %v2648, %v2646
    %v2719 = vpack.c.b16 %v2649, %v2647
    %v2720 = vpack.c.b16 %v2652, %v2650
    %v2721 = vpack.c.b16 %v2653, %v2651
    %v2722 = vpack.c.b16 %v2656, %v2654
    %v2723 = vpack.c.b16 %v2657, %v2655
    %v2724 = vpack.c.b16 %v2660, %v2658
    %v2725 = vpack.c.b16 %v2661, %v2659
    %2790 = vmatpush.bf16.msra.mxu0 %v2676
    %2791 = vmatpush.bf16.msra.mxu0 %v2674
    %2792 = vmatpush.bf16.msra.mxu0 %v2672
    %2793 = vmatpush.bf16.msra.mxu0 %v2670
    %2794 = vmatpush.bf16.msra.mxu0 %v2668
    %2795 = vmatpush.bf16.msra.mxu0 %v2666
    %2796 = vmatpush.bf16.msra.mxu0 %v2664
    %2797 = vmatpush.bf16.msra.mxu0 %v2662
    %2798 = vmatmul.bf16.gmra.mxu0 %v2336
    %v2799 = vpop.f32.mrf.mxu0
    %v2800 = vadd.f32 %v2466, %v2799
    %v2801 = vpop.f32.mrf.mxu0
    %v2802 = vadd.f32 %v2466, %v2801
    %2803 = vmatmul.bf16.gmra.mxu0 %v2340
    %v2804 = vpop.f32.mrf.mxu0
    %v2805 = vadd.f32 %v2466, %v2804
    %v2806 = vpop.f32.mrf.mxu0
    %v2807 = vadd.f32 %v2466, %v2806
    %2808 = vmatmul.bf16.gmra.mxu0 %v2344
    %v2809 = vpop.f32.mrf.mxu0
    %v2810 = vadd.f32 %v2466, %v2809
    %v2811 = vpop.f32.mrf.mxu0
    %v2812 = vadd.f32 %v2466, %v2811
    %2813 = vmatmul.bf16.gmra.mxu0 %v2348
    %v2814 = vpop.f32.mrf.mxu0
    %v2815 = vadd.f32 %v2466, %v2814
    %v2816 = vpop.f32.mrf.mxu0
    %v2817 = vadd.f32 %v2466, %v2816
    %2818 = vmatmul.bf16.gmra.mxu0 %v2352
    %v2819 = vpop.f32.mrf.mxu0
    %v2820 = vadd.f32 %v2466, %v2819
    %v2821 = vpop.f32.mrf.mxu0
    %v2822 = vadd.f32 %v2466, %v2821
    %2823 = vmatmul.bf16.gmra.mxu0 %v2356
    %v2824 = vpop.f32.mrf.mxu0
    %v2825 = vadd.f32 %v2466, %v2824
    %v2826 = vpop.f32.mrf.mxu0
    %v2827 = vadd.f32 %v2466, %v2826
    %2828 = vmatmul.bf16.gmra.mxu0 %v2360
    %v2829 = vpop.f32.mrf.mxu0
    %v2830 = vadd.f32 %v2466, %v2829
    %v2831 = vpop.f32.mrf.mxu0
    %v2832 = vadd.f32 %v2466, %v2831
    %2833 = vmatmul.bf16.gmra.mxu0 %v2364
    %v2834 = vpop.f32.mrf.mxu0
    %v2835 = vadd.f32 %v2466, %v2834
    %v2836 = vpop.f32.mrf.mxu0
    %v2837 = vadd.f32 %v2466, %v2836
    %2838 = vmatmul.bf16.gmra.mxu0 %v2368
    %v2839 = vpop.f32.mrf.mxu0
    %v2840 = vadd.f32 %v2466, %v2839
    %v2841 = vpop.f32.mrf.mxu0
    %v2842 = vadd.f32 %v2466, %v2841
    %2843 = vmatmul.bf16.gmra.mxu0 %v2372
    %v2844 = vpop.f32.mrf.mxu0
    %v2845 = vadd.f32 %v2466, %v2844
    %v2846 = vpop.f32.mrf.mxu0
    %v2847 = vadd.f32 %v2466, %v2846
    %2848 = vmatmul.bf16.gmra.mxu0 %v2376
    %v2849 = vpop.f32.mrf.mxu0
    %v2850 = vadd.f32 %v2466, %v2849
    %v2851 = vpop.f32.mrf.mxu0
    %v2852 = vadd.f32 %v2466, %v2851
    %2853 = vmatmul.bf16.gmra.mxu0 %v2380
    %v2854 = vpop.f32.mrf.mxu0
    %v2855 = vadd.f32 %v2466, %v2854
    %v2856 = vpop.f32.mrf.mxu0
    %v2857 = vadd.f32 %v2466, %v2856
    %2858 = vmatmul.bf16.gmra.mxu0 %v2384
    %v2859 = vpop.f32.mrf.mxu0
    %v2860 = vadd.f32 %v2466, %v2859
    %v2861 = vpop.f32.mrf.mxu0
    %v2862 = vadd.f32 %v2466, %v2861
    %2863 = vmatmul.bf16.gmra.mxu0 %v2388
    %v2864 = vpop.f32.mrf.mxu0
    %v2865 = vadd.f32 %v2466, %v2864
    %v2866 = vpop.f32.mrf.mxu0
    %v2867 = vadd.f32 %v2466, %v2866
    %2868 = vmatmul.bf16.gmra.mxu0 %v2392
    %v2869 = vpop.f32.mrf.mxu0
    %v2870 = vadd.f32 %v2466, %v2869
    %v2871 = vpop.f32.mrf.mxu0
    %v2872 = vadd.f32 %v2466, %v2871
    %2873 = vmatmul.bf16.gmra.mxu0 %v2396
    %v2874 = vpop.f32.mrf.mxu0
    %v2875 = vadd.f32 %v2466, %v2874
    %v2876 = vpop.f32.mrf.mxu0
    %v2877 = vadd.f32 %v2466, %v2876
    %2878 = vdwg.mxu0
    %2879 = vmatpush.bf16.msra.mxu0 %v2692
    %2880 = vmatpush.bf16.msra.mxu0 %v2690
    %2881 = vmatpush.bf16.msra.mxu0 %v2688
    %2882 = vmatpush.bf16.msra.mxu0 %v2686
    %2883 = vmatpush.bf16.msra.mxu0 %v2684
    %2884 = vmatpush.bf16.msra.mxu0 %v2682
    %2885 = vmatpush.bf16.msra.mxu0 %v2680
    %2886 = vmatpush.bf16.msra.mxu0 %v2678
    %2887 = vmatmul.bf16.gmra.mxu0 %v2337
    %v2888 = vpop.f32.mrf.mxu0
    %v2889 = vadd.f32 %v2800, %v2888
    %v2890 = vpop.f32.mrf.mxu0
    %v2891 = vadd.f32 %v2802, %v2890
    %2892 = vmatmul.bf16.gmra.mxu0 %v2341
    %v2893 = vpop.f32.mrf.mxu0
    %v2894 = vadd.f32 %v2805, %v2893
    %v2895 = vpop.f32.mrf.mxu0
    %v2896 = vadd.f32 %v2807, %v2895
    %2897 = vmatmul.bf16.gmra.mxu0 %v2345
    %v2898 = vpop.f32.mrf.mxu0
    %v2899 = vadd.f32 %v2810, %v2898
    %v2900 = vpop.f32.mrf.mxu0
    %v2901 = vadd.f32 %v2812, %v2900
    %2902 = vmatmul.bf16.gmra.mxu0 %v2349
    %v2903 = vpop.f32.mrf.mxu0
    %v2904 = vadd.f32 %v2815, %v2903
    %v2905 = vpop.f32.mrf.mxu0
    %v2906 = vadd.f32 %v2817, %v2905
    %2907 = vmatmul.bf16.gmra.mxu0 %v2353
    %v2908 = vpop.f32.mrf.mxu0
    %v2909 = vadd.f32 %v2820, %v2908
    %v2910 = vpop.f32.mrf.mxu0
    %v2911 = vadd.f32 %v2822, %v2910
    %2912 = vmatmul.bf16.gmra.mxu0 %v2357
    %v2913 = vpop.f32.mrf.mxu0
    %v2914 = vadd.f32 %v2825, %v2913
    %v2915 = vpop.f32.mrf.mxu0
    %v2916 = vadd.f32 %v2827, %v2915
    %2917 = vmatmul.bf16.gmra.mxu0 %v2361
    %v2918 = vpop.f32.mrf.mxu0
    %v2919 = vadd.f32 %v2830, %v2918
    %v2920 = vpop.f32.mrf.mxu0
    %v2921 = vadd.f32 %v2832, %v2920
    %2922 = vmatmul.bf16.gmra.mxu0 %v2365
    %v2923 = vpop.f32.mrf.mxu0
    %v2924 = vadd.f32 %v2835, %v2923
    %v2925 = vpop.f32.mrf.mxu0
    %v2926 = vadd.f32 %v2837, %v2925
    %2927 = vmatmul.bf16.gmra.mxu0 %v2369
    %v2928 = vpop.f32.mrf.mxu0
    %v2929 = vadd.f32 %v2840, %v2928
    %v2930 = vpop.f32.mrf.mxu0
    %v2931 = vadd.f32 %v2842, %v2930
    %2932 = vmatmul.bf16.gmra.mxu0 %v2373
    %v2933 = vpop.f32.mrf.mxu0
    %v2934 = vadd.f32 %v2845, %v2933
    %v2935 = vpop.f32.mrf.mxu0
    %v2936 = vadd.f32 %v2847, %v2935
    %2937 = vmatmul.bf16.gmra.mxu0 %v2377
    %v2938 = vpop.f32.mrf.mxu0
    %v2939 = vadd.f32 %v2850, %v2938
    %v2940 = vpop.f32.mrf.mxu0
    %v2941 = vadd.f32 %v2852, %v2940
    %2942 = vmatmul.bf16.gmra.mxu0 %v2381
    %v2943 = vpop.f32.mrf.mxu0
    %v2944 = vadd.f32 %v2855, %v2943
    %v2945 = vpop.f32.mrf.mxu0
    %v2946 = vadd.f32 %v2857, %v2945
    %2947 = vmatmul.bf16.gmra.mxu0 %v2385
    %v2948 = vpop.f32.mrf.mxu0
    %v2949 = vadd.f32 %v2860, %v2948
    %v2950 = vpop.f32.mrf.mxu0
    %v2951 = vadd.f32 %v2862, %v2950
    %2952 = vmatmul.bf16.gmra.mxu0 %v2389
    %v2953 = vpop.f32.mrf.mxu0
    %v2954 = vadd.f32 %v2865, %v2953
    %v2955 = vpop.f32.mrf.mxu0
    %v2956 = vadd.f32 %v2867, %v2955
    %2957 = vmatmul.bf16.gmra.mxu0 %v2393
    %v2958 = vpop.f32.mrf.mxu0
    %v2959 = vadd.f32 %v2870, %v2958
    %v2960 = vpop.f32.mrf.mxu0
    %v2961 = vadd.f32 %v2872, %v2960
    %2962 = vmatmul.bf16.gmra.mxu0 %v2397
    %v2963 = vpop.f32.mrf.mxu0
    %v2964 = vadd.f32 %v2875, %v2963
    %v2965 = vpop.f32.mrf.mxu0
    %v2966 = vadd.f32 %v2877, %v2965
    %2967 = vdwg.mxu0
    %2968 = vmatpush.bf16.msra.mxu0 %v2708
    %2969 = vmatpush.bf16.msra.mxu0 %v2706
    %2970 = vmatpush.bf16.msra.mxu0 %v2704
    %2971 = vmatpush.bf16.msra.mxu0 %v2702
    %2972 = vmatpush.bf16.msra.mxu0 %v2700
    %2973 = vmatpush.bf16.msra.mxu0 %v2698
    %2974 = vmatpush.bf16.msra.mxu0 %v2696
    %2975 = vmatpush.bf16.msra.mxu0 %v2694
    %2976 = vmatmul.bf16.gmra.mxu0 %v2338
    %v2977 = vpop.f32.mrf.mxu0
    %v2978 = vadd.f32 %v2889, %v2977
    %v2979 = vpop.f32.mrf.mxu0
    %v2980 = vadd.f32 %v2891, %v2979
    %2981 = vmatmul.bf16.gmra.mxu0 %v2342
    %v2982 = vpop.f32.mrf.mxu0
    %v2983 = vadd.f32 %v2894, %v2982
    %v2984 = vpop.f32.mrf.mxu0
    %v2985 = vadd.f32 %v2896, %v2984
    %2986 = vmatmul.bf16.gmra.mxu0 %v2346
    %v2987 = vpop.f32.mrf.mxu0
    %v2988 = vadd.f32 %v2899, %v2987
    %v2989 = vpop.f32.mrf.mxu0
    %v2990 = vadd.f32 %v2901, %v2989
    %2991 = vmatmul.bf16.gmra.mxu0 %v2350
    %v2992 = vpop.f32.mrf.mxu0
    %v2993 = vadd.f32 %v2904, %v2992
    %v2994 = vpop.f32.mrf.mxu0
    %v2995 = vadd.f32 %v2906, %v2994
    %2996 = vmatmul.bf16.gmra.mxu0 %v2354
    %v2997 = vpop.f32.mrf.mxu0
    %v2998 = vadd.f32 %v2909, %v2997
    %v2999 = vpop.f32.mrf.mxu0
    %v3000 = vadd.f32 %v2911, %v2999
    %3001 = vmatmul.bf16.gmra.mxu0 %v2358
    %v3002 = vpop.f32.mrf.mxu0
    %v3003 = vadd.f32 %v2914, %v3002
    %v3004 = vpop.f32.mrf.mxu0
    %v3005 = vadd.f32 %v2916, %v3004
    %3006 = vmatmul.bf16.gmra.mxu0 %v2362
    %v3007 = vpop.f32.mrf.mxu0
    %v3008 = vadd.f32 %v2919, %v3007
    %v3009 = vpop.f32.mrf.mxu0
    %v3010 = vadd.f32 %v2921, %v3009
    %3011 = vmatmul.bf16.gmra.mxu0 %v2366
    %v3012 = vpop.f32.mrf.mxu0
    %v3013 = vadd.f32 %v2924, %v3012
    %v3014 = vpop.f32.mrf.mxu0
    %v3015 = vadd.f32 %v2926, %v3014
    %3016 = vmatmul.bf16.gmra.mxu0 %v2370
    %v3017 = vpop.f32.mrf.mxu0
    %v3018 = vadd.f32 %v2929, %v3017
    %v3019 = vpop.f32.mrf.mxu0
    %v3020 = vadd.f32 %v2931, %v3019
    %3021 = vmatmul.bf16.gmra.mxu0 %v2374
    %v3022 = vpop.f32.mrf.mxu0
    %v3023 = vadd.f32 %v2934, %v3022
    %v3024 = vpop.f32.mrf.mxu0
    %v3025 = vadd.f32 %v2936, %v3024
    %3026 = vmatmul.bf16.gmra.mxu0 %v2378
    %v3027 = vpop.f32.mrf.mxu0
    %v3028 = vadd.f32 %v2939, %v3027
    %v3029 = vpop.f32.mrf.mxu0
    %v3030 = vadd.f32 %v2941, %v3029
    %3031 = vmatmul.bf16.gmra.mxu0 %v2382
    %v3032 = vpop.f32.mrf.mxu0
    %v3033 = vadd.f32 %v2944, %v3032
    %v3034 = vpop.f32.mrf.mxu0
    %v3035 = vadd.f32 %v2946, %v3034
    %3036 = vmatmul.bf16.gmra.mxu0 %v2386
    %v3037 = vpop.f32.mrf.mxu0
    %v3038 = vadd.f32 %v2949, %v3037
    %v3039 = vpop.f32.mrf.mxu0
    %v3040 = vadd.f32 %v2951, %v3039
    %3041 = vmatmul.bf16.gmra.mxu0 %v2390
    %v3042 = vpop.f32.mrf.mxu0
    %v3043 = vadd.f32 %v2954, %v3042
    %v3044 = vpop.f32.mrf.mxu0
    %v3045 = vadd.f32 %v2956, %v3044
    %3046 = vmatmul.bf16.gmra.mxu0 %v2394
    %v3047 = vpop.f32.mrf.mxu0
    %v3048 = vadd.f32 %v2959, %v3047
    %v3049 = vpop.f32.mrf.mxu0
    %v3050 = vadd.f32 %v2961, %v3049
    %3051 = vmatmul.bf16.gmra.mxu0 %v2398
    %v3052 = vpop.f32.mrf.mxu0
    %v3053 = vadd.f32 %v2964, %v3052
    %v3054 = vpop.f32.mrf.mxu0
    %v3055 = vadd.f32 %v2966, %v3054
    %3056 = vdwg.mxu0
    %3057 = vmatpush.bf16.msra.mxu0 %v2724
    %3058 = vmatpush.bf16.msra.mxu0 %v2722
    %3059 = vmatpush.bf16.msra.mxu0 %v2720
    %3060 = vmatpush.bf16.msra.mxu0 %v2718
    %3061 = vmatpush.bf16.msra.mxu0 %v2716
    %3062 = vmatpush.bf16.msra.mxu0 %v2714
    %3063 = vmatpush.bf16.msra.mxu0 %v2712
    %3064 = vmatpush.bf16.msra.mxu0 %v2710
    %3065 = vmatmul.bf16.gmra.mxu0 %v2339
    %v3066 = vpop.f32.mrf.mxu0
    %v3067 = vadd.f32 %v2978, %v3066
    %v3068 = vpop.f32.mrf.mxu0
    %v3069 = vadd.f32 %v2980, %v3068
    %3070 = vmatmul.bf16.gmra.mxu0 %v2343
    %v3071 = vpop.f32.mrf.mxu0
    %v3072 = vadd.f32 %v2983, %v3071
    %v3073 = vpop.f32.mrf.mxu0
    %v3074 = vadd.f32 %v2985, %v3073
    %3075 = vmatmul.bf16.gmra.mxu0 %v2347
    %v3076 = vpop.f32.mrf.mxu0
    %v3077 = vadd.f32 %v2988, %v3076
    %v3078 = vpop.f32.mrf.mxu0
    %v3079 = vadd.f32 %v2990, %v3078
    %3080 = vmatmul.bf16.gmra.mxu0 %v2351
    %v3081 = vpop.f32.mrf.mxu0
    %v3082 = vadd.f32 %v2993, %v3081
    %v3083 = vpop.f32.mrf.mxu0
    %v3084 = vadd.f32 %v2995, %v3083
    %3085 = vmatmul.bf16.gmra.mxu0 %v2355
    %v3086 = vpop.f32.mrf.mxu0
    %v3087 = vadd.f32 %v2998, %v3086
    %v3088 = vpop.f32.mrf.mxu0
    %v3089 = vadd.f32 %v3000, %v3088
    %3090 = vmatmul.bf16.gmra.mxu0 %v2359
    %v3091 = vpop.f32.mrf.mxu0
    %v3092 = vadd.f32 %v3003, %v3091
    %v3093 = vpop.f32.mrf.mxu0
    %v3094 = vadd.f32 %v3005, %v3093
    %3095 = vmatmul.bf16.gmra.mxu0 %v2363
    %v3096 = vpop.f32.mrf.mxu0
    %v3097 = vadd.f32 %v3008, %v3096
    %v3098 = vpop.f32.mrf.mxu0
    %v3099 = vadd.f32 %v3010, %v3098
    %3100 = vmatmul.bf16.gmra.mxu0 %v2367
    %v3101 = vpop.f32.mrf.mxu0
    %v3102 = vadd.f32 %v3013, %v3101
    %v3103 = vpop.f32.mrf.mxu0
    %v3104 = vadd.f32 %v3015, %v3103
    %3105 = vmatmul.bf16.gmra.mxu0 %v2371
    %v3106 = vpop.f32.mrf.mxu0
    %v3107 = vadd.f32 %v3018, %v3106
    %v3108 = vpop.f32.mrf.mxu0
    %v3109 = vadd.f32 %v3020, %v3108
    %3110 = vmatmul.bf16.gmra.mxu0 %v2375
    %v3111 = vpop.f32.mrf.mxu0
    %v3112 = vadd.f32 %v3023, %v3111
    %v3113 = vpop.f32.mrf.mxu0
    %v3114 = vadd.f32 %v3025, %v3113
    %3115 = vmatmul.bf16.gmra.mxu0 %v2379
    %v3116 = vpop.f32.mrf.mxu0
    %v3117 = vadd.f32 %v3028, %v3116
    %v3118 = vpop.f32.mrf.mxu0
    %v3119 = vadd.f32 %v3030, %v3118
    %3120 = vmatmul.bf16.gmra.mxu0 %v2383
    %v3121 = vpop.f32.mrf.mxu0
    %v3122 = vadd.f32 %v3033, %v3121
    %v3123 = vpop.f32.mrf.mxu0
    %v3124 = vadd.f32 %v3035, %v3123
    %3125 = vmatmul.bf16.gmra.mxu0 %v2387
    %v3126 = vpop.f32.mrf.mxu0
    %v3127 = vadd.f32 %v3038, %v3126
    %v3128 = vpop.f32.mrf.mxu0
    %v3129 = vadd.f32 %v3040, %v3128
    %3130 = vmatmul.bf16.gmra.mxu0 %v2391
    %v3131 = vpop.f32.mrf.mxu0
    %v3132 = vadd.f32 %v3043, %v3131
    %v3133 = vpop.f32.mrf.mxu0
    %v3134 = vadd.f32 %v3045, %v3133
    %3135 = vmatmul.bf16.gmra.mxu0 %v2395
    %v3136 = vpop.f32.mrf.mxu0
    %v3137 = vadd.f32 %v3048, %v3136
    %v3138 = vpop.f32.mrf.mxu0
    %v3139 = vadd.f32 %v3050, %v3138
    %3140 = vmatmul.bf16.gmra.mxu0 %v2399
    %v3141 = vpop.f32.mrf.mxu0
    %v3142 = vadd.f32 %v3053, %v3141
    %v3143 = vpop.f32.mrf.mxu0
    %v3144 = vadd.f32 %v3055, %v3143
    %3145 = vdwg.mxu0
    %3146 = vmatpush.bf16.msra.mxu0 %v2677
    %3147 = vmatpush.bf16.msra.mxu0 %v2675
    %3148 = vmatpush.bf16.msra.mxu0 %v2673
    %3149 = vmatpush.bf16.msra.mxu0 %v2671
    %3150 = vmatpush.bf16.msra.mxu0 %v2669
    %3151 = vmatpush.bf16.msra.mxu0 %v2667
    %3152 = vmatpush.bf16.msra.mxu0 %v2665
    %3153 = vmatpush.bf16.msra.mxu0 %v2663
    %3154 = vmatmul.bf16.gmra.mxu0 %v2336
    %v3155 = vpop.f32.mrf.mxu0
    %v3156 = vadd.f32 %v2467, %v3155
    %v3157 = vpop.f32.mrf.mxu0
    %v3158 = vadd.f32 %v2467, %v3157
    %3159 = vmatmul.bf16.gmra.mxu0 %v2340
    %v3160 = vpop.f32.mrf.mxu0
    %v3161 = vadd.f32 %v2467, %v3160
    %v3162 = vpop.f32.mrf.mxu0
    %v3163 = vadd.f32 %v2467, %v3162
    %3164 = vmatmul.bf16.gmra.mxu0 %v2344
    %v3165 = vpop.f32.mrf.mxu0
    %v3166 = vadd.f32 %v2467, %v3165
    %v3167 = vpop.f32.mrf.mxu0
    %v3168 = vadd.f32 %v2467, %v3167
    %3169 = vmatmul.bf16.gmra.mxu0 %v2348
    %v3170 = vpop.f32.mrf.mxu0
    %v3171 = vadd.f32 %v2467, %v3170
    %v3172 = vpop.f32.mrf.mxu0
    %v3173 = vadd.f32 %v2467, %v3172
    %3174 = vmatmul.bf16.gmra.mxu0 %v2352
    %v3175 = vpop.f32.mrf.mxu0
    %v3176 = vadd.f32 %v2467, %v3175
    %v3177 = vpop.f32.mrf.mxu0
    %v3178 = vadd.f32 %v2467, %v3177
    %3179 = vmatmul.bf16.gmra.mxu0 %v2356
    %v3180 = vpop.f32.mrf.mxu0
    %v3181 = vadd.f32 %v2467, %v3180
    %v3182 = vpop.f32.mrf.mxu0
    %v3183 = vadd.f32 %v2467, %v3182
    %3184 = vmatmul.bf16.gmra.mxu0 %v2360
    %v3185 = vpop.f32.mrf.mxu0
    %v3186 = vadd.f32 %v2467, %v3185
    %v3187 = vpop.f32.mrf.mxu0
    %v3188 = vadd.f32 %v2467, %v3187
    %3189 = vmatmul.bf16.gmra.mxu0 %v2364
    %v3190 = vpop.f32.mrf.mxu0
    %v3191 = vadd.f32 %v2467, %v3190
    %v3192 = vpop.f32.mrf.mxu0
    %v3193 = vadd.f32 %v2467, %v3192
    %3194 = vmatmul.bf16.gmra.mxu0 %v2368
    %v3195 = vpop.f32.mrf.mxu0
    %v3196 = vadd.f32 %v2467, %v3195
    %v3197 = vpop.f32.mrf.mxu0
    %v3198 = vadd.f32 %v2467, %v3197
    %3199 = vmatmul.bf16.gmra.mxu0 %v2372
    %v3200 = vpop.f32.mrf.mxu0
    %v3201 = vadd.f32 %v2467, %v3200
    %v3202 = vpop.f32.mrf.mxu0
    %v3203 = vadd.f32 %v2467, %v3202
    %3204 = vmatmul.bf16.gmra.mxu0 %v2376
    %v3205 = vpop.f32.mrf.mxu0
    %v3206 = vadd.f32 %v2467, %v3205
    %v3207 = vpop.f32.mrf.mxu0
    %v3208 = vadd.f32 %v2467, %v3207
    %3209 = vmatmul.bf16.gmra.mxu0 %v2380
    %v3210 = vpop.f32.mrf.mxu0
    %v3211 = vadd.f32 %v2467, %v3210
    %v3212 = vpop.f32.mrf.mxu0
    %v3213 = vadd.f32 %v2467, %v3212
    %3214 = vmatmul.bf16.gmra.mxu0 %v2384
    %v3215 = vpop.f32.mrf.mxu0
    %v3216 = vadd.f32 %v2467, %v3215
    %v3217 = vpop.f32.mrf.mxu0
    %v3218 = vadd.f32 %v2467, %v3217
    %3219 = vmatmul.bf16.gmra.mxu0 %v2388
    %v3220 = vpop.f32.mrf.mxu0
    %v3221 = vadd.f32 %v2467, %v3220
    %v3222 = vpop.f32.mrf.mxu0
    %v3223 = vadd.f32 %v2467, %v3222
    %3224 = vmatmul.bf16.gmra.mxu0 %v2392
    %v3225 = vpop.f32.mrf.mxu0
    %v3226 = vadd.f32 %v2467, %v3225
    %v3227 = vpop.f32.mrf.mxu0
    %v3228 = vadd.f32 %v2467, %v3227
    %3229 = vmatmul.bf16.gmra.mxu0 %v2396
    %v3230 = vpop.f32.mrf.mxu0
    %v3231 = vadd.f32 %v2467, %v3230
    %v3232 = vpop.f32.mrf.mxu0
    %v3233 = vadd.f32 %v2467, %v3232
    %3234 = vdwg.mxu0
    %3235 = vmatpush.bf16.msra.mxu0 %v2693
    %3236 = vmatpush.bf16.msra.mxu0 %v2691
    %3237 = vmatpush.bf16.msra.mxu0 %v2689
    %3238 = vmatpush.bf16.msra.mxu0 %v2687
    %3239 = vmatpush.bf16.msra.mxu0 %v2685
    %3240 = vmatpush.bf16.msra.mxu0 %v2683
    %3241 = vmatpush.bf16.msra.mxu0 %v2681
    %3242 = vmatpush.bf16.msra.mxu0 %v2679
    %3243 = vmatmul.bf16.gmra.mxu0 %v2337
    %v3244 = vpop.f32.mrf.mxu0
    %v3245 = vadd.f32 %v3156, %v3244
    %v3246 = vpop.f32.mrf.mxu0
    %v3247 = vadd.f32 %v3158, %v3246
    %3248 = vmatmul.bf16.gmra.mxu0 %v2341
    %v3249 = vpop.f32.mrf.mxu0
    %v3250 = vadd.f32 %v3161, %v3249
    %v3251 = vpop.f32.mrf.mxu0
    %v3252 = vadd.f32 %v3163, %v3251
    %3253 = vmatmul.bf16.gmra.mxu0 %v2345
    %v3254 = vpop.f32.mrf.mxu0
    %v3255 = vadd.f32 %v3166, %v3254
    %v3256 = vpop.f32.mrf.mxu0
    %v3257 = vadd.f32 %v3168, %v3256
    %3258 = vmatmul.bf16.gmra.mxu0 %v2349
    %v3259 = vpop.f32.mrf.mxu0
    %v3260 = vadd.f32 %v3171, %v3259
    %v3261 = vpop.f32.mrf.mxu0
    %v3262 = vadd.f32 %v3173, %v3261
    %3263 = vmatmul.bf16.gmra.mxu0 %v2353
    %v3264 = vpop.f32.mrf.mxu0
    %v3265 = vadd.f32 %v3176, %v3264
    %v3266 = vpop.f32.mrf.mxu0
    %v3267 = vadd.f32 %v3178, %v3266
    %3268 = vmatmul.bf16.gmra.mxu0 %v2357
    %v3269 = vpop.f32.mrf.mxu0
    %v3270 = vadd.f32 %v3181, %v3269
    %v3271 = vpop.f32.mrf.mxu0
    %v3272 = vadd.f32 %v3183, %v3271
    %3273 = vmatmul.bf16.gmra.mxu0 %v2361
    %v3274 = vpop.f32.mrf.mxu0
    %v3275 = vadd.f32 %v3186, %v3274
    %v3276 = vpop.f32.mrf.mxu0
    %v3277 = vadd.f32 %v3188, %v3276
    %3278 = vmatmul.bf16.gmra.mxu0 %v2365
    %v3279 = vpop.f32.mrf.mxu0
    %v3280 = vadd.f32 %v3191, %v3279
    %v3281 = vpop.f32.mrf.mxu0
    %v3282 = vadd.f32 %v3193, %v3281
    %3283 = vmatmul.bf16.gmra.mxu0 %v2369
    %v3284 = vpop.f32.mrf.mxu0
    %v3285 = vadd.f32 %v3196, %v3284
    %v3286 = vpop.f32.mrf.mxu0
    %v3287 = vadd.f32 %v3198, %v3286
    %3288 = vmatmul.bf16.gmra.mxu0 %v2373
    %v3289 = vpop.f32.mrf.mxu0
    %v3290 = vadd.f32 %v3201, %v3289
    %v3291 = vpop.f32.mrf.mxu0
    %v3292 = vadd.f32 %v3203, %v3291
    %3293 = vmatmul.bf16.gmra.mxu0 %v2377
    %v3294 = vpop.f32.mrf.mxu0
    %v3295 = vadd.f32 %v3206, %v3294
    %v3296 = vpop.f32.mrf.mxu0
    %v3297 = vadd.f32 %v3208, %v3296
    %3298 = vmatmul.bf16.gmra.mxu0 %v2381
    %v3299 = vpop.f32.mrf.mxu0
    %v3300 = vadd.f32 %v3211, %v3299
    %v3301 = vpop.f32.mrf.mxu0
    %v3302 = vadd.f32 %v3213, %v3301
    %3303 = vmatmul.bf16.gmra.mxu0 %v2385
    %v3304 = vpop.f32.mrf.mxu0
    %v3305 = vadd.f32 %v3216, %v3304
    %v3306 = vpop.f32.mrf.mxu0
    %v3307 = vadd.f32 %v3218, %v3306
    %3308 = vmatmul.bf16.gmra.mxu0 %v2389
    %v3309 = vpop.f32.mrf.mxu0
    %v3310 = vadd.f32 %v3221, %v3309
    %v3311 = vpop.f32.mrf.mxu0
    %v3312 = vadd.f32 %v3223, %v3311
    %3313 = vmatmul.bf16.gmra.mxu0 %v2393
    %v3314 = vpop.f32.mrf.mxu0
    %v3315 = vadd.f32 %v3226, %v3314
    %v3316 = vpop.f32.mrf.mxu0
    %v3317 = vadd.f32 %v3228, %v3316
    %3318 = vmatmul.bf16.gmra.mxu0 %v2397
    %v3319 = vpop.f32.mrf.mxu0
    %v3320 = vadd.f32 %v3231, %v3319
    %v3321 = vpop.f32.mrf.mxu0
    %v3322 = vadd.f32 %v3233, %v3321
    %3323 = vdwg.mxu0
    %3324 = vmatpush.bf16.msra.mxu0 %v2709
    %3325 = vmatpush.bf16.msra.mxu0 %v2707
    %3326 = vmatpush.bf16.msra.mxu0 %v2705
    %3327 = vmatpush.bf16.msra.mxu0 %v2703
    %3328 = vmatpush.bf16.msra.mxu0 %v2701
    %3329 = vmatpush.bf16.msra.mxu0 %v2699
    %3330 = vmatpush.bf16.msra.mxu0 %v2697
    %3331 = vmatpush.bf16.msra.mxu0 %v2695
    %3332 = vmatmul.bf16.gmra.mxu0 %v2338
    %v3333 = vpop.f32.mrf.mxu0
    %v3334 = vadd.f32 %v3245, %v3333
    %v3335 = vpop.f32.mrf.mxu0
    %v3336 = vadd.f32 %v3247, %v3335
    %3337 = vmatmul.bf16.gmra.mxu0 %v2342
    %v3338 = vpop.f32.mrf.mxu0
    %v3339 = vadd.f32 %v3250, %v3338
    %v3340 = vpop.f32.mrf.mxu0
    %v3341 = vadd.f32 %v3252, %v3340
    %3342 = vmatmul.bf16.gmra.mxu0 %v2346
    %v3343 = vpop.f32.mrf.mxu0
    %v3344 = vadd.f32 %v3255, %v3343
    %v3345 = vpop.f32.mrf.mxu0
    %v3346 = vadd.f32 %v3257, %v3345
    %3347 = vmatmul.bf16.gmra.mxu0 %v2350
    %v3348 = vpop.f32.mrf.mxu0
    %v3349 = vadd.f32 %v3260, %v3348
    %v3350 = vpop.f32.mrf.mxu0
    %v3351 = vadd.f32 %v3262, %v3350
    %3352 = vmatmul.bf16.gmra.mxu0 %v2354
    %v3353 = vpop.f32.mrf.mxu0
    %v3354 = vadd.f32 %v3265, %v3353
    %v3355 = vpop.f32.mrf.mxu0
    %v3356 = vadd.f32 %v3267, %v3355
    %3357 = vmatmul.bf16.gmra.mxu0 %v2358
    %v3358 = vpop.f32.mrf.mxu0
    %v3359 = vadd.f32 %v3270, %v3358
    %v3360 = vpop.f32.mrf.mxu0
    %v3361 = vadd.f32 %v3272, %v3360
    %3362 = vmatmul.bf16.gmra.mxu0 %v2362
    %v3363 = vpop.f32.mrf.mxu0
    %v3364 = vadd.f32 %v3275, %v3363
    %v3365 = vpop.f32.mrf.mxu0
    %v3366 = vadd.f32 %v3277, %v3365
    %3367 = vmatmul.bf16.gmra.mxu0 %v2366
    %v3368 = vpop.f32.mrf.mxu0
    %v3369 = vadd.f32 %v3280, %v3368
    %v3370 = vpop.f32.mrf.mxu0
    %v3371 = vadd.f32 %v3282, %v3370
    %3372 = vmatmul.bf16.gmra.mxu0 %v2370
    %v3373 = vpop.f32.mrf.mxu0
    %v3374 = vadd.f32 %v3285, %v3373
    %v3375 = vpop.f32.mrf.mxu0
    %v3376 = vadd.f32 %v3287, %v3375
    %3377 = vmatmul.bf16.gmra.mxu0 %v2374
    %v3378 = vpop.f32.mrf.mxu0
    %v3379 = vadd.f32 %v3290, %v3378
    %v3380 = vpop.f32.mrf.mxu0
    %v3381 = vadd.f32 %v3292, %v3380
    %3382 = vmatmul.bf16.gmra.mxu0 %v2378
    %v3383 = vpop.f32.mrf.mxu0
    %v3384 = vadd.f32 %v3295, %v3383
    %v3385 = vpop.f32.mrf.mxu0
    %v3386 = vadd.f32 %v3297, %v3385
    %3387 = vmatmul.bf16.gmra.mxu0 %v2382
    %v3388 = vpop.f32.mrf.mxu0
    %v3389 = vadd.f32 %v3300, %v3388
    %v3390 = vpop.f32.mrf.mxu0
    %v3391 = vadd.f32 %v3302, %v3390
    %3392 = vmatmul.bf16.gmra.mxu0 %v2386
    %v3393 = vpop.f32.mrf.mxu0
    %v3394 = vadd.f32 %v3305, %v3393
    %v3395 = vpop.f32.mrf.mxu0
    %v3396 = vadd.f32 %v3307, %v3395
    %3397 = vmatmul.bf16.gmra.mxu0 %v2390
    %v3398 = vpop.f32.mrf.mxu0
    %v3399 = vadd.f32 %v3310, %v3398
    %v3400 = vpop.f32.mrf.mxu0
    %v3401 = vadd.f32 %v3312, %v3400
    %3402 = vmatmul.bf16.gmra.mxu0 %v2394
    %v3403 = vpop.f32.mrf.mxu0
    %v3404 = vadd.f32 %v3315, %v3403
    %v3405 = vpop.f32.mrf.mxu0
    %v3406 = vadd.f32 %v3317, %v3405
    %3407 = vmatmul.bf16.gmra.mxu0 %v2398
    %v3408 = vpop.f32.mrf.mxu0
    %v3409 = vadd.f32 %v3320, %v3408
    %v3410 = vpop.f32.mrf.mxu0
    %v3411 = vadd.f32 %v3322, %v3410
    %3412 = vdwg.mxu0
    %3413 = vmatpush.bf16.msra.mxu0 %v2725
    %3414 = vmatpush.bf16.msra.mxu0 %v2723
    %3415 = vmatpush.bf16.msra.mxu0 %v2721
    %3416 = vmatpush.bf16.msra.mxu0 %v2719
    %3417 = vmatpush.bf16.msra.mxu0 %v2717
    %3418 = vmatpush.bf16.msra.mxu0 %v2715
    %3419 = vmatpush.bf16.msra.mxu0 %v2713
    %3420 = vmatpush.bf16.msra.mxu0 %v2711
    %3421 = vmatmul.bf16.gmra.mxu0 %v2339
    %v3422 = vpop.f32.mrf.mxu0
    %v3423 = vadd.f32 %v3334, %v3422
    %v3424 = vpop.f32.mrf.mxu0
    %v3425 = vadd.f32 %v3336, %v3424
    %3426 = vmatmul.bf16.gmra.mxu0 %v2343
    %v3427 = vpop.f32.mrf.mxu0
    %v3428 = vadd.f32 %v3339, %v3427
    %v3429 = vpop.f32.mrf.mxu0
    %v3430 = vadd.f32 %v3341, %v3429
    %3431 = vmatmul.bf16.gmra.mxu0 %v2347
    %v3432 = vpop.f32.mrf.mxu0
    %v3433 = vadd.f32 %v3344, %v3432
    %v3434 = vpop.f32.mrf.mxu0
    %v3435 = vadd.f32 %v3346, %v3434
    %3436 = vmatmul.bf16.gmra.mxu0 %v2351
    %v3437 = vpop.f32.mrf.mxu0
    %v3438 = vadd.f32 %v3349, %v3437
    %v3439 = vpop.f32.mrf.mxu0
    %v3440 = vadd.f32 %v3351, %v3439
    %3441 = vmatmul.bf16.gmra.mxu0 %v2355
    %v3442 = vpop.f32.mrf.mxu0
    %v3443 = vadd.f32 %v3354, %v3442
    %v3444 = vpop.f32.mrf.mxu0
    %v3445 = vadd.f32 %v3356, %v3444
    %3446 = vmatmul.bf16.gmra.mxu0 %v2359
    %v3447 = vpop.f32.mrf.mxu0
    %v3448 = vadd.f32 %v3359, %v3447
    %v3449 = vpop.f32.mrf.mxu0
    %v3450 = vadd.f32 %v3361, %v3449
    %3451 = vmatmul.bf16.gmra.mxu0 %v2363
    %v3452 = vpop.f32.mrf.mxu0
    %v3453 = vadd.f32 %v3364, %v3452
    %v3454 = vpop.f32.mrf.mxu0
    %v3455 = vadd.f32 %v3366, %v3454
    %3456 = vmatmul.bf16.gmra.mxu0 %v2367
    %v3457 = vpop.f32.mrf.mxu0
    %v3458 = vadd.f32 %v3369, %v3457
    %v3459 = vpop.f32.mrf.mxu0
    %v3460 = vadd.f32 %v3371, %v3459
    %3461 = vmatmul.bf16.gmra.mxu0 %v2371
    %v3462 = vpop.f32.mrf.mxu0
    %v3463 = vadd.f32 %v3374, %v3462
    %v3464 = vpop.f32.mrf.mxu0
    %v3465 = vadd.f32 %v3376, %v3464
    %3466 = vmatmul.bf16.gmra.mxu0 %v2375
    %v3467 = vpop.f32.mrf.mxu0
    %v3468 = vadd.f32 %v3379, %v3467
    %v3469 = vpop.f32.mrf.mxu0
    %v3470 = vadd.f32 %v3381, %v3469
    %3471 = vmatmul.bf16.gmra.mxu0 %v2379
    %v3472 = vpop.f32.mrf.mxu0
    %v3473 = vadd.f32 %v3384, %v3472
    %v3474 = vpop.f32.mrf.mxu0
    %v3475 = vadd.f32 %v3386, %v3474
    %3476 = vmatmul.bf16.gmra.mxu0 %v2383
    %v3477 = vpop.f32.mrf.mxu0
    %v3478 = vadd.f32 %v3389, %v3477
    %v3479 = vpop.f32.mrf.mxu0
    %v3480 = vadd.f32 %v3391, %v3479
    %3481 = vmatmul.bf16.gmra.mxu0 %v2387
    %v3482 = vpop.f32.mrf.mxu0
    %v3483 = vadd.f32 %v3394, %v3482
    %v3484 = vpop.f32.mrf.mxu0
    %v3485 = vadd.f32 %v3396, %v3484
    %3486 = vmatmul.bf16.gmra.mxu0 %v2391
    %v3487 = vpop.f32.mrf.mxu0
    %v3488 = vadd.f32 %v3399, %v3487
    %v3489 = vpop.f32.mrf.mxu0
    %v3490 = vadd.f32 %v3401, %v3489
    %3491 = vmatmul.bf16.gmra.mxu0 %v2395
    %v3492 = vpop.f32.mrf.mxu0
    %v3493 = vadd.f32 %v3404, %v3492
    %v3494 = vpop.f32.mrf.mxu0
    %v3495 = vadd.f32 %v3406, %v3494
    %3496 = vmatmul.bf16.gmra.mxu0 %v2399
    %v3497 = vpop.f32.mrf.mxu0
    %v3498 = vadd.f32 %v3409, %v3497
    %v3499 = vpop.f32.mrf.mxu0
    %v3500 = vadd.f32 %v3411, %v3499
    %3501 = vdwg.mxu0
    %3502 = vst [vmem:[#allocation11] sm:$0xff] %v3067
    %3503 = vst [vmem:[#allocation11 + $0x8] sm:$0xff] %v3423
    %3504 = vst [vmem:[#allocation11 + $0x10] sm:$0xff] %v3069
    %3505 = vst [vmem:[#allocation11 + $0x18] sm:$0xff] %v3425
    %3506 = vst [vmem:[#allocation11 + $0x20] sm:$0xff] %v3072
    %3507 = vst [vmem:[#allocation11 + $0x28] sm:$0xff] %v3428
    %3508 = vst [vmem:[#allocation11 + $0x30] sm:$0xff] %v3074
    %3509 = vst [vmem:[#allocation11 + $0x38] sm:$0xff] %v3430
    %3510 = vst [vmem:[#allocation11 + $0x40] sm:$0xff] %v3077
    %3511 = vst [vmem:[#allocation11 + $0x48] sm:$0xff] %v3433
    %3512 = vst [vmem:[#allocation11 + $0x50] sm:$0xff] %v3079
    %3513 = vst [vmem:[#allocation11 + $0x58] sm:$0xff] %v3435
    %3514 = vst [vmem:[#allocation11 + $0x60] sm:$0xff] %v3082
    %3515 = vst [vmem:[#allocation11 + $0x68] sm:$0xff] %v3438
    %3516 = vst [vmem:[#allocation11 + $0x70] sm:$0xff] %v3084
    %3517 = vst [vmem:[#allocation11 + $0x78] sm:$0xff] %v3440
    %3518 = vst [vmem:[#allocation11 + $0x80] sm:$0xff] %v3087
    %3519 = vst [vmem:[#allocation11 + $0x88] sm:$0xff] %v3443
    %3520 = vst [vmem:[#allocation11 + $0x90] sm:$0xff] %v3089
    %3521 = vst [vmem:[#allocation11 + $0x98] sm:$0xff] %v3445
    %3522 = vst [vmem:[#allocation11 + $0xa0] sm:$0xff] %v3092
    %3523 = vst [vmem:[#allocation11 + $0xa8] sm:$0xff] %v3448
    %3524 = vst [vmem:[#allocation11 + $0xb0] sm:$0xff] %v3094
    %3525 = vst [vmem:[#allocation11 + $0xb8] sm:$0xff] %v3450
    %3526 = vst [vmem:[#allocation11 + $0xc0] sm:$0xff] %v3097
    %3527 = vst [vmem:[#allocation11 + $0xc8] sm:$0xff] %v3453
    %3528 = vst [vmem:[#allocation11 + $0xd0] sm:$0xff] %v3099
    %3529 = vst [vmem:[#allocation11 + $0xd8] sm:$0xff] %v3455
    %3530 = vst [vmem:[#allocation11 + $0xe0] sm:$0xff] %v3102
    %3531 = vst [vmem:[#allocation11 + $0xe8] sm:$0xff] %v3458
    %3532 = vst [vmem:[#allocation11 + $0xf0] sm:$0xff] %v3104
    %3533 = vst [vmem:[#allocation11 + $0xf8] sm:$0xff] %v3460
    %3534 = vst [vmem:[#allocation11 + $0x100] sm:$0xff] %v3107
    %3535 = vst [vmem:[#allocation11 + $0x108] sm:$0xff] %v3463
    %3536 = vst [vmem:[#allocation11 + $0x110] sm:$0xff] %v3109
    %3537 = vst [vmem:[#allocation11 + $0x118] sm:$0xff] %v3465
    %3538 = vst [vmem:[#allocation11 + $0x120] sm:$0xff] %v3112
    %3539 = vst [vmem:[#allocation11 + $0x128] sm:$0xff] %v3468
    %3540 = vst [vmem:[#allocation11 + $0x130] sm:$0xff] %v3114
    %3541 = vst [vmem:[#allocation11 + $0x138] sm:$0xff] %v3470
    %3542 = vst [vmem:[#allocation11 + $0x140] sm:$0xff] %v3117
    %3543 = vst [vmem:[#allocation11 + $0x148] sm:$0xff] %v3473
    %3544 = vst [vmem:[#allocation11 + $0x150] sm:$0xff] %v3119
    %3545 = vst [vmem:[#allocation11 + $0x158] sm:$0xff] %v3475
    %3546 = vst [vmem:[#allocation11 + $0x160] sm:$0xff] %v3122
    %3547 = vst [vmem:[#allocation11 + $0x168] sm:$0xff] %v3478
    %3548 = vst [vmem:[#allocation11 + $0x170] sm:$0xff] %v3124
    %3549 = vst [vmem:[#allocation11 + $0x178] sm:$0xff] %v3480
    %3550 = vst [vmem:[#allocation11 + $0x180] sm:$0xff] %v3127
    %3551 = vst [vmem:[#allocation11 + $0x188] sm:$0xff] %v3483
    %3552 = vst [vmem:[#allocation11 + $0x190] sm:$0xff] %v3129
    %3553 = vst [vmem:[#allocation11 + $0x198] sm:$0xff] %v3485
    %3554 = vst [vmem:[#allocation11 + $0x1a0] sm:$0xff] %v3132
    %3555 = vst [vmem:[#allocation11 + $0x1a8] sm:$0xff] %v3488
    %3556 = vst [vmem:[#allocation11 + $0x1b0] sm:$0xff] %v3134
    %3557 = vst [vmem:[#allocation11 + $0x1b8] sm:$0xff] %v3490
    %3558 = vst [vmem:[#allocation11 + $0x1c0] sm:$0xff] %v3137
    %3559 = vst [vmem:[#allocation11 + $0x1c8] sm:$0xff] %v3493
    %3560 = vst [vmem:[#allocation11 + $0x1d0] sm:$0xff] %v3139
    %3561 = vst [vmem:[#allocation11 + $0x1d8] sm:$0xff] %v3495
    %3562 = vst [vmem:[#allocation11 + $0x1e0] sm:$0xff] %v3142
    %3563 = vst [vmem:[#allocation11 + $0x1e8] sm:$0xff] %v3498
    %3564 = vst [vmem:[#allocation11 + $0x1f0] sm:$0xff] %v3144
    %3565 = vst [vmem:[#allocation11 + $0x1f8] sm:$0xff] %v3500
    // Predicated region
    $region46: #{tpu_custom_call.1} parent=1 // pred_check
      _
    $region47: #{tpu_custom_call.1} parent=1 // pred_check_branch
      %3567 = sbr.rel (0) target = $region49
    $region48: #{tpu_custom_call.1} parent=1 // pred_region
      %3569 = vsyncadd [#allocation4], 0
      %s3570 = sshll.u32 [#allocation11], 4
      %s3571 = int_to_ptr.vmem [resolvable:$true] %s3570
      %s3572 = sshll.u32 %s6, 4
      %s3573 = int_to_ptr.hbm [resolvable:$true] %s3572
      %3578 = dma.vmem_to_hbm [thread:$0]  %s3571, 8192, %s3573, [#allocation4], 256, 256, 16
    $region49: #{tpu_custom_call.1} parent=1 // pred_fallthru
      _
    // Predicated region
    $region50: #{tpu_custom_call.1} parent=1 // pred_check
      _
    $region51: #{tpu_custom_call.1} parent=1 // pred_check_branch
      %3580 = sbr.rel (0) target = $region53
    $region52: #{tpu_custom_call.1} parent=1 // pred_region
      %3582 = dma.done [#allocation4], 8192
    $region53: #{tpu_custom_call.1} parent=1 // pred_fallthru
      _
    %3583 = vsyncpa [#allocation3], 1
    %3584 = vsyncpa [#allocation6], 1
    %3585 = vsyncpa [#allocation9], 1
    %3586 = vsyncpa [#allocation4], 1

</llo_original>
